<compile_context>
chip_gen: v5e
topology: v5e:2x2
jax: 0.10.0
libtpu: 0.0.40
codegen_flags: <defaults>
</compile_context>

<pallas_src>
import functools

import jax
import jax.numpy as jnp
from jax.experimental import pallas as pl
from jax.experimental.pallas import tpu as pltpu

D_MODEL = 256
N_HEAD = 2
HEAD_DIM = D_MODEL // N_HEAD
D_FF = 2048
N_LAYERS = 2
LN_EPS = 1e-5


def _layer_norm(x, gamma, beta):
    mu = jnp.mean(x, axis=-1, keepdims=True)
    xc = x - mu
    var = jnp.mean(xc * xc, axis=-1, keepdims=True)
    return xc * jax.lax.rsqrt(var + LN_EPS) * gamma + beta


def _encoder_layer_kernel(B, S,
                          x_ref, bias_ref,
                          wq_ref, wk_ref, wv_ref, wo_ref,
                          bq_ref, bk_ref, bv_ref, bo_ref,
                          w1_ref, b1_ref, w2_ref, b2_ref,
                          g1_ref, be1_ref, g2_ref, be2_ref,
                          out_ref, h_ref):
    """One grid step == one encoder layer. Residual stream lives in h_ref (VMEM)."""
    layer = pl.program_id(0)

    @pl.when(layer == 0)
    def _():
        h_ref[...] = x_ref[...]                       # (B*S, D) f32

    h = h_ref[...]                                    # (B*S, D) f32
    mask_bias = bias_ref[...]                         # (B, 1, S) additive key mask

    # Per-layer params (leading layer dim blocked to 1 by the BlockSpec).
    wq, wk, wv, wo = wq_ref[0], wk_ref[0], wv_ref[0], wo_ref[0]   # (D, D)   bf16
    w1, w2 = w1_ref[0], w2_ref[0]                                  # bf16
    bq, bk, bv, bo = bq_ref[0], bk_ref[0], bv_ref[0], bo_ref[0]   # (1, D)   f32
    b1, b2 = b1_ref[0], b2_ref[0]
    g1, be1, g2, be2 = g1_ref[0], be1_ref[0], g2_ref[0], be2_ref[0]

    scale = HEAD_DIM ** -0.5

    # ---- Multi-head self-attention (bf16 MXU inputs, f32 accumulation) ----
    h_bf = h.astype(jnp.bfloat16)
    q = jnp.dot(h_bf, wq, preferred_element_type=jnp.float32) + bq
    k = jnp.dot(h_bf, wk, preferred_element_type=jnp.float32) + bk
    v = jnp.dot(h_bf, wv, preferred_element_type=jnp.float32) + bv

    q3 = q.reshape(B, S, D_MODEL)
    k3 = k.reshape(B, S, D_MODEL)
    v3 = v.reshape(B, S, D_MODEL)

    ctx_heads = []
    for hd in range(N_HEAD):                          # static unroll (N_HEAD = 2)
        sl = slice(hd * HEAD_DIM, (hd + 1) * HEAD_DIM)
        qh, kh, vh = q3[:, :, sl], k3[:, :, sl], v3[:, :, sl]
        scores = jnp.einsum('bqd,bkd->bqk', qh, kh,
                            preferred_element_type=jnp.float32) * scale
        scores = scores + mask_bias                   # mask padded keys
        m = jnp.max(scores, axis=-1, keepdims=True)
        e = jnp.exp(scores - m)
        attn = e / jnp.sum(e, axis=-1, keepdims=True)
        ctx_heads.append(jnp.einsum('bqk,bkd->bqd', attn, vh,
                                    preferred_element_type=jnp.float32))
    ctx = jnp.concatenate(ctx_heads, axis=-1).reshape(B * S, D_MODEL)

    # single full-width (K = 256) output projection (== concat @ Wo)
    attn_out = jnp.dot(ctx.astype(jnp.bfloat16), wo,
                       preferred_element_type=jnp.float32) + bo

    # residual + LayerNorm1 (dropout = identity in eval mode)
    h = _layer_norm(h + attn_out, g1, be1)

    # ---- Feed-forward ----
    ff = jnp.dot(h.astype(jnp.bfloat16), w1, preferred_element_type=jnp.float32) + b1
    ff = jnp.maximum(ff, 0.0)
    ff = jnp.dot(ff.astype(jnp.bfloat16), w2, preferred_element_type=jnp.float32) + b2

    # residual + LayerNorm2
    h = _layer_norm(h + ff, g2, be2)

    h_ref[...] = h                                    # carry to next layer

    @pl.when(layer == pl.num_programs(0) - 1)
    def _():
        out_ref[...] = jnp.sum(h.reshape(B, S, D_MODEL), axis=1)


PARAM_ORDER = ('wq', 'wk', 'wv', 'wo', 'bq', 'bk', 'bv', 'bo',
               'w1', 'b1', 'w2', 'b2', 'g1', 'be1', 'g2', 'be2')


def init_params(key):
    """Deterministic synthetic parameters (weights stored pre-transposed so the
    kernel computes y = x @ W + b, matching PyTorch's y = x @ W^T + b).
    Large weights are stored in bf16 (streamed at half the HBM bytes); biases and
    LayerNorm params stay f32."""
    keys = jax.random.split(key, 12)

    def w(k, shape, scale=0.05, dtype=jnp.float32):
        return (scale * jax.random.normal(k, shape)).astype(dtype)

    bf16 = jnp.bfloat16
    return dict(
        wq=w(keys[0], (N_LAYERS, D_MODEL, D_MODEL), dtype=bf16),
        wk=w(keys[1], (N_LAYERS, D_MODEL, D_MODEL), dtype=bf16),
        wv=w(keys[2], (N_LAYERS, D_MODEL, D_MODEL), dtype=bf16),
        wo=w(keys[3], (N_LAYERS, D_MODEL, D_MODEL), dtype=bf16),
        bq=w(keys[4], (N_LAYERS, 1, D_MODEL), 0.01),
        bk=w(keys[5], (N_LAYERS, 1, D_MODEL), 0.01),
        bv=w(keys[6], (N_LAYERS, 1, D_MODEL), 0.01),
        bo=w(keys[7], (N_LAYERS, 1, D_MODEL), 0.01),
        w1=w(keys[8], (N_LAYERS, D_MODEL, D_FF), dtype=bf16),
        b1=w(keys[9], (N_LAYERS, 1, D_FF), 0.01),
        w2=w(keys[10], (N_LAYERS, D_FF, D_MODEL), dtype=bf16),
        b2=w(keys[11], (N_LAYERS, 1, D_MODEL), 0.01),
        g1=jnp.ones((N_LAYERS, 1, D_MODEL), jnp.float32),
        be1=jnp.zeros((N_LAYERS, 1, D_MODEL), jnp.float32),
        g2=jnp.ones((N_LAYERS, 1, D_MODEL), jnp.float32),
        be2=jnp.zeros((N_LAYERS, 1, D_MODEL), jnp.float32),
    )


@jax.jit
def vanilla_transformer_forward(x, mask, params):
    B, S, _ = x.shape
    # PyTorch: mask_tensor[b, j] = (arange(S)[j] > mask[b])  -> True means padding.
    idx = jnp.arange(S, dtype=jnp.int32)[None, :]
    mask_bias = jnp.where(idx > mask[:, None],
                          jnp.float32(-1e30), jnp.float32(0.0))[:, None, :]  # (B,1,S)
    x_flat = x.reshape(B * S, D_MODEL)

    args = (x_flat, mask_bias) + tuple(params[k] for k in PARAM_ORDER)

    def layer_spec(a):
        # Block out one layer's worth of a stacked (N_LAYERS, ...) parameter.
        nd = a.ndim
        blk = (1,) + a.shape[1:]
        return pl.BlockSpec(blk, lambda l, _nd=nd: (l,) + (0,) * (_nd - 1))

    in_specs = [
        pl.BlockSpec(x_flat.shape, lambda l: (0, 0)),
        pl.BlockSpec(mask_bias.shape, lambda l: (0, 0, 0)),
    ] + [layer_spec(params[k]) for k in PARAM_ORDER]

    kernel = functools.partial(_encoder_layer_kernel, B, S)

    return pl.pallas_call(
        kernel,
        out_shape=jax.ShapeDtypeStruct((B, D_MODEL), jnp.float32),
        grid=(N_LAYERS,),
        in_specs=in_specs,
        out_specs=pl.BlockSpec((B, D_MODEL), lambda l: (0, 0)),
        scratch_shapes=[pltpu.VMEM((B * S, D_MODEL), jnp.float32)],
        compiler_params=pltpu.CompilerParams(
            dimension_semantics=("arbitrary",),
            vmem_limit_bytes=32 * 1024 * 1024),
    )(*args)


if __name__ == "__main__":
    key = jax.random.PRNGKey(0)
    kx, kp = jax.random.split(key)
    B, S = 2, 8
    x = jax.random.normal(kx, (B, S, D_MODEL), dtype=jnp.float32)
    # per-example "valid length" markers: positions j > mask[b] are treated as padding
    mask = jnp.array([4, 6], dtype=jnp.int32)
    params = init_params(kp)

    out = vanilla_transformer_forward(x, mask, params)
    out = jax.block_until_ready(out)

    assert out.shape == (B, D_MODEL), out.shape
    assert bool(jnp.all(jnp.isfinite(out)))
    print("KERNEL_OK")
</pallas_src>

<mosaic_0001>
module attributes {stable_mosaic.version = 11 : i64} {
  func.func @_encoder_layer_kernel(%arg0: i32, %arg1: memref<16x256xf32, #tpu.memory_space<vmem>>, %arg2: memref<2x1x8xf32, #tpu.memory_space<vmem>>, %arg3: memref<1x256x256xbf16, #tpu.memory_space<vmem>>, %arg4: memref<1x256x256xbf16, #tpu.memory_space<vmem>>, %arg5: memref<1x256x256xbf16, #tpu.memory_space<vmem>>, %arg6: memref<1x256x256xbf16, #tpu.memory_space<vmem>>, %arg7: memref<1x1x256xf32, #tpu.memory_space<vmem>>, %arg8: memref<1x1x256xf32, #tpu.memory_space<vmem>>, %arg9: memref<1x1x256xf32, #tpu.memory_space<vmem>>, %arg10: memref<1x1x256xf32, #tpu.memory_space<vmem>>, %arg11: memref<1x256x2048xbf16, #tpu.memory_space<vmem>>, %arg12: memref<1x1x2048xf32, #tpu.memory_space<vmem>>, %arg13: memref<1x2048x256xbf16, #tpu.memory_space<vmem>>, %arg14: memref<1x1x256xf32, #tpu.memory_space<vmem>>, %arg15: memref<1x1x256xf32, #tpu.memory_space<vmem>>, %arg16: memref<1x1x256xf32, #tpu.memory_space<vmem>>, %arg17: memref<1x1x256xf32, #tpu.memory_space<vmem>>, %arg18: memref<1x1x256xf32, #tpu.memory_space<vmem>>, %arg19: memref<2x256xf32, #tpu.memory_space<vmem>>, %arg20: memref<16x256xf32, #tpu.memory_space<vmem>>) attributes {dimension_semantics = [#tpu.dimension_semantics<arbitrary>], iteration_bounds = array<i64: 2>, scalar_prefetch = 0 : i64, scratch_operands = 1 : i64, tpu.core_type = #tpu.core_type<tc>, window_params = [{pipeline_mode = #tpu.pipeline_mode<synchronous>, transform_indices = @transform_0, window_bounds = array<i64: 16, 256>}, {pipeline_mode = #tpu.pipeline_mode<synchronous>, transform_indices = @transform_1, window_bounds = array<i64: 2, 1, 8>}, {transform_indices = @transform_2, window_bounds = array<i64: 1, 256, 256>}, {transform_indices = @transform_3, window_bounds = array<i64: 1, 256, 256>}, {transform_indices = @transform_4, window_bounds = array<i64: 1, 256, 256>}, {transform_indices = @transform_5, window_bounds = array<i64: 1, 256, 256>}, {transform_indices = @transform_6, window_bounds = array<i64: 1, 1, 256>}, {transform_indices = @transform_7, window_bounds = array<i64: 1, 1, 256>}, {transform_indices = @transform_8, window_bounds = array<i64: 1, 1, 256>}, {transform_indices = @transform_9, window_bounds = array<i64: 1, 1, 256>}, {transform_indices = @transform_10, window_bounds = array<i64: 1, 256, 2048>}, {transform_indices = @transform_11, window_bounds = array<i64: 1, 1, 2048>}, {transform_indices = @transform_12, window_bounds = array<i64: 1, 2048, 256>}, {transform_indices = @transform_13, window_bounds = array<i64: 1, 1, 256>}, {transform_indices = @transform_14, window_bounds = array<i64: 1, 1, 256>}, {transform_indices = @transform_15, window_bounds = array<i64: 1, 1, 256>}, {transform_indices = @transform_16, window_bounds = array<i64: 1, 1, 256>}, {transform_indices = @transform_17, window_bounds = array<i64: 1, 1, 256>}, {pipeline_mode = #tpu.pipeline_mode<synchronous>, transform_indices = @transform_18, window_bounds = array<i64: 2, 256>}]} {
    %c0_i32 = arith.constant 0 : i32
    %0 = arith.cmpi eq, %arg0, %c0_i32 : i32
    %1 = arith.extui %0 : i1 to i32
    %c0_i32_0 = arith.constant 0 : i32
    %2 = arith.cmpi ne, %1, %c0_i32_0 : i32
    scf.if %2 {
      %c0_82 = arith.constant 0 : index
      %c0_83 = arith.constant 0 : index
      %148 = vector.load %arg1[%c0_82, %c0_83] : memref<16x256xf32, #tpu.memory_space<vmem>>, vector<16x256xf32>
      %c0_84 = arith.constant 0 : index
      %c0_85 = arith.constant 0 : index
      %149 = vector.load %arg20[%c0_84, %c0_85] : memref<16x256xf32, #tpu.memory_space<vmem>>, vector<16x256xf32>
      tpu.vector_store %arg20[%c0_84, %c0_85], %148 {strides = array<i32>} : memref<16x256xf32, #tpu.memory_space<vmem>>, vector<16x256xf32>,
    } else {
    }
    %c0 = arith.constant 0 : index
    %c0_1 = arith.constant 0 : index
    %3 = vector.load %arg20[%c0, %c0_1] : memref<16x256xf32, #tpu.memory_space<vmem>>, vector<16x256xf32>
    %c0_2 = arith.constant 0 : index
    %c0_3 = arith.constant 0 : index
    %c0_4 = arith.constant 0 : index
    %4 = vector.load %arg2[%c0_2, %c0_3, %c0_4] : memref<2x1x8xf32, #tpu.memory_space<vmem>>, vector<2x1x8xf32>
    %c0_5 = arith.constant 0 : index
    %c0_6 = arith.constant 0 : index
    %c0_7 = arith.constant 0 : index
    %5 = vector.load %arg3[%c0_5, %c0_6, %c0_7] : memref<1x256x256xbf16, #tpu.memory_space<vmem>>, vector<1x256x256xbf16>
    %6 = vector.shape_cast %5 : vector<1x256x256xbf16> to vector<256x256xbf16>
    %c0_8 = arith.constant 0 : index
    %c0_9 = arith.constant 0 : index
    %c0_10 = arith.constant 0 : index
    %7 = vector.load %arg4[%c0_8, %c0_9, %c0_10] : memref<1x256x256xbf16, #tpu.memory_space<vmem>>, vector<1x256x256xbf16>
    %8 = vector.shape_cast %7 : vector<1x256x256xbf16> to vector<256x256xbf16>
    %c0_11 = arith.constant 0 : index
    %c0_12 = arith.constant 0 : index
    %c0_13 = arith.constant 0 : index
    %9 = vector.load %arg5[%c0_11, %c0_12, %c0_13] : memref<1x256x256xbf16, #tpu.memory_space<vmem>>, vector<1x256x256xbf16>
    %10 = vector.shape_cast %9 : vector<1x256x256xbf16> to vector<256x256xbf16>
    %c0_14 = arith.constant 0 : index
    %c0_15 = arith.constant 0 : index
    %c0_16 = arith.constant 0 : index
    %11 = vector.load %arg6[%c0_14, %c0_15, %c0_16] : memref<1x256x256xbf16, #tpu.memory_space<vmem>>, vector<1x256x256xbf16>
    %12 = vector.shape_cast %11 : vector<1x256x256xbf16> to vector<256x256xbf16>
    %c0_17 = arith.constant 0 : index
    %c0_18 = arith.constant 0 : index
    %c0_19 = arith.constant 0 : index
    %13 = vector.load %arg11[%c0_17, %c0_18, %c0_19] : memref<1x256x2048xbf16, #tpu.memory_space<vmem>>, vector<1x256x2048xbf16>
    %14 = vector.shape_cast %13 : vector<1x256x2048xbf16> to vector<256x2048xbf16>
    %c0_20 = arith.constant 0 : index
    %c0_21 = arith.constant 0 : index
    %c0_22 = arith.constant 0 : index
    %15 = vector.load %arg13[%c0_20, %c0_21, %c0_22] : memref<1x2048x256xbf16, #tpu.memory_space<vmem>>, vector<1x2048x256xbf16>
    %16 = vector.shape_cast %15 : vector<1x2048x256xbf16> to vector<2048x256xbf16>
    %c0_23 = arith.constant 0 : index
    %c0_24 = arith.constant 0 : index
    %c0_25 = arith.constant 0 : index
    %17 = vector.load %arg7[%c0_23, %c0_24, %c0_25] : memref<1x1x256xf32, #tpu.memory_space<vmem>>, vector<1x1x256xf32>
    %18 = vector.shape_cast %17 : vector<1x1x256xf32> to vector<1x256xf32>
    %c0_26 = arith.constant 0 : index
    %c0_27 = arith.constant 0 : index
    %c0_28 = arith.constant 0 : index
    %19 = vector.load %arg8[%c0_26, %c0_27, %c0_28] : memref<1x1x256xf32, #tpu.memory_space<vmem>>, vector<1x1x256xf32>
    %20 = vector.shape_cast %19 : vector<1x1x256xf32> to vector<1x256xf32>
    %c0_29 = arith.constant 0 : index
    %c0_30 = arith.constant 0 : index
    %c0_31 = arith.constant 0 : index
    %21 = vector.load %arg9[%c0_29, %c0_30, %c0_31] : memref<1x1x256xf32, #tpu.memory_space<vmem>>, vector<1x1x256xf32>
    %22 = vector.shape_cast %21 : vector<1x1x256xf32> to vector<1x256xf32>
    %c0_32 = arith.constant 0 : index
    %c0_33 = arith.constant 0 : index
    %c0_34 = arith.constant 0 : index
    %23 = vector.load %arg10[%c0_32, %c0_33, %c0_34] : memref<1x1x256xf32, #tpu.memory_space<vmem>>, vector<1x1x256xf32>
    %24 = vector.shape_cast %23 : vector<1x1x256xf32> to vector<1x256xf32>
    %c0_35 = arith.constant 0 : index
    %c0_36 = arith.constant 0 : index
    %c0_37 = arith.constant 0 : index
    %25 = vector.load %arg12[%c0_35, %c0_36, %c0_37] : memref<1x1x2048xf32, #tpu.memory_space<vmem>>, vector<1x1x2048xf32>
    %26 = vector.shape_cast %25 : vector<1x1x2048xf32> to vector<1x2048xf32>
    %c0_38 = arith.constant 0 : index
    %c0_39 = arith.constant 0 : index
    %c0_40 = arith.constant 0 : index
    %27 = vector.load %arg14[%c0_38, %c0_39, %c0_40] : memref<1x1x256xf32, #tpu.memory_space<vmem>>, vector<1x1x256xf32>
    %28 = vector.shape_cast %27 : vector<1x1x256xf32> to vector<1x256xf32>
    %c0_41 = arith.constant 0 : index
    %c0_42 = arith.constant 0 : index
    %c0_43 = arith.constant 0 : index
    %29 = vector.load %arg15[%c0_41, %c0_42, %c0_43] : memref<1x1x256xf32, #tpu.memory_space<vmem>>, vector<1x1x256xf32>
    %30 = vector.shape_cast %29 : vector<1x1x256xf32> to vector<1x256xf32>
    %c0_44 = arith.constant 0 : index
    %c0_45 = arith.constant 0 : index
    %c0_46 = arith.constant 0 : index
    %31 = vector.load %arg16[%c0_44, %c0_45, %c0_46] : memref<1x1x256xf32, #tpu.memory_space<vmem>>, vector<1x1x256xf32>
    %32 = vector.shape_cast %31 : vector<1x1x256xf32> to vector<1x256xf32>
    %c0_47 = arith.constant 0 : index
    %c0_48 = arith.constant 0 : index
    %c0_49 = arith.constant 0 : index
    %33 = vector.load %arg17[%c0_47, %c0_48, %c0_49] : memref<1x1x256xf32, #tpu.memory_space<vmem>>, vector<1x1x256xf32>
    %34 = vector.shape_cast %33 : vector<1x1x256xf32> to vector<1x256xf32>
    %c0_50 = arith.constant 0 : index
    %c0_51 = arith.constant 0 : index
    %c0_52 = arith.constant 0 : index
    %35 = vector.load %arg18[%c0_50, %c0_51, %c0_52] : memref<1x1x256xf32, #tpu.memory_space<vmem>>, vector<1x1x256xf32>
    %36 = vector.shape_cast %35 : vector<1x1x256xf32> to vector<1x256xf32>
    %37 = arith.truncf %3 : vector<16x256xf32> to vector<16x256xbf16>
    %cst = arith.constant dense<0.000000e+00> : vector<16x256xf32>
    %38 = tpu.matmul %37, %6, %cst {dimension_numbers = #tpu.dot_dimension_numbers<[1], [0], [0], [1], [0, 0, 1, 1], [], []>} : vector<16x256xbf16>, vector<256x256xbf16>, vector<16x256xf32> -> vector<16x256xf32>
    %39 = vector.broadcast %18 : vector<1x256xf32> to vector<16x256xf32>
    %40 = arith.addf %38, %39 : vector<16x256xf32>
    %cst_53 = arith.constant dense<0.000000e+00> : vector<16x256xf32>
    %41 = tpu.matmul %37, %8, %cst_53 {dimension_numbers = #tpu.dot_dimension_numbers<[1], [0], [0], [1], [0, 0, 1, 1], [], []>} : vector<16x256xbf16>, vector<256x256xbf16>, vector<16x256xf32> -> vector<16x256xf32>
    %42 = vector.broadcast %20 : vector<1x256xf32> to vector<16x256xf32>
    %43 = arith.addf %41, %42 : vector<16x256xf32>
    %cst_54 = arith.constant dense<0.000000e+00> : vector<16x256xf32>
    %44 = tpu.matmul %37, %10, %cst_54 {dimension_numbers = #tpu.dot_dimension_numbers<[1], [0], [0], [1], [0, 0, 1, 1], [], []>} : vector<16x256xbf16>, vector<256x256xbf16>, vector<16x256xf32> -> vector<16x256xf32>
    %45 = vector.broadcast %22 : vector<1x256xf32> to vector<16x256xf32>
    %46 = arith.addf %44, %45 : vector<16x256xf32>
    %47 = vector.shape_cast %40 : vector<16x256xf32> to vector<2x8x256xf32>
    %48 = vector.shape_cast %43 : vector<16x256xf32> to vector<2x8x256xf32>
    %49 = vector.shape_cast %46 : vector<16x256xf32> to vector<2x8x256xf32>
    %50 = vector.extract_strided_slice %47 {offsets = [0, 0, 0], sizes = [2, 8, 128], strides = [1, 1, 1]} : vector<2x8x256xf32> to vector<2x8x128xf32>
    %51 = vector.extract_strided_slice %48 {offsets = [0, 0, 0], sizes = [2, 8, 128], strides = [1, 1, 1]} : vector<2x8x256xf32> to vector<2x8x128xf32>
    %52 = vector.extract_strided_slice %49 {offsets = [0, 0, 0], sizes = [2, 8, 128], strides = [1, 1, 1]} : vector<2x8x256xf32> to vector<2x8x128xf32>
    "tpu.trace_start"() <{level = 10 : i32, message = "bqd,bkd->bqk"}> : () -> ()
    %cst_55 = arith.constant dense<0.000000e+00> : vector<2x8x8xf32>
    %53 = tpu.matmul %50, %51, %cst_55 {dimension_numbers = #tpu.dot_dimension_numbers<[2], [2], [1], [1], [0, 0, 0, 1, 1, 1], [0], [0]>} : vector<2x8x128xf32>, vector<2x8x128xf32>, vector<2x8x8xf32> -> vector<2x8x8xf32>
    "tpu.trace_stop"() : () -> ()
    %cst_56 = arith.constant 0.0883883461 : f32
    %54 = vector.broadcast %cst_56 : f32 to vector<2x8x8xf32>
    %55 = arith.mulf %53, %54 : vector<2x8x8xf32>
    %56 = vector.broadcast %4 : vector<2x1x8xf32> to vector<2x8x8xf32>
    %57 = arith.addf %55, %56 : vector<2x8x8xf32>
    %cst_57 = arith.constant dense<0xFF800000> : vector<2x8xf32>
    %58 = vector.multi_reduction <maximumf>, %57, %cst_57 [2] : vector<2x8x8xf32> to vector<2x8xf32>
    %59 = vector.shape_cast %58 : vector<2x8xf32> to vector<2x8x1xf32>
    %60 = vector.broadcast %59 : vector<2x8x1xf32> to vector<2x8x8xf32>
    %61 = arith.subf %57, %60 : vector<2x8x8xf32>
    %62 = math.exp %61 : vector<2x8x8xf32>
    %cst_58 = arith.constant dense<0.000000e+00> : vector<2x8xf32>
    %63 = vector.multi_reduction <add>, %62, %cst_58 [2] : vector<2x8x8xf32> to vector<2x8xf32>
    %64 = vector.shape_cast %63 : vector<2x8xf32> to vector<2x8x1xf32>
    %65 = vector.broadcast %64 : vector<2x8x1xf32> to vector<2x8x8xf32>
    %66 = arith.divf %62, %65 : vector<2x8x8xf32>
    "tpu.trace_start"() <{level = 10 : i32, message = "bqk,bkd->bqd"}> : () -> ()
    %cst_59 = arith.constant dense<0.000000e+00> : vector<2x8x128xf32>
    %67 = tpu.matmul %66, %52, %cst_59 {dimension_numbers = #tpu.dot_dimension_numbers<[2], [1], [1], [2], [0, 0, 0, 1, 1, 2], [0], [0]>} : vector<2x8x8xf32>, vector<2x8x128xf32>, vector<2x8x128xf32> -> vector<2x8x128xf32>
    "tpu.trace_stop"() : () -> ()
    %68 = vector.extract_strided_slice %47 {offsets = [0, 0, 128], sizes = [2, 8, 128], strides = [1, 1, 1]} : vector<2x8x256xf32> to vector<2x8x128xf32>
    %69 = vector.extract_strided_slice %48 {offsets = [0, 0, 128], sizes = [2, 8, 128], strides = [1, 1, 1]} : vector<2x8x256xf32> to vector<2x8x128xf32>
    %70 = vector.extract_strided_slice %49 {offsets = [0, 0, 128], sizes = [2, 8, 128], strides = [1, 1, 1]} : vector<2x8x256xf32> to vector<2x8x128xf32>
    "tpu.trace_start"() <{level = 10 : i32, message = "bqd,bkd->bqk"}> : () -> ()
    %cst_60 = arith.constant dense<0.000000e+00> : vector<2x8x8xf32>
    %71 = tpu.matmul %68, %69, %cst_60 {dimension_numbers = #tpu.dot_dimension_numbers<[2], [2], [1], [1], [0, 0, 0, 1, 1, 1], [0], [0]>} : vector<2x8x128xf32>, vector<2x8x128xf32>, vector<2x8x8xf32> -> vector<2x8x8xf32>
    "tpu.trace_stop"() : () -> ()
    %cst_61 = arith.constant 0.0883883461 : f32
    %72 = vector.broadcast %cst_61 : f32 to vector<2x8x8xf32>
    %73 = arith.mulf %71, %72 : vector<2x8x8xf32>
    %74 = vector.broadcast %4 : vector<2x1x8xf32> to vector<2x8x8xf32>
    %75 = arith.addf %73, %74 : vector<2x8x8xf32>
    %cst_62 = arith.constant dense<0xFF800000> : vector<2x8xf32>
    %76 = vector.multi_reduction <maximumf>, %75, %cst_62 [2] : vector<2x8x8xf32> to vector<2x8xf32>
    %77 = vector.shape_cast %76 : vector<2x8xf32> to vector<2x8x1xf32>
    %78 = vector.broadcast %77 : vector<2x8x1xf32> to vector<2x8x8xf32>
    %79 = arith.subf %75, %78 : vector<2x8x8xf32>
    %80 = math.exp %79 : vector<2x8x8xf32>
    %cst_63 = arith.constant dense<0.000000e+00> : vector<2x8xf32>
    %81 = vector.multi_reduction <add>, %80, %cst_63 [2] : vector<2x8x8xf32> to vector<2x8xf32>
    %82 = vector.shape_cast %81 : vector<2x8xf32> to vector<2x8x1xf32>
    %83 = vector.broadcast %82 : vector<2x8x1xf32> to vector<2x8x8xf32>
    %84 = arith.divf %80, %83 : vector<2x8x8xf32>
    "tpu.trace_start"() <{level = 10 : i32, message = "bqk,bkd->bqd"}> : () -> ()
    %cst_64 = arith.constant dense<0.000000e+00> : vector<2x8x128xf32>
    %85 = tpu.matmul %84, %70, %cst_64 {dimension_numbers = #tpu.dot_dimension_numbers<[2], [1], [1], [2], [0, 0, 0, 1, 1, 2], [0], [0]>} : vector<2x8x8xf32>, vector<2x8x128xf32>, vector<2x8x128xf32> -> vector<2x8x128xf32>
    "tpu.trace_stop"() : () -> ()
    %86 = tpu.concatenate %67, %85 in 2 : vector<2x8x128xf32>, vector<2x8x128xf32> -> vector<2x8x256xf32>
    %87 = vector.shape_cast %86 : vector<2x8x256xf32> to vector<16x256xf32>
    %88 = arith.truncf %87 : vector<16x256xf32> to vector<16x256xbf16>
    %cst_65 = arith.constant dense<0.000000e+00> : vector<16x256xf32>
    %89 = tpu.matmul %88, %12, %cst_65 {dimension_numbers = #tpu.dot_dimension_numbers<[1], [0], [0], [1], [0, 0, 1, 1], [], []>} : vector<16x256xbf16>, vector<256x256xbf16>, vector<16x256xf32> -> vector<16x256xf32>
    %90 = vector.broadcast %24 : vector<1x256xf32> to vector<16x256xf32>
    %91 = arith.addf %89, %90 : vector<16x256xf32>
    %92 = arith.addf %3, %91 : vector<16x256xf32>
    %cst_66 = arith.constant dense<0.000000e+00> : vector<16xf32>
    %93 = vector.multi_reduction <add>, %92, %cst_66 [1] : vector<16x256xf32> to vector<16xf32>
    %94 = vector.shape_cast %93 : vector<16xf32> to vector<16x1xf32>
    %cst_67 = arith.constant 2.560000e+02 : f32
    %95 = vector.broadcast %cst_67 : f32 to vector<16x1xf32>
    %96 = arith.divf %94, %95 : vector<16x1xf32>
    %97 = vector.broadcast %96 : vector<16x1xf32> to vector<16x256xf32>
    %98 = arith.subf %92, %97 : vector<16x256xf32>
    %99 = arith.mulf %98, %98 : vector<16x256xf32>
    %cst_68 = arith.constant dense<0.000000e+00> : vector<16xf32>
    %100 = vector.multi_reduction <add>, %99, %cst_68 [1] : vector<16x256xf32> to vector<16xf32>
    %101 = vector.shape_cast %100 : vector<16xf32> to vector<16x1xf32>
    %cst_69 = arith.constant 2.560000e+02 : f32
    %102 = vector.broadcast %cst_69 : f32 to vector<16x1xf32>
    %103 = arith.divf %101, %102 : vector<16x1xf32>
    %cst_70 = arith.constant 9.99999974E-6 : f32
    %104 = vector.broadcast %cst_70 : f32 to vector<16x1xf32>
    %105 = arith.addf %103, %104 : vector<16x1xf32>
    %106 = math.rsqrt %105 : vector<16x1xf32>
    %107 = vector.broadcast %106 : vector<16x1xf32> to vector<16x256xf32>
    %108 = arith.mulf %98, %107 : vector<16x256xf32>
    %109 = vector.broadcast %30 : vector<1x256xf32> to vector<16x256xf32>
    %110 = arith.mulf %108, %109 : vector<16x256xf32>
    %111 = vector.broadcast %32 : vector<1x256xf32> to vector<16x256xf32>
    %112 = arith.addf %110, %111 : vector<16x256xf32>
    %113 = arith.truncf %112 : vector<16x256xf32> to vector<16x256xbf16>
    %cst_71 = arith.constant dense<0.000000e+00> : vector<16x2048xf32>
    %114 = tpu.matmul %113, %14, %cst_71 {dimension_numbers = #tpu.dot_dimension_numbers<[1], [0], [0], [1], [0, 0, 1, 1], [], []>} : vector<16x256xbf16>, vector<256x2048xbf16>, vector<16x2048xf32> -> vector<16x2048xf32>
    %115 = vector.broadcast %26 : vector<1x2048xf32> to vector<16x2048xf32>
    %116 = arith.addf %114, %115 : vector<16x2048xf32>
    %cst_72 = arith.constant 0.000000e+00 : f32
    %117 = vector.broadcast %cst_72 : f32 to vector<16x2048xf32>
    %118 = arith.maximumf %116, %117 : vector<16x2048xf32>
    %119 = arith.truncf %118 : vector<16x2048xf32> to vector<16x2048xbf16>
    %cst_73 = arith.constant dense<0.000000e+00> : vector<16x256xf32>
    %120 = tpu.matmul %119, %16, %cst_73 {dimension_numbers = #tpu.dot_dimension_numbers<[1], [0], [0], [1], [0, 0, 1, 1], [], []>} : vector<16x2048xbf16>, vector<2048x256xbf16>, vector<16x256xf32> -> vector<16x256xf32>
    %121 = vector.broadcast %28 : vector<1x256xf32> to vector<16x256xf32>
    %122 = arith.addf %120, %121 : vector<16x256xf32>
    %123 = arith.addf %112, %122 : vector<16x256xf32>
    %cst_74 = arith.constant dense<0.000000e+00> : vector<16xf32>
    %124 = vector.multi_reduction <add>, %123, %cst_74 [1] : vector<16x256xf32> to vector<16xf32>
    %125 = vector.shape_cast %124 : vector<16xf32> to vector<16x1xf32>
    %cst_75 = arith.constant 2.560000e+02 : f32
    %126 = vector.broadcast %cst_75 : f32 to vector<16x1xf32>
    %127 = arith.divf %125, %126 : vector<16x1xf32>
    %128 = vector.broadcast %127 : vector<16x1xf32> to vector<16x256xf32>
    %129 = arith.subf %123, %128 : vector<16x256xf32>
    %130 = arith.mulf %129, %129 : vector<16x256xf32>
    %cst_76 = arith.constant dense<0.000000e+00> : vector<16xf32>
    %131 = vector.multi_reduction <add>, %130, %cst_76 [1] : vector<16x256xf32> to vector<16xf32>
    %132 = vector.shape_cast %131 : vector<16xf32> to vector<16x1xf32>
    %cst_77 = arith.constant 2.560000e+02 : f32
    %133 = vector.broadcast %cst_77 : f32 to vector<16x1xf32>
    %134 = arith.divf %132, %133 : vector<16x1xf32>
    %cst_78 = arith.constant 9.99999974E-6 : f32
    %135 = vector.broadcast %cst_78 : f32 to vector<16x1xf32>
    %136 = arith.addf %134, %135 : vector<16x1xf32>
    %137 = math.rsqrt %136 : vector<16x1xf32>
    %138 = vector.broadcast %137 : vector<16x1xf32> to vector<16x256xf32>
    %139 = arith.mulf %129, %138 : vector<16x256xf32>
    %140 = vector.broadcast %34 : vector<1x256xf32> to vector<16x256xf32>
    %141 = arith.mulf %139, %140 : vector<16x256xf32>
    %142 = vector.broadcast %36 : vector<1x256xf32> to vector<16x256xf32>
    %143 = arith.addf %141, %142 : vector<16x256xf32>
    %c0_79 = arith.constant 0 : index
    %c0_80 = arith.constant 0 : index
    %144 = vector.load %arg20[%c0_79, %c0_80] : memref<16x256xf32, #tpu.memory_space<vmem>>, vector<16x256xf32>
    tpu.vector_store %arg20[%c0_79, %c0_80], %143 {strides = array<i32>} : memref<16x256xf32, #tpu.memory_space<vmem>>, vector<16x256xf32>,
    %c1_i32 = arith.constant 1 : i32
    %145 = arith.cmpi eq, %arg0, %c1_i32 : i32
    %146 = arith.extui %145 : i1 to i32
    %c0_i32_81 = arith.constant 0 : i32
    %147 = arith.cmpi ne, %146, %c0_i32_81 : i32
    scf.if %147 {
      %148 = vector.shape_cast %143 : vector<16x256xf32> to vector<2x8x256xf32>
      %cst_82 = arith.constant dense<0.000000e+00> : vector<2x256xf32>
      %149 = vector.multi_reduction <add>, %148, %cst_82 [1] : vector<2x8x256xf32> to vector<2x256xf32>
      %c0_83 = arith.constant 0 : index
      %c0_84 = arith.constant 0 : index
      %150 = vector.load %arg19[%c0_83, %c0_84] : memref<2x256xf32, #tpu.memory_space<vmem>>, vector<2x256xf32>
      tpu.vector_store %arg19[%c0_83, %c0_84], %149 {strides = array<i32>} : memref<2x256xf32, #tpu.memory_space<vmem>>, vector<2x256xf32>,
    } else {
    }
    return
  }
  func.func @transform_0(%arg0: i32) -> (i32, i32) {
    %c0_i32 = arith.constant 0 : i32
    %c0_i32_0 = arith.constant 0 : i32
    %c0_i32_1 = arith.constant 0 : i32
    return %c0_i32, %c0_i32_0 : i32, i32
  }
  func.func @transform_1(%arg0: i32) -> (i32, i32, i32) {
    %c0_i32 = arith.constant 0 : i32
    %c0_i32_0 = arith.constant 0 : i32
    %c0_i32_1 = arith.constant 0 : i32
    %c0_i32_2 = arith.constant 0 : i32
    return %c0_i32, %c0_i32_0, %c0_i32_1 : i32, i32, i32
  }
  func.func @transform_2(%arg0: i32) -> (i32, i32, i32) {
    %c0_i32 = arith.constant 0 : i32
    %c0_i32_0 = arith.constant 0 : i32
    %c0_i32_1 = arith.constant 0 : i32
    return %arg0, %c0_i32, %c0_i32_0 : i32, i32, i32
  }
  func.func @transform_3(%arg0: i32) -> (i32, i32, i32) {
    %c0_i32 = arith.constant 0 : i32
    %c0_i32_0 = arith.constant 0 : i32
    %c0_i32_1 = arith.constant 0 : i32
    return %arg0, %c0_i32, %c0_i32_0 : i32, i32, i32
  }
  func.func @transform_4(%arg0: i32) -> (i32, i32, i32) {
    %c0_i32 = arith.constant 0 : i32
    %c0_i32_0 = arith.constant 0 : i32
    %c0_i32_1 = arith.constant 0 : i32
    return %arg0, %c0_i32, %c0_i32_0 : i32, i32, i32
  }
  func.func @transform_5(%arg0: i32) -> (i32, i32, i32) {
    %c0_i32 = arith.constant 0 : i32
    %c0_i32_0 = arith.constant 0 : i32
    %c0_i32_1 = arith.constant 0 : i32
    return %arg0, %c0_i32, %c0_i32_0 : i32, i32, i32
  }
  func.func @transform_6(%arg0: i32) -> (i32, i32, i32) {
    %c0_i32 = arith.constant 0 : i32
    %c0_i32_0 = arith.constant 0 : i32
    %c0_i32_1 = arith.constant 0 : i32
    return %arg0, %c0_i32, %c0_i32_0 : i32, i32, i32
  }
  func.func @transform_7(%arg0: i32) -> (i32, i32, i32) {
    %c0_i32 = arith.constant 0 : i32
    %c0_i32_0 = arith.constant 0 : i32
    %c0_i32_1 = arith.constant 0 : i32
    return %arg0, %c0_i32, %c0_i32_0 : i32, i32, i32
  }
  func.func @transform_8(%arg0: i32) -> (i32, i32, i32) {
    %c0_i32 = arith.constant 0 : i32
    %c0_i32_0 = arith.constant 0 : i32
    %c0_i32_1 = arith.constant 0 : i32
    return %arg0, %c0_i32, %c0_i32_0 : i32, i32, i32
  }
  func.func @transform_9(%arg0: i32) -> (i32, i32, i32) {
    %c0_i32 = arith.constant 0 : i32
    %c0_i32_0 = arith.constant 0 : i32
    %c0_i32_1 = arith.constant 0 : i32
    return %arg0, %c0_i32, %c0_i32_0 : i32, i32, i32
  }
  func.func @transform_10(%arg0: i32) -> (i32, i32, i32) {
    %c0_i32 = arith.constant 0 : i32
    %c0_i32_0 = arith.constant 0 : i32
    %c0_i32_1 = arith.constant 0 : i32
    return %arg0, %c0_i32, %c0_i32_0 : i32, i32, i32
  }
  func.func @transform_11(%arg0: i32) -> (i32, i32, i32) {
    %c0_i32 = arith.constant 0 : i32
    %c0_i32_0 = arith.constant 0 : i32
    %c0_i32_1 = arith.constant 0 : i32
    return %arg0, %c0_i32, %c0_i32_0 : i32, i32, i32
  }
  func.func @transform_12(%arg0: i32) -> (i32, i32, i32) {
    %c0_i32 = arith.constant 0 : i32
    %c0_i32_0 = arith.constant 0 : i32
    %c0_i32_1 = arith.constant 0 : i32
    return %arg0, %c0_i32, %c0_i32_0 : i32, i32, i32
  }
  func.func @transform_13(%arg0: i32) -> (i32, i32, i32) {
    %c0_i32 = arith.constant 0 : i32
    %c0_i32_0 = arith.constant 0 : i32
    %c0_i32_1 = arith.constant 0 : i32
    return %arg0, %c0_i32, %c0_i32_0 : i32, i32, i32
  }
  func.func @transform_14(%arg0: i32) -> (i32, i32, i32) {
    %c0_i32 = arith.constant 0 : i32
    %c0_i32_0 = arith.constant 0 : i32
    %c0_i32_1 = arith.constant 0 : i32
    return %arg0, %c0_i32, %c0_i32_0 : i32, i32, i32
  }
  func.func @transform_15(%arg0: i32) -> (i32, i32, i32) {
    %c0_i32 = arith.constant 0 : i32
    %c0_i32_0 = arith.constant 0 : i32
    %c0_i32_1 = arith.constant 0 : i32
    return %arg0, %c0_i32, %c0_i32_0 : i32, i32, i32
  }
  func.func @transform_16(%arg0: i32) -> (i32, i32, i32) {
    %c0_i32 = arith.constant 0 : i32
    %c0_i32_0 = arith.constant 0 : i32
    %c0_i32_1 = arith.constant 0 : i32
    return %arg0, %c0_i32, %c0_i32_0 : i32, i32, i32
  }
  func.func @transform_17(%arg0: i32) -> (i32, i32, i32) {
    %c0_i32 = arith.constant 0 : i32
    %c0_i32_0 = arith.constant 0 : i32
    %c0_i32_1 = arith.constant 0 : i32
    return %arg0, %c0_i32, %c0_i32_0 : i32, i32, i32
  }
  func.func @transform_18(%arg0: i32) -> (i32, i32) {
    %c0_i32 = arith.constant 0 : i32
    %c0_i32_0 = arith.constant 0 : i32
    %c0_i32_1 = arith.constant 0 : i32
    return %c0_i32, %c0_i32_0 : i32, i32
  }
}

</mosaic_0001>

<llo_original>
// kernel: vanilla_transformer_forward.1
$region0: #{vanilla_transformer_forward.1}
  #allocation0 [shape = 'u32[]', space=smem, size = 0x4, offset = 0x4, fixed_abs, tag = 'smem constant byte address 0x4 - core index']
  #allocation1 [shape = 'u32[72,128]{1,0:T(1,128)}', space=vmem, size = 0x9000, scoped, tag = 'internal scratch']
  #allocation2 [shape = 'f32[16,256]{1,0:T(8,128)}', space=vmem, size = 0x4000, scoped, tag = 'scratch operand']
  %s0 = inlined_call_operand.hbm [shape: f32[16,256], index: 0, kind: input, shape index: {}]
  %s1 = inlined_call_operand.vmem [shape: f32[2,1,8], index: 1, kind: input, shape index: {}]
  %s2 = inlined_call_operand.hbm [shape: bf16[2,256,256], index: 2, kind: input, shape index: {}]
  %s3 = inlined_call_operand.hbm [shape: bf16[2,256,256], index: 3, kind: input, shape index: {}]
  %s4 = inlined_call_operand.hbm [shape: bf16[2,256,256], index: 4, kind: input, shape index: {}]
  %s5 = inlined_call_operand.hbm [shape: bf16[2,256,256], index: 5, kind: input, shape index: {}]
  %s6 = inlined_call_operand.hbm [shape: f32[2,1,256], index: 6, kind: input, shape index: {}]
  %s7 = inlined_call_operand.hbm [shape: f32[2,1,256], index: 7, kind: input, shape index: {}]
  %s8 = inlined_call_operand.hbm [shape: f32[2,1,256], index: 8, kind: input, shape index: {}]
  %s9 = inlined_call_operand.hbm [shape: f32[2,1,256], index: 9, kind: input, shape index: {}]
  %s10 = inlined_call_operand.hbm [shape: bf16[2,256,2048], index: 10, kind: input, shape index: {}]
  %s11 = inlined_call_operand.hbm [shape: f32[2,1,2048], index: 11, kind: input, shape index: {}]
  %s12 = inlined_call_operand.hbm [shape: bf16[2,2048,256], index: 12, kind: input, shape index: {}]
  %s13 = inlined_call_operand.hbm [shape: f32[2,1,256], index: 13, kind: input, shape index: {}]
  %s14 = inlined_call_operand.hbm [shape: f32[2,1,256], index: 14, kind: input, shape index: {}]
  %s15 = inlined_call_operand.hbm [shape: f32[2,1,256], index: 15, kind: input, shape index: {}]
  %s16 = inlined_call_operand.hbm [shape: f32[2,1,256], index: 16, kind: input, shape index: {}]
  %s17 = inlined_call_operand.hbm [shape: f32[2,1,256], index: 17, kind: input, shape index: {}]
  %s18 = inlined_call_operand.hbm [shape: f32[2,256], index: 18, kind: output, shape index: {}]
  %s19 = sld [smem:[#allocation0]]
  $region181: #{vanilla_transformer_forward.1} parent=0
    _
  %s21 = ssub.s32 1, %s19
  %s22 = scalar_select 0, %s21, %s19
  $region1: #{vanilla_transformer_forward.1} parent=0
    #allocation3 [shape = 'u8[16384]{0}', space=vmem, size = 0x4000, scoped, tag = 'input window, operand 0, single buffered']
    #allocation4 [shape = 's32[2]{0}', space=sflag, size = 0x8, scoped, tag = 'scoped memory for vanilla_transformer_forward.1']
    #allocation5 [shape = 's32[2]{0}', space=sflag, size = 0x8, scoped, tag = 'scoped memory for vanilla_transformer_forward.1']
    #allocation6 [shape = 'u8[262144]{0}', space=vmem, size = 0x40000, scoped, tag = 'input window, operand 2']
    #allocation7 [shape = 's32[2]{0}', space=sflag, size = 0x8, scoped, tag = 'scoped memory for vanilla_transformer_forward.1']
    #allocation8 [shape = 'u8[262144]{0}', space=vmem, size = 0x40000, scoped, tag = 'input window, operand 3']
    #allocation9 [shape = 'u8[262144]{0}', space=vmem, size = 0x40000, scoped, tag = 'input window, operand 4']
    #allocation10 [shape = 's32[2]{0}', space=sflag, size = 0x8, scoped, tag = 'scoped memory for vanilla_transformer_forward.1']
    #allocation11 [shape = 'u8[262144]{0}', space=vmem, size = 0x40000, scoped, tag = 'input window, operand 5']
    #allocation12 [shape = 'u8[2048]{0}', space=vmem, size = 0x800, scoped, tag = 'input window, operand 6']
    #allocation13 [shape = 's32[2]{0}', space=sflag, size = 0x8, scoped, tag = 'scoped memory for vanilla_transformer_forward.1']
    #allocation14 [shape = 'u8[2048]{0}', space=vmem, size = 0x800, scoped, tag = 'input window, operand 7']
    #allocation15 [shape = 'u8[2048]{0}', space=vmem, size = 0x800, scoped, tag = 'input window, operand 8']
    #allocation16 [shape = 's32[2]{0}', space=sflag, size = 0x8, scoped, tag = 'scoped memory for vanilla_transformer_forward.1']
    #allocation17 [shape = 'u8[2048]{0}', space=vmem, size = 0x800, scoped, tag = 'input window, operand 9']
    #allocation18 [shape = 'u8[2097152]{0}', space=vmem, size = 0x200000, scoped, tag = 'input window, operand 10']
    #allocation19 [shape = 's32[2]{0}', space=sflag, size = 0x8, scoped, tag = 'scoped memory for vanilla_transformer_forward.1']
    #allocation20 [shape = 'u8[16384]{0}', space=vmem, size = 0x4000, scoped, tag = 'input window, operand 11']
    #allocation21 [shape = 'u8[2097152]{0}', space=vmem, size = 0x200000, scoped, tag = 'input window, operand 12']
    #allocation22 [shape = 's32[2]{0}', space=sflag, size = 0x8, scoped, tag = 'scoped memory for vanilla_transformer_forward.1']
    #allocation23 [shape = 'u8[2048]{0}', space=vmem, size = 0x800, scoped, tag = 'input window, operand 13']
    #allocation24 [shape = 'u8[2048]{0}', space=vmem, size = 0x800, scoped, tag = 'input window, operand 14']
    #allocation25 [shape = 's32[2]{0}', space=sflag, size = 0x8, scoped, tag = 'scoped memory for vanilla_transformer_forward.1']
    #allocation26 [shape = 'u8[2048]{0}', space=vmem, size = 0x800, scoped, tag = 'input window, operand 15']
    #allocation27 [shape = 'u8[2048]{0}', space=vmem, size = 0x800, scoped, tag = 'input window, operand 16']
    #allocation28 [shape = 's32[2]{0}', space=sflag, size = 0x8, scoped, tag = 'scoped memory for vanilla_transformer_forward.1']
    #allocation29 [shape = 'u8[2048]{0}', space=vmem, size = 0x800, scoped, tag = 'input window, operand 17']
    #allocation30 [shape = 'u8[2048]{0}', space=vmem, size = 0x800, scoped, tag = 'output window, operand 0, single buffered']
    %23 = vsyncpa [#allocation4], 0
    %24 = vsyncpa [#allocation7], 0
    %s25 = scalar_lea.sflag [#allocation7], 1
    %26 = vsyncpa %s25, 0
    %27 = vsyncpa [#allocation10], 0
    %s28 = scalar_lea.sflag [#allocation10], 1
    %29 = vsyncpa %s28, 0
    %30 = vsyncpa [#allocation13], 0
    %s31 = scalar_lea.sflag [#allocation13], 1
    %32 = vsyncpa %s31, 0
    %33 = vsyncpa [#allocation16], 0
    %s34 = scalar_lea.sflag [#allocation16], 1
    %35 = vsyncpa %s34, 0
    %36 = vsyncpa [#allocation19], 0
    %s37 = scalar_lea.sflag [#allocation19], 1
    %38 = vsyncpa %s37, 0
    %39 = vsyncpa [#allocation22], 0
    %s40 = scalar_lea.sflag [#allocation22], 1
    %41 = vsyncpa %s40, 0
    %42 = vsyncpa [#allocation25], 0
    %s43 = scalar_lea.sflag [#allocation25], 1
    %44 = vsyncpa %s43, 0
    %45 = vsyncpa [#allocation28], 0
    %s46 = scalar_lea.sflag [#allocation28], 1
    %47 = vsyncpa %s46, 0
    %48 = vsyncpa [#allocation5], 0
    loop: start=0, step=1, limit=4
    $region2: #{vanilla_transformer_forward.1} parent=1 // loop_pre_header
      _
    $region3: #{vanilla_transformer_forward.1} parent=1 // loop_header
      %s50 = sphi 0, %s54
      %p51 = scmp.ge.s32.totalorder %s50, 4
      %s58 = sphi 0, %s58
      %s60 = sphi 0, %s58
      %s61 = sphi 0, %s60
      %s75 = sphi 0, %s61
      %s79 = sphi 0, %s79
      %s81 = sphi 0, %s79
      %s82 = sphi 0, %s81
      %s96 = sphi 0, %s82
      %s102 = sphi 0, %s104
      %s105 = sphi 0, %s102
      %s106 = sphi 0, %s105
      %s122 = sphi 0, %s106
      %s128 = sphi 0, %s130
      %s131 = sphi 0, %s128
      %s132 = sphi 0, %s131
      %s148 = sphi 0, %s132
      %s154 = sphi 0, %s156
      %s157 = sphi 0, %s154
      %s158 = sphi 0, %s157
      %s174 = sphi 0, %s158
      %s180 = sphi 0, %s182
      %s183 = sphi 0, %s180
      %s184 = sphi 0, %s183
      %s200 = sphi 0, %s184
      %s206 = sphi 0, %s208
      %s209 = sphi 0, %s206
      %s210 = sphi 0, %s209
      %s226 = sphi 0, %s210
      %s232 = sphi 0, %s234
      %s235 = sphi 0, %s232
      %s236 = sphi 0, %s235
      %s252 = sphi 0, %s236
      %s258 = sphi 0, %s260
      %s261 = sphi 0, %s258
      %s262 = sphi 0, %s261
      %s278 = sphi 0, %s262
      %s284 = sphi 0, %s286
      %s287 = sphi 0, %s284
      %s288 = sphi 0, %s287
      %s304 = sphi 0, %s288
      %s310 = sphi 0, %s312
      %s313 = sphi 0, %s310
      %s314 = sphi 0, %s313
      %s330 = sphi 0, %s314
      %s336 = sphi 0, %s338
      %s339 = sphi 0, %s336
      %s340 = sphi 0, %s339
      %s356 = sphi 0, %s340
      %s362 = sphi 0, %s364
      %s365 = sphi 0, %s362
      %s366 = sphi 0, %s365
      %s382 = sphi 0, %s366
      %s388 = sphi 0, %s390
      %s391 = sphi 0, %s388
      %s392 = sphi 0, %s391
      %s408 = sphi 0, %s392
      %s414 = sphi 0, %s416
      %s417 = sphi 0, %s414
      %s418 = sphi 0, %s417
      %s434 = sphi 0, %s418
      %s440 = sphi 0, %s442
      %s443 = sphi 0, %s440
      %s444 = sphi 0, %s443
      %s460 = sphi 0, %s444
      %s466 = sphi 0, %s468
      %s469 = sphi 0, %s466
      %s470 = sphi 0, %s469
      %s486 = sphi 0, %s470
      %s492 = sphi 0, %s494
      %s495 = sphi 0, %s492
      %s496 = sphi 0, %s495
      %s512 = sphi 0, %s496
      %s516 = sphi 0, %s516
      %s518 = sphi 0, %s516
      %s519 = sphi 0, %s518
      %s533 = sphi 0, %s519
    $region4: #{vanilla_transformer_forward.1} parent=1 // loop_header_branch
      %53 = sbr.rel (%p51) target = $region8
    $region5: #{vanilla_transformer_forward.1} parent=1 // loop_body
      %s55 = ssub.s32 %s50, 1
      %s56 = ssub.s32 %s50, 2
      %s57 = sadd.s32 %s50, 1
      %s59 = sadd.s32 %s58, 1
      %p62 = scmp.eq.s32.totalorder %s50, 1
      %p63 = scmp.ne.s32.totalorder %s58, %s60
      %p64 = scmp.eq.s32.totalorder %s50, 0
      %p65 = por %p63, %p64
      %p66 = scmp.ne.s32.totalorder %s58, %s60
      %p67 = scmp.eq.s32.totalorder %s55, 1
      %p68 = por %p66, %p67
      %p69 = scmp.ne.s32.totalorder %s60, %s61
      %p70 = scmp.eq.s32.totalorder %s55, 0
      %p71 = por %p69, %p70
      %p72 = scmp.ne.s32.totalorder %s60, %s61
      %p73 = scmp.eq.s32.totalorder %s56, 1
      %p74 = por %p72, %p73
      %p76 = scmp.ne.s32.totalorder %s61, %s75
      %p77 = scmp.eq.s32.totalorder %s56, 0
      %p78 = por %p76, %p77
      %s80 = sadd.s32 %s79, 1
      %p83 = scmp.eq.s32.totalorder %s50, 1
      %p84 = scmp.ne.s32.totalorder %s79, %s81
      %p85 = scmp.eq.s32.totalorder %s50, 0
      %p86 = por %p84, %p85
      %p87 = scmp.ne.s32.totalorder %s79, %s81
      %p88 = scmp.eq.s32.totalorder %s55, 1
      %p89 = por %p87, %p88
      %p90 = scmp.ne.s32.totalorder %s81, %s82
      %p91 = scmp.eq.s32.totalorder %s55, 0
      %p92 = por %p90, %p91
      %p93 = scmp.ne.s32.totalorder %s81, %s82
      %p94 = scmp.eq.s32.totalorder %s56, 1
      %p95 = por %p93, %p94
      %p97 = scmp.ne.s32.totalorder %s82, %s96
      %p98 = scmp.eq.s32.totalorder %s56, 0
      %p99 = por %p97, %p98
      %s100 = ssub.s32 %s50, %s57
      %p101 = scmp.eq.s32.totalorder %s100, 0
      %s103 = sadd.s32 %s102, 1
      %s104 = scalar_select %p101, %s102, %s103
      %p107 = pneg %p101
      %p108 = scmp.eq.s32.totalorder %s50, 1
      %p109 = por %p107, %p108
      %p110 = scmp.ne.s32.totalorder %s102, %s105
      %p111 = scmp.eq.s32.totalorder %s50, 0
      %p112 = por %p110, %p111
      %p113 = scmp.ne.s32.totalorder %s102, %s105
      %p114 = scmp.eq.s32.totalorder %s55, 1
      %p115 = por %p113, %p114
      %p116 = scmp.ne.s32.totalorder %s105, %s106
      %p117 = scmp.eq.s32.totalorder %s55, 0
      %p118 = por %p116, %p117
      %p119 = scmp.ne.s32.totalorder %s105, %s106
      %p120 = scmp.eq.s32.totalorder %s56, 1
      %p121 = por %p119, %p120
      %p123 = scmp.ne.s32.totalorder %s106, %s122
      %p124 = scmp.eq.s32.totalorder %s56, 0
      %p125 = por %p123, %p124
      %s126 = ssub.s32 %s50, %s57
      %p127 = scmp.eq.s32.totalorder %s126, 0
      %s129 = sadd.s32 %s128, 1
      %s130 = scalar_select %p127, %s128, %s129
      %p133 = pneg %p127
      %p134 = scmp.eq.s32.totalorder %s50, 1
      %p135 = por %p133, %p134
      %p136 = scmp.ne.s32.totalorder %s128, %s131
      %p137 = scmp.eq.s32.totalorder %s50, 0
      %p138 = por %p136, %p137
      %p139 = scmp.ne.s32.totalorder %s128, %s131
      %p140 = scmp.eq.s32.totalorder %s55, 1
      %p141 = por %p139, %p140
      %p142 = scmp.ne.s32.totalorder %s131, %s132
      %p143 = scmp.eq.s32.totalorder %s55, 0
      %p144 = por %p142, %p143
      %p145 = scmp.ne.s32.totalorder %s131, %s132
      %p146 = scmp.eq.s32.totalorder %s56, 1
      %p147 = por %p145, %p146
      %p149 = scmp.ne.s32.totalorder %s132, %s148
      %p150 = scmp.eq.s32.totalorder %s56, 0
      %p151 = por %p149, %p150
      %s152 = ssub.s32 %s50, %s57
      %p153 = scmp.eq.s32.totalorder %s152, 0
      %s155 = sadd.s32 %s154, 1
      %s156 = scalar_select %p153, %s154, %s155
      %p159 = pneg %p153
      %p160 = scmp.eq.s32.totalorder %s50, 1
      %p161 = por %p159, %p160
      %p162 = scmp.ne.s32.totalorder %s154, %s157
      %p163 = scmp.eq.s32.totalorder %s50, 0
      %p164 = por %p162, %p163
      %p165 = scmp.ne.s32.totalorder %s154, %s157
      %p166 = scmp.eq.s32.totalorder %s55, 1
      %p167 = por %p165, %p166
      %p168 = scmp.ne.s32.totalorder %s157, %s158
      %p169 = scmp.eq.s32.totalorder %s55, 0
      %p170 = por %p168, %p169
      %p171 = scmp.ne.s32.totalorder %s157, %s158
      %p172 = scmp.eq.s32.totalorder %s56, 1
      %p173 = por %p171, %p172
      %p175 = scmp.ne.s32.totalorder %s158, %s174
      %p176 = scmp.eq.s32.totalorder %s56, 0
      %p177 = por %p175, %p176
      %s178 = ssub.s32 %s50, %s57
      %p179 = scmp.eq.s32.totalorder %s178, 0
      %s181 = sadd.s32 %s180, 1
      %s182 = scalar_select %p179, %s180, %s181
      %p185 = pneg %p179
      %p186 = scmp.eq.s32.totalorder %s50, 1
      %p187 = por %p185, %p186
      %p188 = scmp.ne.s32.totalorder %s180, %s183
      %p189 = scmp.eq.s32.totalorder %s50, 0
      %p190 = por %p188, %p189
      %p191 = scmp.ne.s32.totalorder %s180, %s183
      %p192 = scmp.eq.s32.totalorder %s55, 1
      %p193 = por %p191, %p192
      %p194 = scmp.ne.s32.totalorder %s183, %s184
      %p195 = scmp.eq.s32.totalorder %s55, 0
      %p196 = por %p194, %p195
      %p197 = scmp.ne.s32.totalorder %s183, %s184
      %p198 = scmp.eq.s32.totalorder %s56, 1
      %p199 = por %p197, %p198
      %p201 = scmp.ne.s32.totalorder %s184, %s200
      %p202 = scmp.eq.s32.totalorder %s56, 0
      %p203 = por %p201, %p202
      %s204 = ssub.s32 %s50, %s57
      %p205 = scmp.eq.s32.totalorder %s204, 0
      %s207 = sadd.s32 %s206, 1
      %s208 = scalar_select %p205, %s206, %s207
      %p211 = pneg %p205
      %p212 = scmp.eq.s32.totalorder %s50, 1
      %p213 = por %p211, %p212
      %p214 = scmp.ne.s32.totalorder %s206, %s209
      %p215 = scmp.eq.s32.totalorder %s50, 0
      %p216 = por %p214, %p215
      %p217 = scmp.ne.s32.totalorder %s206, %s209
      %p218 = scmp.eq.s32.totalorder %s55, 1
      %p219 = por %p217, %p218
      %p220 = scmp.ne.s32.totalorder %s209, %s210
      %p221 = scmp.eq.s32.totalorder %s55, 0
      %p222 = por %p220, %p221
      %p223 = scmp.ne.s32.totalorder %s209, %s210
      %p224 = scmp.eq.s32.totalorder %s56, 1
      %p225 = por %p223, %p224
      %p227 = scmp.ne.s32.totalorder %s210, %s226
      %p228 = scmp.eq.s32.totalorder %s56, 0
      %p229 = por %p227, %p228
      %s230 = ssub.s32 %s50, %s57
      %p231 = scmp.eq.s32.totalorder %s230, 0
      %s233 = sadd.s32 %s232, 1
      %s234 = scalar_select %p231, %s232, %s233
      %p237 = pneg %p231
      %p238 = scmp.eq.s32.totalorder %s50, 1
      %p239 = por %p237, %p238
      %p240 = scmp.ne.s32.totalorder %s232, %s235
      %p241 = scmp.eq.s32.totalorder %s50, 0
      %p242 = por %p240, %p241
      %p243 = scmp.ne.s32.totalorder %s232, %s235
      %p244 = scmp.eq.s32.totalorder %s55, 1
      %p245 = por %p243, %p244
      %p246 = scmp.ne.s32.totalorder %s235, %s236
      %p247 = scmp.eq.s32.totalorder %s55, 0
      %p248 = por %p246, %p247
      %p249 = scmp.ne.s32.totalorder %s235, %s236
      %p250 = scmp.eq.s32.totalorder %s56, 1
      %p251 = por %p249, %p250
      %p253 = scmp.ne.s32.totalorder %s236, %s252
      %p254 = scmp.eq.s32.totalorder %s56, 0
      %p255 = por %p253, %p254
      %s256 = ssub.s32 %s50, %s57
      %p257 = scmp.eq.s32.totalorder %s256, 0
      %s259 = sadd.s32 %s258, 1
      %s260 = scalar_select %p257, %s258, %s259
      %p263 = pneg %p257
      %p264 = scmp.eq.s32.totalorder %s50, 1
      %p265 = por %p263, %p264
      %p266 = scmp.ne.s32.totalorder %s258, %s261
      %p267 = scmp.eq.s32.totalorder %s50, 0
      %p268 = por %p266, %p267
      %p269 = scmp.ne.s32.totalorder %s258, %s261
      %p270 = scmp.eq.s32.totalorder %s55, 1
      %p271 = por %p269, %p270
      %p272 = scmp.ne.s32.totalorder %s261, %s262
      %p273 = scmp.eq.s32.totalorder %s55, 0
      %p274 = por %p272, %p273
      %p275 = scmp.ne.s32.totalorder %s261, %s262
      %p276 = scmp.eq.s32.totalorder %s56, 1
      %p277 = por %p275, %p276
      %p279 = scmp.ne.s32.totalorder %s262, %s278
      %p280 = scmp.eq.s32.totalorder %s56, 0
      %p281 = por %p279, %p280
      %s282 = ssub.s32 %s50, %s57
      %p283 = scmp.eq.s32.totalorder %s282, 0
      %s285 = sadd.s32 %s284, 1
      %s286 = scalar_select %p283, %s284, %s285
      %p289 = pneg %p283
      %p290 = scmp.eq.s32.totalorder %s50, 1
      %p291 = por %p289, %p290
      %p292 = scmp.ne.s32.totalorder %s284, %s287
      %p293 = scmp.eq.s32.totalorder %s50, 0
      %p294 = por %p292, %p293
      %p295 = scmp.ne.s32.totalorder %s284, %s287
      %p296 = scmp.eq.s32.totalorder %s55, 1
      %p297 = por %p295, %p296
      %p298 = scmp.ne.s32.totalorder %s287, %s288
      %p299 = scmp.eq.s32.totalorder %s55, 0
      %p300 = por %p298, %p299
      %p301 = scmp.ne.s32.totalorder %s287, %s288
      %p302 = scmp.eq.s32.totalorder %s56, 1
      %p303 = por %p301, %p302
      %p305 = scmp.ne.s32.totalorder %s288, %s304
      %p306 = scmp.eq.s32.totalorder %s56, 0
      %p307 = por %p305, %p306
      %s308 = ssub.s32 %s50, %s57
      %p309 = scmp.eq.s32.totalorder %s308, 0
      %s311 = sadd.s32 %s310, 1
      %s312 = scalar_select %p309, %s310, %s311
      %p315 = pneg %p309
      %p316 = scmp.eq.s32.totalorder %s50, 1
      %p317 = por %p315, %p316
      %p318 = scmp.ne.s32.totalorder %s310, %s313
      %p319 = scmp.eq.s32.totalorder %s50, 0
      %p320 = por %p318, %p319
      %p321 = scmp.ne.s32.totalorder %s310, %s313
      %p322 = scmp.eq.s32.totalorder %s55, 1
      %p323 = por %p321, %p322
      %p324 = scmp.ne.s32.totalorder %s313, %s314
      %p325 = scmp.eq.s32.totalorder %s55, 0
      %p326 = por %p324, %p325
      %p327 = scmp.ne.s32.totalorder %s313, %s314
      %p328 = scmp.eq.s32.totalorder %s56, 1
      %p329 = por %p327, %p328
      %p331 = scmp.ne.s32.totalorder %s314, %s330
      %p332 = scmp.eq.s32.totalorder %s56, 0
      %p333 = por %p331, %p332
      %s334 = ssub.s32 %s50, %s57
      %p335 = scmp.eq.s32.totalorder %s334, 0
      %s337 = sadd.s32 %s336, 1
      %s338 = scalar_select %p335, %s336, %s337
      %p341 = pneg %p335
      %p342 = scmp.eq.s32.totalorder %s50, 1
      %p343 = por %p341, %p342
      %p344 = scmp.ne.s32.totalorder %s336, %s339
      %p345 = scmp.eq.s32.totalorder %s50, 0
      %p346 = por %p344, %p345
      %p347 = scmp.ne.s32.totalorder %s336, %s339
      %p348 = scmp.eq.s32.totalorder %s55, 1
      %p349 = por %p347, %p348
      %p350 = scmp.ne.s32.totalorder %s339, %s340
      %p351 = scmp.eq.s32.totalorder %s55, 0
      %p352 = por %p350, %p351
      %p353 = scmp.ne.s32.totalorder %s339, %s340
      %p354 = scmp.eq.s32.totalorder %s56, 1
      %p355 = por %p353, %p354
      %p357 = scmp.ne.s32.totalorder %s340, %s356
      %p358 = scmp.eq.s32.totalorder %s56, 0
      %p359 = por %p357, %p358
      %s360 = ssub.s32 %s50, %s57
      %p361 = scmp.eq.s32.totalorder %s360, 0
      %s363 = sadd.s32 %s362, 1
      %s364 = scalar_select %p361, %s362, %s363
      %p367 = pneg %p361
      %p368 = scmp.eq.s32.totalorder %s50, 1
      %p369 = por %p367, %p368
      %p370 = scmp.ne.s32.totalorder %s362, %s365
      %p371 = scmp.eq.s32.totalorder %s50, 0
      %p372 = por %p370, %p371
      %p373 = scmp.ne.s32.totalorder %s362, %s365
      %p374 = scmp.eq.s32.totalorder %s55, 1
      %p375 = por %p373, %p374
      %p376 = scmp.ne.s32.totalorder %s365, %s366
      %p377 = scmp.eq.s32.totalorder %s55, 0
      %p378 = por %p376, %p377
      %p379 = scmp.ne.s32.totalorder %s365, %s366
      %p380 = scmp.eq.s32.totalorder %s56, 1
      %p381 = por %p379, %p380
      %p383 = scmp.ne.s32.totalorder %s366, %s382
      %p384 = scmp.eq.s32.totalorder %s56, 0
      %p385 = por %p383, %p384
      %s386 = ssub.s32 %s50, %s57
      %p387 = scmp.eq.s32.totalorder %s386, 0
      %s389 = sadd.s32 %s388, 1
      %s390 = scalar_select %p387, %s388, %s389
      %p393 = pneg %p387
      %p394 = scmp.eq.s32.totalorder %s50, 1
      %p395 = por %p393, %p394
      %p396 = scmp.ne.s32.totalorder %s388, %s391
      %p397 = scmp.eq.s32.totalorder %s50, 0
      %p398 = por %p396, %p397
      %p399 = scmp.ne.s32.totalorder %s388, %s391
      %p400 = scmp.eq.s32.totalorder %s55, 1
      %p401 = por %p399, %p400
      %p402 = scmp.ne.s32.totalorder %s391, %s392
      %p403 = scmp.eq.s32.totalorder %s55, 0
      %p404 = por %p402, %p403
      %p405 = scmp.ne.s32.totalorder %s391, %s392
      %p406 = scmp.eq.s32.totalorder %s56, 1
      %p407 = por %p405, %p406
      %p409 = scmp.ne.s32.totalorder %s392, %s408
      %p410 = scmp.eq.s32.totalorder %s56, 0
      %p411 = por %p409, %p410
      %s412 = ssub.s32 %s50, %s57
      %p413 = scmp.eq.s32.totalorder %s412, 0
      %s415 = sadd.s32 %s414, 1
      %s416 = scalar_select %p413, %s414, %s415
      %p419 = pneg %p413
      %p420 = scmp.eq.s32.totalorder %s50, 1
      %p421 = por %p419, %p420
      %p422 = scmp.ne.s32.totalorder %s414, %s417
      %p423 = scmp.eq.s32.totalorder %s50, 0
      %p424 = por %p422, %p423
      %p425 = scmp.ne.s32.totalorder %s414, %s417
      %p426 = scmp.eq.s32.totalorder %s55, 1
      %p427 = por %p425, %p426
      %p428 = scmp.ne.s32.totalorder %s417, %s418
      %p429 = scmp.eq.s32.totalorder %s55, 0
      %p430 = por %p428, %p429
      %p431 = scmp.ne.s32.totalorder %s417, %s418
      %p432 = scmp.eq.s32.totalorder %s56, 1
      %p433 = por %p431, %p432
      %p435 = scmp.ne.s32.totalorder %s418, %s434
      %p436 = scmp.eq.s32.totalorder %s56, 0
      %p437 = por %p435, %p436
      %s438 = ssub.s32 %s50, %s57
      %p439 = scmp.eq.s32.totalorder %s438, 0
      %s441 = sadd.s32 %s440, 1
      %s442 = scalar_select %p439, %s440, %s441
      %p445 = pneg %p439
      %p446 = scmp.eq.s32.totalorder %s50, 1
      %p447 = por %p445, %p446
      %p448 = scmp.ne.s32.totalorder %s440, %s443
      %p449 = scmp.eq.s32.totalorder %s50, 0
      %p450 = por %p448, %p449
      %p451 = scmp.ne.s32.totalorder %s440, %s443
      %p452 = scmp.eq.s32.totalorder %s55, 1
      %p453 = por %p451, %p452
      %p454 = scmp.ne.s32.totalorder %s443, %s444
      %p455 = scmp.eq.s32.totalorder %s55, 0
      %p456 = por %p454, %p455
      %p457 = scmp.ne.s32.totalorder %s443, %s444
      %p458 = scmp.eq.s32.totalorder %s56, 1
      %p459 = por %p457, %p458
      %p461 = scmp.ne.s32.totalorder %s444, %s460
      %p462 = scmp.eq.s32.totalorder %s56, 0
      %p463 = por %p461, %p462
      %s464 = ssub.s32 %s50, %s57
      %p465 = scmp.eq.s32.totalorder %s464, 0
      %s467 = sadd.s32 %s466, 1
      %s468 = scalar_select %p465, %s466, %s467
      %p471 = pneg %p465
      %p472 = scmp.eq.s32.totalorder %s50, 1
      %p473 = por %p471, %p472
      %p474 = scmp.ne.s32.totalorder %s466, %s469
      %p475 = scmp.eq.s32.totalorder %s50, 0
      %p476 = por %p474, %p475
      %p477 = scmp.ne.s32.totalorder %s466, %s469
      %p478 = scmp.eq.s32.totalorder %s55, 1
      %p479 = por %p477, %p478
      %p480 = scmp.ne.s32.totalorder %s469, %s470
      %p481 = scmp.eq.s32.totalorder %s55, 0
      %p482 = por %p480, %p481
      %p483 = scmp.ne.s32.totalorder %s469, %s470
      %p484 = scmp.eq.s32.totalorder %s56, 1
      %p485 = por %p483, %p484
      %p487 = scmp.ne.s32.totalorder %s470, %s486
      %p488 = scmp.eq.s32.totalorder %s56, 0
      %p489 = por %p487, %p488
      %s490 = ssub.s32 %s50, %s57
      %p491 = scmp.eq.s32.totalorder %s490, 0
      %s493 = sadd.s32 %s492, 1
      %s494 = scalar_select %p491, %s492, %s493
      %p497 = pneg %p491
      %p498 = scmp.eq.s32.totalorder %s50, 1
      %p499 = por %p497, %p498
      %p500 = scmp.ne.s32.totalorder %s492, %s495
      %p501 = scmp.eq.s32.totalorder %s50, 0
      %p502 = por %p500, %p501
      %p503 = scmp.ne.s32.totalorder %s492, %s495
      %p504 = scmp.eq.s32.totalorder %s55, 1
      %p505 = por %p503, %p504
      %p506 = scmp.ne.s32.totalorder %s495, %s496
      %p507 = scmp.eq.s32.totalorder %s55, 0
      %p508 = por %p506, %p507
      %p509 = scmp.ne.s32.totalorder %s495, %s496
      %p510 = scmp.eq.s32.totalorder %s56, 1
      %p511 = por %p509, %p510
      %p513 = scmp.ne.s32.totalorder %s496, %s512
      %p514 = scmp.eq.s32.totalorder %s56, 0
      %p515 = por %p513, %p514
      %s517 = sadd.s32 %s516, 1
      %p520 = scmp.eq.s32.totalorder %s50, 1
      %p521 = scmp.ne.s32.totalorder %s516, %s518
      %p522 = scmp.eq.s32.totalorder %s50, 0
      %p523 = por %p521, %p522
      %p524 = scmp.ne.s32.totalorder %s516, %s518
      %p525 = scmp.eq.s32.totalorder %s55, 1
      %p526 = por %p524, %p525
      %p527 = scmp.ne.s32.totalorder %s518, %s519
      %p528 = scmp.eq.s32.totalorder %s55, 0
      %p529 = por %p527, %p528
      %p530 = scmp.ne.s32.totalorder %s518, %s519
      %p531 = scmp.eq.s32.totalorder %s56, 1
      %p532 = por %p530, %p531
      %p534 = scmp.ne.s32.totalorder %s519, %s533
      %p535 = scmp.eq.s32.totalorder %s56, 0
      %p536 = por %p534, %p535
      %p537 = scmp.le.s32.totalorder 1, %s50
      %p538 = scmp.lt.s32.totalorder %s50, 3
      %p539 = pnand %p537, %p538
      %p540 = pneg %p539
      // Predicated region
      $region9: #{vanilla_transformer_forward.1} parent=5 // pred_check
        _
      $region10: #{vanilla_transformer_forward.1} parent=5 // pred_check_branch
        %542 = sbr.rel (%p539) target = $region12
      $region11: #{vanilla_transformer_forward.1} parent=5 // pred_region
        %s543 = ssub.s32 %s50, 1
        // Predicated region
        $region13: #{vanilla_transformer_forward.1} parent=11 // pred_check
          %p544 = pneg %p71
        $region14: #{vanilla_transformer_forward.1} parent=11 // pred_check_branch
          %546 = sbr.rel (%p544) target = $region16
        $region15: #{vanilla_transformer_forward.1} parent=11 // pred_region
          %548 = vsyncadd [#allocation4], 0
          %s549 = sshll.u32 %s0, 4
          %s550 = int_to_ptr.hbm [resolvable:$true] %s549
          %s551 = sshll.u32 [#allocation3], 4
          %s552 = int_to_ptr.vmem [resolvable:$true] %s551
          %557 = dma.hbm_to_vmem [thread:$0]  %s550, 512, %s552, [#allocation4], 256, 256, 16
        $region16: #{vanilla_transformer_forward.1} parent=11 // pred_fallthru
          _
        // Predicated region
        $region17: #{vanilla_transformer_forward.1} parent=11 // pred_check
          %p558 = pneg %p92
        $region18: #{vanilla_transformer_forward.1} parent=11 // pred_check_branch
          %560 = sbr.rel (%p558) target = $region20
        $region19: #{vanilla_transformer_forward.1} parent=11 // pred_region
          _
        $region20: #{vanilla_transformer_forward.1} parent=11 // pred_fallthru
          _
      $region12: #{vanilla_transformer_forward.1} parent=5 // pred_fallthru
        _
      %p561 = scmp.lt.s32.totalorder %s50, 2
      // Predicated region
      $region21: #{vanilla_transformer_forward.1} parent=5 // pred_check
        %p562 = pneg %p561
      $region22: #{vanilla_transformer_forward.1} parent=5 // pred_check_branch
        %564 = sbr.rel (%p562) target = $region24
      $region23: #{vanilla_transformer_forward.1} parent=5 // pred_region
        // Predicated region
        $region25: #{vanilla_transformer_forward.1} parent=23 // pred_check
          %p565 = pneg %p112
        $region26: #{vanilla_transformer_forward.1} parent=23 // pred_check_branch
          %567 = sbr.rel (%p565) target = $region28
        $region27: #{vanilla_transformer_forward.1} parent=23 // pred_region
          %s568 = sand.u32 %s50, 1
          %s569 = scalar_lea.sflag [#allocation7], %s568
          %s570 = sand.u32 %s102, 1
          %s571 = smul.addr %s570, 256
          %s572 = scalar_lea.vmem [#allocation6], %s571
          %574 = vsyncadd %s569, 0
          %s575 = smul.addr %s50, 64
          %s576 = smul.addr %s575, 4
          %s577 = scalar_lea.hbm %s2, %s576
          %s578 = sshll.u32 %s577, 4
          %s579 = int_to_ptr.hbm [resolvable:$true] %s578
          %s580 = sshll.u32 %s572, 4
          %s581 = int_to_ptr.vmem [resolvable:$true] %s580
          %586 = dma.hbm_to_vmem [thread:$0]  %s579, 4096, %s581, %s569, 128, 128, 8
        $region28: #{vanilla_transformer_forward.1} parent=23 // pred_fallthru
          _
        // Predicated region
        $region29: #{vanilla_transformer_forward.1} parent=23 // pred_check
          %p587 = pneg %p138
        $region30: #{vanilla_transformer_forward.1} parent=23 // pred_check_branch
          %589 = sbr.rel (%p587) target = $region32
        $region31: #{vanilla_transformer_forward.1} parent=23 // pred_region
          %s590 = sand.u32 %s50, 1
          %s591 = scalar_lea.sflag [#allocation7], %s590
          %s592 = sand.u32 %s128, 1
          %s593 = smul.addr %s592, 256
          %s594 = scalar_lea.vmem [#allocation8], %s593
          %596 = vsyncadd %s591, 0
          %s597 = smul.addr %s50, 64
          %s598 = smul.addr %s597, 4
          %s599 = scalar_lea.hbm %s3, %s598
          %s600 = sshll.u32 %s599, 4
          %s601 = int_to_ptr.hbm [resolvable:$true] %s600
          %s602 = sshll.u32 %s594, 4
          %s603 = int_to_ptr.vmem [resolvable:$true] %s602
          %608 = dma.hbm_to_vmem [thread:$0]  %s601, 4096, %s603, %s591, 128, 128, 8
        $region32: #{vanilla_transformer_forward.1} parent=23 // pred_fallthru
          _
        // Predicated region
        $region33: #{vanilla_transformer_forward.1} parent=23 // pred_check
          %p609 = pneg %p164
        $region34: #{vanilla_transformer_forward.1} parent=23 // pred_check_branch
          %611 = sbr.rel (%p609) target = $region36
        $region35: #{vanilla_transformer_forward.1} parent=23 // pred_region
          %s612 = sand.u32 %s50, 1
          %s613 = scalar_lea.sflag [#allocation10], %s612
          %s614 = sand.u32 %s154, 1
          %s615 = smul.addr %s614, 256
          %s616 = scalar_lea.vmem [#allocation9], %s615
          %618 = vsyncadd %s613, 0
          %s619 = smul.addr %s50, 64
          %s620 = smul.addr %s619, 4
          %s621 = scalar_lea.hbm %s4, %s620
          %s622 = sshll.u32 %s621, 4
          %s623 = int_to_ptr.hbm [resolvable:$true] %s622
          %s624 = sshll.u32 %s616, 4
          %s625 = int_to_ptr.vmem [resolvable:$true] %s624
          %630 = dma.hbm_to_vmem [thread:$0]  %s623, 4096, %s625, %s613, 128, 128, 8
        $region36: #{vanilla_transformer_forward.1} parent=23 // pred_fallthru
          _
        // Predicated region
        $region37: #{vanilla_transformer_forward.1} parent=23 // pred_check
          %p631 = pneg %p190
        $region38: #{vanilla_transformer_forward.1} parent=23 // pred_check_branch
          %633 = sbr.rel (%p631) target = $region40
        $region39: #{vanilla_transformer_forward.1} parent=23 // pred_region
          %s634 = sand.u32 %s50, 1
          %s635 = scalar_lea.sflag [#allocation10], %s634
          %s636 = sand.u32 %s180, 1
          %s637 = smul.addr %s636, 256
          %s638 = scalar_lea.vmem [#allocation11], %s637
          %640 = vsyncadd %s635, 0
          %s641 = smul.addr %s50, 64
          %s642 = smul.addr %s641, 4
          %s643 = scalar_lea.hbm %s5, %s642
          %s644 = sshll.u32 %s643, 4
          %s645 = int_to_ptr.hbm [resolvable:$true] %s644
          %s646 = sshll.u32 %s638, 4
          %s647 = int_to_ptr.vmem [resolvable:$true] %s646
          %652 = dma.hbm_to_vmem [thread:$0]  %s645, 4096, %s647, %s635, 128, 128, 8
        $region40: #{vanilla_transformer_forward.1} parent=23 // pred_fallthru
          _
        // Predicated region
        $region41: #{vanilla_transformer_forward.1} parent=23 // pred_check
          %p653 = pneg %p216
        $region42: #{vanilla_transformer_forward.1} parent=23 // pred_check_branch
          %655 = sbr.rel (%p653) target = $region44
        $region43: #{vanilla_transformer_forward.1} parent=23 // pred_region
          %s656 = sand.u32 %s50, 1
          %s657 = scalar_lea.sflag [#allocation13], %s656
          %s658 = sand.u32 %s206, 1
          %s659 = smul.addr %s658, 2
          %s660 = scalar_lea.vmem [#allocation12], %s659
          %662 = vsyncadd %s657, 0
          %s663 = smul.addr %s50, 2
          %s664 = scalar_lea.hbm %s6, %s663
          %s666 = sshll.u32 %s664, 4
          %s667 = int_to_ptr.hbm [resolvable:$true] %s666
          %s668 = sshll.u32 %s660, 4
          %s669 = int_to_ptr.vmem [resolvable:$true] %s668
          %671 = dma.hbm_to_vmem [thread:$0]  %s667, 32, %s669, %s657
        $region44: #{vanilla_transformer_forward.1} parent=23 // pred_fallthru
          _
        // Predicated region
        $region45: #{vanilla_transformer_forward.1} parent=23 // pred_check
          %p672 = pneg %p242
        $region46: #{vanilla_transformer_forward.1} parent=23 // pred_check_branch
          %674 = sbr.rel (%p672) target = $region48
        $region47: #{vanilla_transformer_forward.1} parent=23 // pred_region
          %s675 = sand.u32 %s50, 1
          %s676 = scalar_lea.sflag [#allocation13], %s675
          %s677 = sand.u32 %s232, 1
          %s678 = smul.addr %s677, 2
          %s679 = scalar_lea.vmem [#allocation14], %s678
          %681 = vsyncadd %s676, 0
          %s682 = smul.addr %s50, 2
          %s683 = scalar_lea.hbm %s7, %s682
          %s685 = sshll.u32 %s683, 4
          %s686 = int_to_ptr.hbm [resolvable:$true] %s685
          %s687 = sshll.u32 %s679, 4
          %s688 = int_to_ptr.vmem [resolvable:$true] %s687
          %690 = dma.hbm_to_vmem [thread:$0]  %s686, 32, %s688, %s676
        $region48: #{vanilla_transformer_forward.1} parent=23 // pred_fallthru
          _
        // Predicated region
        $region49: #{vanilla_transformer_forward.1} parent=23 // pred_check
          %p691 = pneg %p268
        $region50: #{vanilla_transformer_forward.1} parent=23 // pred_check_branch
          %693 = sbr.rel (%p691) target = $region52
        $region51: #{vanilla_transformer_forward.1} parent=23 // pred_region
          %s694 = sand.u32 %s50, 1
          %s695 = scalar_lea.sflag [#allocation16], %s694
          %s696 = sand.u32 %s258, 1
          %s697 = smul.addr %s696, 2
          %s698 = scalar_lea.vmem [#allocation15], %s697
          %700 = vsyncadd %s695, 0
          %s701 = smul.addr %s50, 2
          %s702 = scalar_lea.hbm %s8, %s701
          %s704 = sshll.u32 %s702, 4
          %s705 = int_to_ptr.hbm [resolvable:$true] %s704
          %s706 = sshll.u32 %s698, 4
          %s707 = int_to_ptr.vmem [resolvable:$true] %s706
          %709 = dma.hbm_to_vmem [thread:$0]  %s705, 32, %s707, %s695
        $region52: #{vanilla_transformer_forward.1} parent=23 // pred_fallthru
          _
        // Predicated region
        $region53: #{vanilla_transformer_forward.1} parent=23 // pred_check
          %p710 = pneg %p294
        $region54: #{vanilla_transformer_forward.1} parent=23 // pred_check_branch
          %712 = sbr.rel (%p710) target = $region56
        $region55: #{vanilla_transformer_forward.1} parent=23 // pred_region
          %s713 = sand.u32 %s50, 1
          %s714 = scalar_lea.sflag [#allocation16], %s713
          %s715 = sand.u32 %s284, 1
          %s716 = smul.addr %s715, 2
          %s717 = scalar_lea.vmem [#allocation17], %s716
          %719 = vsyncadd %s714, 0
          %s720 = smul.addr %s50, 2
          %s721 = scalar_lea.hbm %s9, %s720
          %s723 = sshll.u32 %s721, 4
          %s724 = int_to_ptr.hbm [resolvable:$true] %s723
          %s725 = sshll.u32 %s717, 4
          %s726 = int_to_ptr.vmem [resolvable:$true] %s725
          %728 = dma.hbm_to_vmem [thread:$0]  %s724, 32, %s726, %s714
        $region56: #{vanilla_transformer_forward.1} parent=23 // pred_fallthru
          _
        // Predicated region
        $region57: #{vanilla_transformer_forward.1} parent=23 // pred_check
          %p729 = pneg %p320
        $region58: #{vanilla_transformer_forward.1} parent=23 // pred_check_branch
          %731 = sbr.rel (%p729) target = $region60
        $region59: #{vanilla_transformer_forward.1} parent=23 // pred_region
          %s732 = sand.u32 %s50, 1
          %s733 = scalar_lea.sflag [#allocation19], %s732
          %s734 = sand.u32 %s310, 1
          %s735 = smul.addr %s734, 2048
          %s736 = scalar_lea.vmem [#allocation18], %s735
          %738 = vsyncadd %s733, 0
          %s739 = smul.addr %s50, 512
          %s740 = smul.addr %s739, 4
          %s741 = scalar_lea.hbm %s10, %s740
          %s742 = sshll.u32 %s741, 4
          %s743 = int_to_ptr.hbm [resolvable:$true] %s742
          %s744 = sshll.u32 %s736, 4
          %s745 = int_to_ptr.vmem [resolvable:$true] %s744
          %750 = dma.hbm_to_vmem [thread:$0]  %s743, 32768, %s745, %s733, 1024, 1024, 64
        $region60: #{vanilla_transformer_forward.1} parent=23 // pred_fallthru
          _
        // Predicated region
        $region61: #{vanilla_transformer_forward.1} parent=23 // pred_check
          %p751 = pneg %p346
        $region62: #{vanilla_transformer_forward.1} parent=23 // pred_check_branch
          %753 = sbr.rel (%p751) target = $region64
        $region63: #{vanilla_transformer_forward.1} parent=23 // pred_region
          %s754 = sand.u32 %s50, 1
          %s755 = scalar_lea.sflag [#allocation19], %s754
          %s756 = sand.u32 %s336, 1
          %s757 = smul.addr %s756, 16
          %s758 = scalar_lea.vmem [#allocation20], %s757
          %760 = vsyncadd %s755, 0
          %s761 = smul.addr %s50, 16
          %s762 = scalar_lea.hbm %s11, %s761
          %s764 = sshll.u32 %s762, 4
          %s765 = int_to_ptr.hbm [resolvable:$true] %s764
          %s766 = sshll.u32 %s758, 4
          %s767 = int_to_ptr.vmem [resolvable:$true] %s766
          %769 = dma.hbm_to_vmem [thread:$0]  %s765, 256, %s767, %s755
        $region64: #{vanilla_transformer_forward.1} parent=23 // pred_fallthru
          _
        // Predicated region
        $region65: #{vanilla_transformer_forward.1} parent=23 // pred_check
          %p770 = pneg %p372
        $region66: #{vanilla_transformer_forward.1} parent=23 // pred_check_branch
          %772 = sbr.rel (%p770) target = $region68
        $region67: #{vanilla_transformer_forward.1} parent=23 // pred_region
          %s773 = sand.u32 %s50, 1
          %s774 = scalar_lea.sflag [#allocation22], %s773
          %s775 = sand.u32 %s362, 1
          %s776 = smul.addr %s775, 2048
          %s777 = scalar_lea.vmem [#allocation21], %s776
          %779 = vsyncadd %s774, 0
          %s780 = smul.addr %s50, 512
          %s781 = smul.addr %s780, 4
          %s782 = scalar_lea.hbm %s12, %s781
          %s783 = sshll.u32 %s782, 4
          %s784 = int_to_ptr.hbm [resolvable:$true] %s783
          %s785 = sshll.u32 %s777, 4
          %s786 = int_to_ptr.vmem [resolvable:$true] %s785
          %791 = dma.hbm_to_vmem [thread:$0]  %s784, 32768, %s786, %s774, 128, 128, 8
        $region68: #{vanilla_transformer_forward.1} parent=23 // pred_fallthru
          _
        // Predicated region
        $region69: #{vanilla_transformer_forward.1} parent=23 // pred_check
          %p792 = pneg %p398
        $region70: #{vanilla_transformer_forward.1} parent=23 // pred_check_branch
          %794 = sbr.rel (%p792) target = $region72
        $region71: #{vanilla_transformer_forward.1} parent=23 // pred_region
          %s795 = sand.u32 %s50, 1
          %s796 = scalar_lea.sflag [#allocation22], %s795
          %s797 = sand.u32 %s388, 1
          %s798 = smul.addr %s797, 2
          %s799 = scalar_lea.vmem [#allocation23], %s798
          %801 = vsyncadd %s796, 0
          %s802 = smul.addr %s50, 2
          %s803 = scalar_lea.hbm %s13, %s802
          %s805 = sshll.u32 %s803, 4
          %s806 = int_to_ptr.hbm [resolvable:$true] %s805
          %s807 = sshll.u32 %s799, 4
          %s808 = int_to_ptr.vmem [resolvable:$true] %s807
          %810 = dma.hbm_to_vmem [thread:$0]  %s806, 32, %s808, %s796
        $region72: #{vanilla_transformer_forward.1} parent=23 // pred_fallthru
          _
        // Predicated region
        $region73: #{vanilla_transformer_forward.1} parent=23 // pred_check
          %p811 = pneg %p424
        $region74: #{vanilla_transformer_forward.1} parent=23 // pred_check_branch
          %813 = sbr.rel (%p811) target = $region76
        $region75: #{vanilla_transformer_forward.1} parent=23 // pred_region
          %s814 = sand.u32 %s50, 1
          %s815 = scalar_lea.sflag [#allocation25], %s814
          %s816 = sand.u32 %s414, 1
          %s817 = smul.addr %s816, 2
          %s818 = scalar_lea.vmem [#allocation24], %s817
          %820 = vsyncadd %s815, 0
          %s821 = smul.addr %s50, 2
          %s822 = scalar_lea.hbm %s14, %s821
          %s824 = sshll.u32 %s822, 4
          %s825 = int_to_ptr.hbm [resolvable:$true] %s824
          %s826 = sshll.u32 %s818, 4
          %s827 = int_to_ptr.vmem [resolvable:$true] %s826
          %829 = dma.hbm_to_vmem [thread:$0]  %s825, 32, %s827, %s815
        $region76: #{vanilla_transformer_forward.1} parent=23 // pred_fallthru
          _
        // Predicated region
        $region77: #{vanilla_transformer_forward.1} parent=23 // pred_check
          %p830 = pneg %p450
        $region78: #{vanilla_transformer_forward.1} parent=23 // pred_check_branch
          %832 = sbr.rel (%p830) target = $region80
        $region79: #{vanilla_transformer_forward.1} parent=23 // pred_region
          %s833 = sand.u32 %s50, 1
          %s834 = scalar_lea.sflag [#allocation25], %s833
          %s835 = sand.u32 %s440, 1
          %s836 = smul.addr %s835, 2
          %s837 = scalar_lea.vmem [#allocation26], %s836
          %839 = vsyncadd %s834, 0
          %s840 = smul.addr %s50, 2
          %s841 = scalar_lea.hbm %s15, %s840
          %s843 = sshll.u32 %s841, 4
          %s844 = int_to_ptr.hbm [resolvable:$true] %s843
          %s845 = sshll.u32 %s837, 4
          %s846 = int_to_ptr.vmem [resolvable:$true] %s845
          %848 = dma.hbm_to_vmem [thread:$0]  %s844, 32, %s846, %s834
        $region80: #{vanilla_transformer_forward.1} parent=23 // pred_fallthru
          _
        // Predicated region
        $region81: #{vanilla_transformer_forward.1} parent=23 // pred_check
          %p849 = pneg %p476
        $region82: #{vanilla_transformer_forward.1} parent=23 // pred_check_branch
          %851 = sbr.rel (%p849) target = $region84
        $region83: #{vanilla_transformer_forward.1} parent=23 // pred_region
          %s852 = sand.u32 %s50, 1
          %s853 = scalar_lea.sflag [#allocation28], %s852
          %s854 = sand.u32 %s466, 1
          %s855 = smul.addr %s854, 2
          %s856 = scalar_lea.vmem [#allocation27], %s855
          %858 = vsyncadd %s853, 0
          %s859 = smul.addr %s50, 2
          %s860 = scalar_lea.hbm %s16, %s859
          %s862 = sshll.u32 %s860, 4
          %s863 = int_to_ptr.hbm [resolvable:$true] %s862
          %s864 = sshll.u32 %s856, 4
          %s865 = int_to_ptr.vmem [resolvable:$true] %s864
          %867 = dma.hbm_to_vmem [thread:$0]  %s863, 32, %s865, %s853
        $region84: #{vanilla_transformer_forward.1} parent=23 // pred_fallthru
          _
        // Predicated region
        $region85: #{vanilla_transformer_forward.1} parent=23 // pred_check
          %p868 = pneg %p502
        $region86: #{vanilla_transformer_forward.1} parent=23 // pred_check_branch
          %870 = sbr.rel (%p868) target = $region88
        $region87: #{vanilla_transformer_forward.1} parent=23 // pred_region
          %s871 = sand.u32 %s50, 1
          %s872 = scalar_lea.sflag [#allocation28], %s871
          %s873 = sand.u32 %s492, 1
          %s874 = smul.addr %s873, 2
          %s875 = scalar_lea.vmem [#allocation29], %s874
          %877 = vsyncadd %s872, 0
          %s878 = smul.addr %s50, 2
          %s879 = scalar_lea.hbm %s17, %s878
          %s881 = sshll.u32 %s879, 4
          %s882 = int_to_ptr.hbm [resolvable:$true] %s881
          %s883 = sshll.u32 %s875, 4
          %s884 = int_to_ptr.vmem [resolvable:$true] %s883
          %886 = dma.hbm_to_vmem [thread:$0]  %s882, 32, %s884, %s872
        $region88: #{vanilla_transformer_forward.1} parent=23 // pred_fallthru
          _
      $region24: #{vanilla_transformer_forward.1} parent=5 // pred_fallthru
        _
      %p887 = scmp.le.s32.totalorder 1, %s50
      %p888 = scmp.lt.s32.totalorder %s50, 3
      %p889 = pnand %p887, %p888
      %p890 = pneg %p889
      // Predicated region
      $region89: #{vanilla_transformer_forward.1} parent=5 // pred_check
        _
      $region90: #{vanilla_transformer_forward.1} parent=5 // pred_check_branch
        %892 = sbr.rel (%p889) target = $region92
      $region91: #{vanilla_transformer_forward.1} parent=5 // pred_region
        %s893 = ssub.s32 %s50, 1
        // Predicated region
        $region93: #{vanilla_transformer_forward.1} parent=91 // pred_check
          %p894 = pneg %p71
        $region94: #{vanilla_transformer_forward.1} parent=91 // pred_check_branch
          %896 = sbr.rel (%p894) target = $region96
        $region95: #{vanilla_transformer_forward.1} parent=91 // pred_region
          %898 = dma.done [#allocation4], 512
        $region96: #{vanilla_transformer_forward.1} parent=91 // pred_fallthru
          _
        %s899 = sand.u32 %s55, 1
        %s900 = scalar_lea.sflag [#allocation7], %s899
        %s901 = sand.u32 %s105, 1
        %s902 = smul.addr %s901, 256
        %s903 = scalar_lea.vmem [#allocation6], %s902
        // Predicated region
        $region97: #{vanilla_transformer_forward.1} parent=91 // pred_check
          %p904 = pneg %p118
        $region98: #{vanilla_transformer_forward.1} parent=91 // pred_check_branch
          %906 = sbr.rel (%p904) target = $region100
        $region99: #{vanilla_transformer_forward.1} parent=91 // pred_region
          %908 = dma.done %s900, 4096
        $region100: #{vanilla_transformer_forward.1} parent=91 // pred_fallthru
          _
        %s909 = sand.u32 %s55, 1
        %s910 = scalar_lea.sflag [#allocation7], %s909
        %s911 = sand.u32 %s131, 1
        %s912 = smul.addr %s911, 256
        %s913 = scalar_lea.vmem [#allocation8], %s912
        // Predicated region
        $region101: #{vanilla_transformer_forward.1} parent=91 // pred_check
          %p914 = pneg %p144
        $region102: #{vanilla_transformer_forward.1} parent=91 // pred_check_branch
          %916 = sbr.rel (%p914) target = $region104
        $region103: #{vanilla_transformer_forward.1} parent=91 // pred_region
          %918 = dma.done %s910, 4096
        $region104: #{vanilla_transformer_forward.1} parent=91 // pred_fallthru
          _
        %s919 = sand.u32 %s55, 1
        %s920 = scalar_lea.sflag [#allocation10], %s919
        %s921 = sand.u32 %s157, 1
        %s922 = smul.addr %s921, 256
        %s923 = scalar_lea.vmem [#allocation9], %s922
        // Predicated region
        $region105: #{vanilla_transformer_forward.1} parent=91 // pred_check
          %p924 = pneg %p170
        $region106: #{vanilla_transformer_forward.1} parent=91 // pred_check_branch
          %926 = sbr.rel (%p924) target = $region108
        $region107: #{vanilla_transformer_forward.1} parent=91 // pred_region
          %928 = dma.done %s920, 4096
        $region108: #{vanilla_transformer_forward.1} parent=91 // pred_fallthru
          _
        %s929 = sand.u32 %s55, 1
        %s930 = scalar_lea.sflag [#allocation10], %s929
        %s931 = sand.u32 %s183, 1
        %s932 = smul.addr %s931, 256
        %s933 = scalar_lea.vmem [#allocation11], %s932
        // Predicated region
        $region109: #{vanilla_transformer_forward.1} parent=91 // pred_check
          %p934 = pneg %p196
        $region110: #{vanilla_transformer_forward.1} parent=91 // pred_check_branch
          %936 = sbr.rel (%p934) target = $region112
        $region111: #{vanilla_transformer_forward.1} parent=91 // pred_region
          %938 = dma.done %s930, 4096
        $region112: #{vanilla_transformer_forward.1} parent=91 // pred_fallthru
          _
        %s939 = sand.u32 %s55, 1
        %s940 = scalar_lea.sflag [#allocation13], %s939
        %s941 = sand.u32 %s209, 1
        %s942 = smul.addr %s941, 2
        %s943 = scalar_lea.vmem [#allocation12], %s942
        // Predicated region
        $region113: #{vanilla_transformer_forward.1} parent=91 // pred_check
          %p944 = pneg %p222
        $region114: #{vanilla_transformer_forward.1} parent=91 // pred_check_branch
          %946 = sbr.rel (%p944) target = $region116
        $region115: #{vanilla_transformer_forward.1} parent=91 // pred_region
          %948 = dma.done %s940, 32
        $region116: #{vanilla_transformer_forward.1} parent=91 // pred_fallthru
          _
        %s949 = sand.u32 %s55, 1
        %s950 = scalar_lea.sflag [#allocation13], %s949
        %s951 = sand.u32 %s235, 1
        %s952 = smul.addr %s951, 2
        %s953 = scalar_lea.vmem [#allocation14], %s952
        // Predicated region
        $region117: #{vanilla_transformer_forward.1} parent=91 // pred_check
          %p954 = pneg %p248
        $region118: #{vanilla_transformer_forward.1} parent=91 // pred_check_branch
          %956 = sbr.rel (%p954) target = $region120
        $region119: #{vanilla_transformer_forward.1} parent=91 // pred_region
          %958 = dma.done %s950, 32
        $region120: #{vanilla_transformer_forward.1} parent=91 // pred_fallthru
          _
        %s959 = sand.u32 %s55, 1
        %s960 = scalar_lea.sflag [#allocation16], %s959
        %s961 = sand.u32 %s261, 1
        %s962 = smul.addr %s961, 2
        %s963 = scalar_lea.vmem [#allocation15], %s962
        // Predicated region
        $region121: #{vanilla_transformer_forward.1} parent=91 // pred_check
          %p964 = pneg %p274
        $region122: #{vanilla_transformer_forward.1} parent=91 // pred_check_branch
          %966 = sbr.rel (%p964) target = $region124
        $region123: #{vanilla_transformer_forward.1} parent=91 // pred_region
          %968 = dma.done %s960, 32
        $region124: #{vanilla_transformer_forward.1} parent=91 // pred_fallthru
          _
        %s969 = sand.u32 %s55, 1
        %s970 = scalar_lea.sflag [#allocation16], %s969
        %s971 = sand.u32 %s287, 1
        %s972 = smul.addr %s971, 2
        %s973 = scalar_lea.vmem [#allocation17], %s972
        // Predicated region
        $region125: #{vanilla_transformer_forward.1} parent=91 // pred_check
          %p974 = pneg %p300
        $region126: #{vanilla_transformer_forward.1} parent=91 // pred_check_branch
          %976 = sbr.rel (%p974) target = $region128
        $region127: #{vanilla_transformer_forward.1} parent=91 // pred_region
          %978 = dma.done %s970, 32
        $region128: #{vanilla_transformer_forward.1} parent=91 // pred_fallthru
          _
        %s979 = sand.u32 %s55, 1
        %s980 = scalar_lea.sflag [#allocation19], %s979
        %s981 = sand.u32 %s313, 1
        %s982 = smul.addr %s981, 2048
        %s983 = scalar_lea.vmem [#allocation18], %s982
        // Predicated region
        $region129: #{vanilla_transformer_forward.1} parent=91 // pred_check
          %p984 = pneg %p326
        $region130: #{vanilla_transformer_forward.1} parent=91 // pred_check_branch
          %986 = sbr.rel (%p984) target = $region132
        $region131: #{vanilla_transformer_forward.1} parent=91 // pred_region
          %988 = dma.done %s980, 32768
        $region132: #{vanilla_transformer_forward.1} parent=91 // pred_fallthru
          _
        %s989 = sand.u32 %s55, 1
        %s990 = scalar_lea.sflag [#allocation19], %s989
        %s991 = sand.u32 %s339, 1
        %s992 = smul.addr %s991, 16
        %s993 = scalar_lea.vmem [#allocation20], %s992
        // Predicated region
        $region133: #{vanilla_transformer_forward.1} parent=91 // pred_check
          %p994 = pneg %p352
        $region134: #{vanilla_transformer_forward.1} parent=91 // pred_check_branch
          %996 = sbr.rel (%p994) target = $region136
        $region135: #{vanilla_transformer_forward.1} parent=91 // pred_region
          %998 = dma.done %s990, 256
        $region136: #{vanilla_transformer_forward.1} parent=91 // pred_fallthru
          _
        %s999 = sand.u32 %s55, 1
        %s1000 = scalar_lea.sflag [#allocation22], %s999
        %s1001 = sand.u32 %s365, 1
        %s1002 = smul.addr %s1001, 2048
        %s1003 = scalar_lea.vmem [#allocation21], %s1002
        // Predicated region
        $region137: #{vanilla_transformer_forward.1} parent=91 // pred_check
          %p1004 = pneg %p378
        $region138: #{vanilla_transformer_forward.1} parent=91 // pred_check_branch
          %1006 = sbr.rel (%p1004) target = $region140
        $region139: #{vanilla_transformer_forward.1} parent=91 // pred_region
          %1008 = dma.done %s1000, 32768
        $region140: #{vanilla_transformer_forward.1} parent=91 // pred_fallthru
          _
        %s1009 = sand.u32 %s55, 1
        %s1010 = scalar_lea.sflag [#allocation22], %s1009
        %s1011 = sand.u32 %s391, 1
        %s1012 = smul.addr %s1011, 2
        %s1013 = scalar_lea.vmem [#allocation23], %s1012
        // Predicated region
        $region141: #{vanilla_transformer_forward.1} parent=91 // pred_check
          %p1014 = pneg %p404
        $region142: #{vanilla_transformer_forward.1} parent=91 // pred_check_branch
          %1016 = sbr.rel (%p1014) target = $region144
        $region143: #{vanilla_transformer_forward.1} parent=91 // pred_region
          %1018 = dma.done %s1010, 32
        $region144: #{vanilla_transformer_forward.1} parent=91 // pred_fallthru
          _
        %s1019 = sand.u32 %s55, 1
        %s1020 = scalar_lea.sflag [#allocation25], %s1019
        %s1021 = sand.u32 %s417, 1
        %s1022 = smul.addr %s1021, 2
        %s1023 = scalar_lea.vmem [#allocation24], %s1022
        // Predicated region
        $region145: #{vanilla_transformer_forward.1} parent=91 // pred_check
          %p1024 = pneg %p430
        $region146: #{vanilla_transformer_forward.1} parent=91 // pred_check_branch
          %1026 = sbr.rel (%p1024) target = $region148
        $region147: #{vanilla_transformer_forward.1} parent=91 // pred_region
          %1028 = dma.done %s1020, 32
        $region148: #{vanilla_transformer_forward.1} parent=91 // pred_fallthru
          _
        %s1029 = sand.u32 %s55, 1
        %s1030 = scalar_lea.sflag [#allocation25], %s1029
        %s1031 = sand.u32 %s443, 1
        %s1032 = smul.addr %s1031, 2
        %s1033 = scalar_lea.vmem [#allocation26], %s1032
        // Predicated region
        $region149: #{vanilla_transformer_forward.1} parent=91 // pred_check
          %p1034 = pneg %p456
        $region150: #{vanilla_transformer_forward.1} parent=91 // pred_check_branch
          %1036 = sbr.rel (%p1034) target = $region152
        $region151: #{vanilla_transformer_forward.1} parent=91 // pred_region
          %1038 = dma.done %s1030, 32
        $region152: #{vanilla_transformer_forward.1} parent=91 // pred_fallthru
          _
        %s1039 = sand.u32 %s55, 1
        %s1040 = scalar_lea.sflag [#allocation28], %s1039
        %s1041 = sand.u32 %s469, 1
        %s1042 = smul.addr %s1041, 2
        %s1043 = scalar_lea.vmem [#allocation27], %s1042
        // Predicated region
        $region153: #{vanilla_transformer_forward.1} parent=91 // pred_check
          %p1044 = pneg %p482
        $region154: #{vanilla_transformer_forward.1} parent=91 // pred_check_branch
          %1046 = sbr.rel (%p1044) target = $region156
        $region155: #{vanilla_transformer_forward.1} parent=91 // pred_region
          %1048 = dma.done %s1040, 32
        $region156: #{vanilla_transformer_forward.1} parent=91 // pred_fallthru
          _
        %s1049 = sand.u32 %s55, 1
        %s1050 = scalar_lea.sflag [#allocation28], %s1049
        %s1051 = sand.u32 %s495, 1
        %s1052 = smul.addr %s1051, 2
        %s1053 = scalar_lea.vmem [#allocation29], %s1052
        // Predicated region
        $region157: #{vanilla_transformer_forward.1} parent=91 // pred_check
          %p1054 = pneg %p508
        $region158: #{vanilla_transformer_forward.1} parent=91 // pred_check_branch
          %1056 = sbr.rel (%p1054) target = $region160
        $region159: #{vanilla_transformer_forward.1} parent=91 // pred_region
          %1058 = dma.done %s1050, 32
        $region160: #{vanilla_transformer_forward.1} parent=91 // pred_fallthru
          _
        %p1059 = pneg %p71
        %p1060 = pneg %p68
        %p1061 = pneg %p92
        %p1062 = pneg %p89
        %s1063 = sand.u32 %s55, 1
        %s1064 = scalar_lea.sflag [#allocation7], %s1063
        %s1065 = sand.u32 %s105, 1
        %s1066 = smul.addr %s1065, 256
        %s1067 = scalar_lea.vmem [#allocation6], %s1066
        %p1068 = pneg %p118
        %p1069 = pneg %p115
        %s1070 = sand.u32 %s55, 1
        %s1071 = scalar_lea.sflag [#allocation7], %s1070
        %s1072 = sand.u32 %s131, 1
        %s1073 = smul.addr %s1072, 256
        %s1074 = scalar_lea.vmem [#allocation8], %s1073
        %p1075 = pneg %p144
        %p1076 = pneg %p141
        %s1077 = sand.u32 %s55, 1
        %s1078 = scalar_lea.sflag [#allocation10], %s1077
        %s1079 = sand.u32 %s157, 1
        %s1080 = smul.addr %s1079, 256
        %s1081 = scalar_lea.vmem [#allocation9], %s1080
        %p1082 = pneg %p170
        %p1083 = pneg %p167
        %s1084 = sand.u32 %s55, 1
        %s1085 = scalar_lea.sflag [#allocation10], %s1084
        %s1086 = sand.u32 %s183, 1
        %s1087 = smul.addr %s1086, 256
        %s1088 = scalar_lea.vmem [#allocation11], %s1087
        %p1089 = pneg %p196
        %p1090 = pneg %p193
        %s1091 = sand.u32 %s55, 1
        %s1092 = scalar_lea.sflag [#allocation13], %s1091
        %s1093 = sand.u32 %s209, 1
        %s1094 = smul.addr %s1093, 2
        %s1095 = scalar_lea.vmem [#allocation12], %s1094
        %p1096 = pneg %p222
        %p1097 = pneg %p219
        %s1098 = sand.u32 %s55, 1
        %s1099 = scalar_lea.sflag [#allocation13], %s1098
        %s1100 = sand.u32 %s235, 1
        %s1101 = smul.addr %s1100, 2
        %s1102 = scalar_lea.vmem [#allocation14], %s1101
        %p1103 = pneg %p248
        %p1104 = pneg %p245
        %s1105 = sand.u32 %s55, 1
        %s1106 = scalar_lea.sflag [#allocation16], %s1105
        %s1107 = sand.u32 %s261, 1
        %s1108 = smul.addr %s1107, 2
        %s1109 = scalar_lea.vmem [#allocation15], %s1108
        %p1110 = pneg %p274
        %p1111 = pneg %p271
        %s1112 = sand.u32 %s55, 1
        %s1113 = scalar_lea.sflag [#allocation16], %s1112
        %s1114 = sand.u32 %s287, 1
        %s1115 = smul.addr %s1114, 2
        %s1116 = scalar_lea.vmem [#allocation17], %s1115
        %p1117 = pneg %p300
        %p1118 = pneg %p297
        %s1119 = sand.u32 %s55, 1
        %s1120 = scalar_lea.sflag [#allocation19], %s1119
        %s1121 = sand.u32 %s313, 1
        %s1122 = smul.addr %s1121, 2048
        %s1123 = scalar_lea.vmem [#allocation18], %s1122
        %p1124 = pneg %p326
        %p1125 = pneg %p323
        %s1126 = sand.u32 %s55, 1
        %s1127 = scalar_lea.sflag [#allocation19], %s1126
        %s1128 = sand.u32 %s339, 1
        %s1129 = smul.addr %s1128, 16
        %s1130 = scalar_lea.vmem [#allocation20], %s1129
        %p1131 = pneg %p352
        %p1132 = pneg %p349
        %s1133 = sand.u32 %s55, 1
        %s1134 = scalar_lea.sflag [#allocation22], %s1133
        %s1135 = sand.u32 %s365, 1
        %s1136 = smul.addr %s1135, 2048
        %s1137 = scalar_lea.vmem [#allocation21], %s1136
        %p1138 = pneg %p378
        %p1139 = pneg %p375
        %s1140 = sand.u32 %s55, 1
        %s1141 = scalar_lea.sflag [#allocation22], %s1140
        %s1142 = sand.u32 %s391, 1
        %s1143 = smul.addr %s1142, 2
        %s1144 = scalar_lea.vmem [#allocation23], %s1143
        %p1145 = pneg %p404
        %p1146 = pneg %p401
        %s1147 = sand.u32 %s55, 1
        %s1148 = scalar_lea.sflag [#allocation25], %s1147
        %s1149 = sand.u32 %s417, 1
        %s1150 = smul.addr %s1149, 2
        %s1151 = scalar_lea.vmem [#allocation24], %s1150
        %p1152 = pneg %p430
        %p1153 = pneg %p427
        %s1154 = sand.u32 %s55, 1
        %s1155 = scalar_lea.sflag [#allocation25], %s1154
        %s1156 = sand.u32 %s443, 1
        %s1157 = smul.addr %s1156, 2
        %s1158 = scalar_lea.vmem [#allocation26], %s1157
        %p1159 = pneg %p456
        %p1160 = pneg %p453
        %s1161 = sand.u32 %s55, 1
        %s1162 = scalar_lea.sflag [#allocation28], %s1161
        %s1163 = sand.u32 %s469, 1
        %s1164 = smul.addr %s1163, 2
        %s1165 = scalar_lea.vmem [#allocation27], %s1164
        %p1166 = pneg %p482
        %p1167 = pneg %p479
        %s1168 = sand.u32 %s55, 1
        %s1169 = scalar_lea.sflag [#allocation28], %s1168
        %s1170 = sand.u32 %s495, 1
        %s1171 = smul.addr %s1170, 2
        %s1172 = scalar_lea.vmem [#allocation29], %s1171
        %p1173 = pneg %p508
        %p1174 = pneg %p505
        %p1175 = pneg %p529
        %p1176 = pneg %p526
        %p1177 = scmp.eq.s32.totalorder %s55, 0
        // Predicated region
        $region161: #{vanilla_transformer_forward.1} parent=91 // pred_check
          %p1178 = pneg %p1177
        $region162: #{vanilla_transformer_forward.1} parent=91 // pred_check_branch
          %1180 = sbr.rel (%p1178) target = $region164
        $region163: #{vanilla_transformer_forward.1} parent=91 // pred_region
          %v1181 = vld [vmem:[#allocation3] sm:$0xff]
          %v1182 = vld [vmem:[#allocation3 + $0x8] sm:$0xff]
          %v1183 = vld [vmem:[#allocation3 + $0x10] sm:$0xff]
          %v1184 = vld [vmem:[#allocation3 + $0x18] sm:$0xff]
          %1185 = vst [vmem:[#allocation2] sm:$0xff] %v1181
          %1186 = vst [vmem:[#allocation2 + $0x8] sm:$0xff] %v1182
          %1187 = vst [vmem:[#allocation2 + $0x10] sm:$0xff] %v1183
          %1188 = vst [vmem:[#allocation2 + $0x18] sm:$0xff] %v1184
        $region164: #{vanilla_transformer_forward.1} parent=91 // pred_fallthru
          _
        %v1189 = vld [vmem:[#allocation2] sm:$0xff]
        %v1190 = vld [vmem:[#allocation2 + $0x8] sm:$0xff]
        %v1191 = vld [vmem:[#allocation2 + $0x10] sm:$0xff]
        %v1192 = vld [vmem:[#allocation2 + $0x18] sm:$0xff]
        %v1193 = vld [vmem:[%s1] sm:$0x1]
        %v1194 = vld [vmem:[%s1 + $0x1] sm:$0x1]
        %v1195 = vld [vmem:[%s903] sm:$0xff]
        %v1196 = vld [vmem:[%s903 + $0x8] sm:$0xff]
        %v1197 = vld [vmem:[%s903 + $0x10] sm:$0xff]
        %v1198 = vld [vmem:[%s903 + $0x18] sm:$0xff]
        %v1199 = vld [vmem:[%s903 + $0x20] sm:$0xff]
        %v1200 = vld [vmem:[%s903 + $0x28] sm:$0xff]
        %v1201 = vld [vmem:[%s903 + $0x30] sm:$0xff]
        %v1202 = vld [vmem:[%s903 + $0x38] sm:$0xff]
        %v1203 = vld [vmem:[%s903 + $0x40] sm:$0xff]
        %v1204 = vld [vmem:[%s903 + $0x48] sm:$0xff]
        %v1205 = vld [vmem:[%s903 + $0x50] sm:$0xff]
        %v1206 = vld [vmem:[%s903 + $0x58] sm:$0xff]
        %v1207 = vld [vmem:[%s903 + $0x60] sm:$0xff]
        %v1208 = vld [vmem:[%s903 + $0x68] sm:$0xff]
        %v1209 = vld [vmem:[%s903 + $0x70] sm:$0xff]
        %v1210 = vld [vmem:[%s903 + $0x78] sm:$0xff]
        %v1211 = vld [vmem:[%s903 + $0x80] sm:$0xff]
        %v1212 = vld [vmem:[%s903 + $0x88] sm:$0xff]
        %v1213 = vld [vmem:[%s903 + $0x90] sm:$0xff]
        %v1214 = vld [vmem:[%s903 + $0x98] sm:$0xff]
        %v1215 = vld [vmem:[%s903 + $0xa0] sm:$0xff]
        %v1216 = vld [vmem:[%s903 + $0xa8] sm:$0xff]
        %v1217 = vld [vmem:[%s903 + $0xb0] sm:$0xff]
        %v1218 = vld [vmem:[%s903 + $0xb8] sm:$0xff]
        %v1219 = vld [vmem:[%s903 + $0xc0] sm:$0xff]
        %v1220 = vld [vmem:[%s903 + $0xc8] sm:$0xff]
        %v1221 = vld [vmem:[%s903 + $0xd0] sm:$0xff]
        %v1222 = vld [vmem:[%s903 + $0xd8] sm:$0xff]
        %v1223 = vld [vmem:[%s903 + $0xe0] sm:$0xff]
        %v1224 = vld [vmem:[%s903 + $0xe8] sm:$0xff]
        %v1225 = vld [vmem:[%s903 + $0xf0] sm:$0xff]
        %v1226 = vld [vmem:[%s903 + $0xf8] sm:$0xff]
        %v1227 = vld [vmem:[%s913] sm:$0xff]
        %v1228 = vld [vmem:[%s913 + $0x8] sm:$0xff]
        %v1229 = vld [vmem:[%s913 + $0x10] sm:$0xff]
        %v1230 = vld [vmem:[%s913 + $0x18] sm:$0xff]
        %v1231 = vld [vmem:[%s913 + $0x20] sm:$0xff]
        %v1232 = vld [vmem:[%s913 + $0x28] sm:$0xff]
        %v1233 = vld [vmem:[%s913 + $0x30] sm:$0xff]
        %v1234 = vld [vmem:[%s913 + $0x38] sm:$0xff]
        %v1235 = vld [vmem:[%s913 + $0x40] sm:$0xff]
        %v1236 = vld [vmem:[%s913 + $0x48] sm:$0xff]
        %v1237 = vld [vmem:[%s913 + $0x50] sm:$0xff]
        %v1238 = vld [vmem:[%s913 + $0x58] sm:$0xff]
        %v1239 = vld [vmem:[%s913 + $0x60] sm:$0xff]
        %v1240 = vld [vmem:[%s913 + $0x68] sm:$0xff]
        %v1241 = vld [vmem:[%s913 + $0x70] sm:$0xff]
        %v1242 = vld [vmem:[%s913 + $0x78] sm:$0xff]
        %v1243 = vld [vmem:[%s913 + $0x80] sm:$0xff]
        %v1244 = vld [vmem:[%s913 + $0x88] sm:$0xff]
        %v1245 = vld [vmem:[%s913 + $0x90] sm:$0xff]
        %v1246 = vld [vmem:[%s913 + $0x98] sm:$0xff]
        %v1247 = vld [vmem:[%s913 + $0xa0] sm:$0xff]
        %v1248 = vld [vmem:[%s913 + $0xa8] sm:$0xff]
        %v1249 = vld [vmem:[%s913 + $0xb0] sm:$0xff]
        %v1250 = vld [vmem:[%s913 + $0xb8] sm:$0xff]
        %v1251 = vld [vmem:[%s913 + $0xc0] sm:$0xff]
        %v1252 = vld [vmem:[%s913 + $0xc8] sm:$0xff]
        %v1253 = vld [vmem:[%s913 + $0xd0] sm:$0xff]
        %v1254 = vld [vmem:[%s913 + $0xd8] sm:$0xff]
        %v1255 = vld [vmem:[%s913 + $0xe0] sm:$0xff]
        %v1256 = vld [vmem:[%s913 + $0xe8] sm:$0xff]
        %v1257 = vld [vmem:[%s913 + $0xf0] sm:$0xff]
        %v1258 = vld [vmem:[%s913 + $0xf8] sm:$0xff]
        %v1259 = vld [vmem:[%s923] sm:$0xff]
        %v1260 = vld [vmem:[%s923 + $0x8] sm:$0xff]
        %v1261 = vld [vmem:[%s923 + $0x10] sm:$0xff]
        %v1262 = vld [vmem:[%s923 + $0x18] sm:$0xff]
        %v1263 = vld [vmem:[%s923 + $0x20] sm:$0xff]
        %v1264 = vld [vmem:[%s923 + $0x28] sm:$0xff]
        %v1265 = vld [vmem:[%s923 + $0x30] sm:$0xff]
        %v1266 = vld [vmem:[%s923 + $0x38] sm:$0xff]
        %v1267 = vld [vmem:[%s923 + $0x40] sm:$0xff]
        %v1268 = vld [vmem:[%s923 + $0x48] sm:$0xff]
        %v1269 = vld [vmem:[%s923 + $0x50] sm:$0xff]
        %v1270 = vld [vmem:[%s923 + $0x58] sm:$0xff]
        %v1271 = vld [vmem:[%s923 + $0x60] sm:$0xff]
        %v1272 = vld [vmem:[%s923 + $0x68] sm:$0xff]
        %v1273 = vld [vmem:[%s923 + $0x70] sm:$0xff]
        %v1274 = vld [vmem:[%s923 + $0x78] sm:$0xff]
        %v1275 = vld [vmem:[%s923 + $0x80] sm:$0xff]
        %v1276 = vld [vmem:[%s923 + $0x88] sm:$0xff]
        %v1277 = vld [vmem:[%s923 + $0x90] sm:$0xff]
        %v1278 = vld [vmem:[%s923 + $0x98] sm:$0xff]
        %v1279 = vld [vmem:[%s923 + $0xa0] sm:$0xff]
        %v1280 = vld [vmem:[%s923 + $0xa8] sm:$0xff]
        %v1281 = vld [vmem:[%s923 + $0xb0] sm:$0xff]
        %v1282 = vld [vmem:[%s923 + $0xb8] sm:$0xff]
        %v1283 = vld [vmem:[%s923 + $0xc0] sm:$0xff]
        %v1284 = vld [vmem:[%s923 + $0xc8] sm:$0xff]
        %v1285 = vld [vmem:[%s923 + $0xd0] sm:$0xff]
        %v1286 = vld [vmem:[%s923 + $0xd8] sm:$0xff]
        %v1287 = vld [vmem:[%s923 + $0xe0] sm:$0xff]
        %v1288 = vld [vmem:[%s923 + $0xe8] sm:$0xff]
        %v1289 = vld [vmem:[%s923 + $0xf0] sm:$0xff]
        %v1290 = vld [vmem:[%s923 + $0xf8] sm:$0xff]
        %v1291 = vld [vmem:[%s933] sm:$0xff]
        %v1292 = vld [vmem:[%s933 + $0x8] sm:$0xff]
        %v1293 = vld [vmem:[%s933 + $0x10] sm:$0xff]
        %v1294 = vld [vmem:[%s933 + $0x18] sm:$0xff]
        %v1295 = vld [vmem:[%s933 + $0x20] sm:$0xff]
        %v1296 = vld [vmem:[%s933 + $0x28] sm:$0xff]
        %v1297 = vld [vmem:[%s933 + $0x30] sm:$0xff]
        %v1298 = vld [vmem:[%s933 + $0x38] sm:$0xff]
        %v1299 = vld [vmem:[%s933 + $0x40] sm:$0xff]
        %v1300 = vld [vmem:[%s933 + $0x48] sm:$0xff]
        %v1301 = vld [vmem:[%s933 + $0x50] sm:$0xff]
        %v1302 = vld [vmem:[%s933 + $0x58] sm:$0xff]
        %v1303 = vld [vmem:[%s933 + $0x60] sm:$0xff]
        %v1304 = vld [vmem:[%s933 + $0x68] sm:$0xff]
        %v1305 = vld [vmem:[%s933 + $0x70] sm:$0xff]
        %v1306 = vld [vmem:[%s933 + $0x78] sm:$0xff]
        %v1307 = vld [vmem:[%s933 + $0x80] sm:$0xff]
        %v1308 = vld [vmem:[%s933 + $0x88] sm:$0xff]
        %v1309 = vld [vmem:[%s933 + $0x90] sm:$0xff]
        %v1310 = vld [vmem:[%s933 + $0x98] sm:$0xff]
        %v1311 = vld [vmem:[%s933 + $0xa0] sm:$0xff]
        %v1312 = vld [vmem:[%s933 + $0xa8] sm:$0xff]
        %v1313 = vld [vmem:[%s933 + $0xb0] sm:$0xff]
        %v1314 = vld [vmem:[%s933 + $0xb8] sm:$0xff]
        %v1315 = vld [vmem:[%s933 + $0xc0] sm:$0xff]
        %v1316 = vld [vmem:[%s933 + $0xc8] sm:$0xff]
        %v1317 = vld [vmem:[%s933 + $0xd0] sm:$0xff]
        %v1318 = vld [vmem:[%s933 + $0xd8] sm:$0xff]
        %v1319 = vld [vmem:[%s933 + $0xe0] sm:$0xff]
        %v1320 = vld [vmem:[%s933 + $0xe8] sm:$0xff]
        %v1321 = vld [vmem:[%s933 + $0xf0] sm:$0xff]
        %v1322 = vld [vmem:[%s933 + $0xf8] sm:$0xff]
        %v1323 = vld [vmem:[%s983] sm:$0xff]
        %v1324 = vld [vmem:[%s983 + $0x8] sm:$0xff]
        %v1325 = vld [vmem:[%s983 + $0x10] sm:$0xff]
        %v1326 = vld [vmem:[%s983 + $0x18] sm:$0xff]
        %v1327 = vld [vmem:[%s983 + $0x20] sm:$0xff]
        %v1328 = vld [vmem:[%s983 + $0x28] sm:$0xff]
        %v1329 = vld [vmem:[%s983 + $0x30] sm:$0xff]
        %v1330 = vld [vmem:[%s983 + $0x38] sm:$0xff]
        %v1331 = vld [vmem:[%s983 + $0x40] sm:$0xff]
        %v1332 = vld [vmem:[%s983 + $0x48] sm:$0xff]
        %v1333 = vld [vmem:[%s983 + $0x50] sm:$0xff]
        %v1334 = vld [vmem:[%s983 + $0x58] sm:$0xff]
        %v1335 = vld [vmem:[%s983 + $0x60] sm:$0xff]
        %v1336 = vld [vmem:[%s983 + $0x68] sm:$0xff]
        %v1337 = vld [vmem:[%s983 + $0x70] sm:$0xff]
        %v1338 = vld [vmem:[%s983 + $0x78] sm:$0xff]
        %v1339 = vld [vmem:[%s983 + $0x80] sm:$0xff]
        %v1340 = vld [vmem:[%s983 + $0x88] sm:$0xff]
        %v1341 = vld [vmem:[%s983 + $0x90] sm:$0xff]
        %v1342 = vld [vmem:[%s983 + $0x98] sm:$0xff]
        %v1343 = vld [vmem:[%s983 + $0xa0] sm:$0xff]
        %v1344 = vld [vmem:[%s983 + $0xa8] sm:$0xff]
        %v1345 = vld [vmem:[%s983 + $0xb0] sm:$0xff]
        %v1346 = vld [vmem:[%s983 + $0xb8] sm:$0xff]
        %v1347 = vld [vmem:[%s983 + $0xc0] sm:$0xff]
        %v1348 = vld [vmem:[%s983 + $0xc8] sm:$0xff]
        %v1349 = vld [vmem:[%s983 + $0xd0] sm:$0xff]
        %v1350 = vld [vmem:[%s983 + $0xd8] sm:$0xff]
        %v1351 = vld [vmem:[%s983 + $0xe0] sm:$0xff]
        %v1352 = vld [vmem:[%s983 + $0xe8] sm:$0xff]
        %v1353 = vld [vmem:[%s983 + $0xf0] sm:$0xff]
        %v1354 = vld [vmem:[%s983 + $0xf8] sm:$0xff]
        %v1355 = vld [vmem:[%s983 + $0x100] sm:$0xff]
        %v1356 = vld [vmem:[%s983 + $0x108] sm:$0xff]
        %v1357 = vld [vmem:[%s983 + $0x110] sm:$0xff]
        %v1358 = vld [vmem:[%s983 + $0x118] sm:$0xff]
        %v1359 = vld [vmem:[%s983 + $0x120] sm:$0xff]
        %v1360 = vld [vmem:[%s983 + $0x128] sm:$0xff]
        %v1361 = vld [vmem:[%s983 + $0x130] sm:$0xff]
        %v1362 = vld [vmem:[%s983 + $0x138] sm:$0xff]
        %v1363 = vld [vmem:[%s983 + $0x140] sm:$0xff]
        %v1364 = vld [vmem:[%s983 + $0x148] sm:$0xff]
        %v1365 = vld [vmem:[%s983 + $0x150] sm:$0xff]
        %v1366 = vld [vmem:[%s983 + $0x158] sm:$0xff]
        %v1367 = vld [vmem:[%s983 + $0x160] sm:$0xff]
        %v1368 = vld [vmem:[%s983 + $0x168] sm:$0xff]
        %v1369 = vld [vmem:[%s983 + $0x170] sm:$0xff]
        %v1370 = vld [vmem:[%s983 + $0x178] sm:$0xff]
        %v1371 = vld [vmem:[%s983 + $0x180] sm:$0xff]
        %v1372 = vld [vmem:[%s983 + $0x188] sm:$0xff]
        %v1373 = vld [vmem:[%s983 + $0x190] sm:$0xff]
        %v1374 = vld [vmem:[%s983 + $0x198] sm:$0xff]
        %v1375 = vld [vmem:[%s983 + $0x1a0] sm:$0xff]
        %v1376 = vld [vmem:[%s983 + $0x1a8] sm:$0xff]
        %v1377 = vld [vmem:[%s983 + $0x1b0] sm:$0xff]
        %v1378 = vld [vmem:[%s983 + $0x1b8] sm:$0xff]
        %v1379 = vld [vmem:[%s983 + $0x1c0] sm:$0xff]
        %v1380 = vld [vmem:[%s983 + $0x1c8] sm:$0xff]
        %v1381 = vld [vmem:[%s983 + $0x1d0] sm:$0xff]
        %v1382 = vld [vmem:[%s983 + $0x1d8] sm:$0xff]
        %v1383 = vld [vmem:[%s983 + $0x1e0] sm:$0xff]
        %v1384 = vld [vmem:[%s983 + $0x1e8] sm:$0xff]
        %v1385 = vld [vmem:[%s983 + $0x1f0] sm:$0xff]
        %v1386 = vld [vmem:[%s983 + $0x1f8] sm:$0xff]
        %v1387 = vld [vmem:[%s983 + $0x200] sm:$0xff]
        %v1388 = vld [vmem:[%s983 + $0x208] sm:$0xff]
        %v1389 = vld [vmem:[%s983 + $0x210] sm:$0xff]
        %v1390 = vld [vmem:[%s983 + $0x218] sm:$0xff]
        %v1391 = vld [vmem:[%s983 + $0x220] sm:$0xff]
        %v1392 = vld [vmem:[%s983 + $0x228] sm:$0xff]
        %v1393 = vld [vmem:[%s983 + $0x230] sm:$0xff]
        %v1394 = vld [vmem:[%s983 + $0x238] sm:$0xff]
        %v1395 = vld [vmem:[%s983 + $0x240] sm:$0xff]
        %v1396 = vld [vmem:[%s983 + $0x248] sm:$0xff]
        %v1397 = vld [vmem:[%s983 + $0x250] sm:$0xff]
        %v1398 = vld [vmem:[%s983 + $0x258] sm:$0xff]
        %v1399 = vld [vmem:[%s983 + $0x260] sm:$0xff]
        %v1400 = vld [vmem:[%s983 + $0x268] sm:$0xff]
        %v1401 = vld [vmem:[%s983 + $0x270] sm:$0xff]
        %v1402 = vld [vmem:[%s983 + $0x278] sm:$0xff]
        %v1403 = vld [vmem:[%s983 + $0x280] sm:$0xff]
        %v1404 = vld [vmem:[%s983 + $0x288] sm:$0xff]
        %v1405 = vld [vmem:[%s983 + $0x290] sm:$0xff]
        %v1406 = vld [vmem:[%s983 + $0x298] sm:$0xff]
        %v1407 = vld [vmem:[%s983 + $0x2a0] sm:$0xff]
        %v1408 = vld [vmem:[%s983 + $0x2a8] sm:$0xff]
        %v1409 = vld [vmem:[%s983 + $0x2b0] sm:$0xff]
        %v1410 = vld [vmem:[%s983 + $0x2b8] sm:$0xff]
        %v1411 = vld [vmem:[%s983 + $0x2c0] sm:$0xff]
        %v1412 = vld [vmem:[%s983 + $0x2c8] sm:$0xff]
        %v1413 = vld [vmem:[%s983 + $0x2d0] sm:$0xff]
        %v1414 = vld [vmem:[%s983 + $0x2d8] sm:$0xff]
        %v1415 = vld [vmem:[%s983 + $0x2e0] sm:$0xff]
        %v1416 = vld [vmem:[%s983 + $0x2e8] sm:$0xff]
        %v1417 = vld [vmem:[%s983 + $0x2f0] sm:$0xff]
        %v1418 = vld [vmem:[%s983 + $0x2f8] sm:$0xff]
        %v1419 = vld [vmem:[%s983 + $0x300] sm:$0xff]
        %v1420 = vld [vmem:[%s983 + $0x308] sm:$0xff]
        %v1421 = vld [vmem:[%s983 + $0x310] sm:$0xff]
        %v1422 = vld [vmem:[%s983 + $0x318] sm:$0xff]
        %v1423 = vld [vmem:[%s983 + $0x320] sm:$0xff]
        %v1424 = vld [vmem:[%s983 + $0x328] sm:$0xff]
        %v1425 = vld [vmem:[%s983 + $0x330] sm:$0xff]
        %v1426 = vld [vmem:[%s983 + $0x338] sm:$0xff]
        %v1427 = vld [vmem:[%s983 + $0x340] sm:$0xff]
        %v1428 = vld [vmem:[%s983 + $0x348] sm:$0xff]
        %v1429 = vld [vmem:[%s983 + $0x350] sm:$0xff]
        %v1430 = vld [vmem:[%s983 + $0x358] sm:$0xff]
        %v1431 = vld [vmem:[%s983 + $0x360] sm:$0xff]
        %v1432 = vld [vmem:[%s983 + $0x368] sm:$0xff]
        %v1433 = vld [vmem:[%s983 + $0x370] sm:$0xff]
        %v1434 = vld [vmem:[%s983 + $0x378] sm:$0xff]
        %v1435 = vld [vmem:[%s983 + $0x380] sm:$0xff]
        %v1436 = vld [vmem:[%s983 + $0x388] sm:$0xff]
        %v1437 = vld [vmem:[%s983 + $0x390] sm:$0xff]
        %v1438 = vld [vmem:[%s983 + $0x398] sm:$0xff]
        %v1439 = vld [vmem:[%s983 + $0x3a0] sm:$0xff]
        %v1440 = vld [vmem:[%s983 + $0x3a8] sm:$0xff]
        %v1441 = vld [vmem:[%s983 + $0x3b0] sm:$0xff]
        %v1442 = vld [vmem:[%s983 + $0x3b8] sm:$0xff]
        %v1443 = vld [vmem:[%s983 + $0x3c0] sm:$0xff]
        %v1444 = vld [vmem:[%s983 + $0x3c8] sm:$0xff]
        %v1445 = vld [vmem:[%s983 + $0x3d0] sm:$0xff]
        %v1446 = vld [vmem:[%s983 + $0x3d8] sm:$0xff]
        %v1447 = vld [vmem:[%s983 + $0x3e0] sm:$0xff]
        %v1448 = vld [vmem:[%s983 + $0x3e8] sm:$0xff]
        %v1449 = vld [vmem:[%s983 + $0x3f0] sm:$0xff]
        %v1450 = vld [vmem:[%s983 + $0x3f8] sm:$0xff]
        %v1451 = vld [vmem:[%s983 + $0x400] sm:$0xff]
        %v1452 = vld [vmem:[%s983 + $0x408] sm:$0xff]
        %v1453 = vld [vmem:[%s983 + $0x410] sm:$0xff]
        %v1454 = vld [vmem:[%s983 + $0x418] sm:$0xff]
        %v1455 = vld [vmem:[%s983 + $0x420] sm:$0xff]
        %v1456 = vld [vmem:[%s983 + $0x428] sm:$0xff]
        %v1457 = vld [vmem:[%s983 + $0x430] sm:$0xff]
        %v1458 = vld [vmem:[%s983 + $0x438] sm:$0xff]
        %v1459 = vld [vmem:[%s983 + $0x440] sm:$0xff]
        %v1460 = vld [vmem:[%s983 + $0x448] sm:$0xff]
        %v1461 = vld [vmem:[%s983 + $0x450] sm:$0xff]
        %v1462 = vld [vmem:[%s983 + $0x458] sm:$0xff]
        %v1463 = vld [vmem:[%s983 + $0x460] sm:$0xff]
        %v1464 = vld [vmem:[%s983 + $0x468] sm:$0xff]
        %v1465 = vld [vmem:[%s983 + $0x470] sm:$0xff]
        %v1466 = vld [vmem:[%s983 + $0x478] sm:$0xff]
        %v1467 = vld [vmem:[%s983 + $0x480] sm:$0xff]
        %v1468 = vld [vmem:[%s983 + $0x488] sm:$0xff]
        %v1469 = vld [vmem:[%s983 + $0x490] sm:$0xff]
        %v1470 = vld [vmem:[%s983 + $0x498] sm:$0xff]
        %v1471 = vld [vmem:[%s983 + $0x4a0] sm:$0xff]
        %v1472 = vld [vmem:[%s983 + $0x4a8] sm:$0xff]
        %v1473 = vld [vmem:[%s983 + $0x4b0] sm:$0xff]
        %v1474 = vld [vmem:[%s983 + $0x4b8] sm:$0xff]
        %v1475 = vld [vmem:[%s983 + $0x4c0] sm:$0xff]
        %v1476 = vld [vmem:[%s983 + $0x4c8] sm:$0xff]
        %v1477 = vld [vmem:[%s983 + $0x4d0] sm:$0xff]
        %v1478 = vld [vmem:[%s983 + $0x4d8] sm:$0xff]
        %v1479 = vld [vmem:[%s983 + $0x4e0] sm:$0xff]
        %v1480 = vld [vmem:[%s983 + $0x4e8] sm:$0xff]
        %v1481 = vld [vmem:[%s983 + $0x4f0] sm:$0xff]
        %v1482 = vld [vmem:[%s983 + $0x4f8] sm:$0xff]
        %v1483 = vld [vmem:[%s983 + $0x500] sm:$0xff]
        %v1484 = vld [vmem:[%s983 + $0x508] sm:$0xff]
        %v1485 = vld [vmem:[%s983 + $0x510] sm:$0xff]
        %v1486 = vld [vmem:[%s983 + $0x518] sm:$0xff]
        %v1487 = vld [vmem:[%s983 + $0x520] sm:$0xff]
        %v1488 = vld [vmem:[%s983 + $0x528] sm:$0xff]
        %v1489 = vld [vmem:[%s983 + $0x530] sm:$0xff]
        %v1490 = vld [vmem:[%s983 + $0x538] sm:$0xff]
        %v1491 = vld [vmem:[%s983 + $0x540] sm:$0xff]
        %v1492 = vld [vmem:[%s983 + $0x548] sm:$0xff]
        %v1493 = vld [vmem:[%s983 + $0x550] sm:$0xff]
        %v1494 = vld [vmem:[%s983 + $0x558] sm:$0xff]
        %v1495 = vld [vmem:[%s983 + $0x560] sm:$0xff]
        %v1496 = vld [vmem:[%s983 + $0x568] sm:$0xff]
        %v1497 = vld [vmem:[%s983 + $0x570] sm:$0xff]
        %v1498 = vld [vmem:[%s983 + $0x578] sm:$0xff]
        %v1499 = vld [vmem:[%s983 + $0x580] sm:$0xff]
        %v1500 = vld [vmem:[%s983 + $0x588] sm:$0xff]
        %v1501 = vld [vmem:[%s983 + $0x590] sm:$0xff]
        %v1502 = vld [vmem:[%s983 + $0x598] sm:$0xff]
        %v1503 = vld [vmem:[%s983 + $0x5a0] sm:$0xff]
        %v1504 = vld [vmem:[%s983 + $0x5a8] sm:$0xff]
        %v1505 = vld [vmem:[%s983 + $0x5b0] sm:$0xff]
        %v1506 = vld [vmem:[%s983 + $0x5b8] sm:$0xff]
        %v1507 = vld [vmem:[%s983 + $0x5c0] sm:$0xff]
        %v1508 = vld [vmem:[%s983 + $0x5c8] sm:$0xff]
        %v1509 = vld [vmem:[%s983 + $0x5d0] sm:$0xff]
        %v1510 = vld [vmem:[%s983 + $0x5d8] sm:$0xff]
        %v1511 = vld [vmem:[%s983 + $0x5e0] sm:$0xff]
        %v1512 = vld [vmem:[%s983 + $0x5e8] sm:$0xff]
        %v1513 = vld [vmem:[%s983 + $0x5f0] sm:$0xff]
        %v1514 = vld [vmem:[%s983 + $0x5f8] sm:$0xff]
        %v1515 = vld [vmem:[%s983 + $0x600] sm:$0xff]
        %v1516 = vld [vmem:[%s983 + $0x608] sm:$0xff]
        %v1517 = vld [vmem:[%s983 + $0x610] sm:$0xff]
        %v1518 = vld [vmem:[%s983 + $0x618] sm:$0xff]
        %v1519 = vld [vmem:[%s983 + $0x620] sm:$0xff]
        %v1520 = vld [vmem:[%s983 + $0x628] sm:$0xff]
        %v1521 = vld [vmem:[%s983 + $0x630] sm:$0xff]
        %v1522 = vld [vmem:[%s983 + $0x638] sm:$0xff]
        %v1523 = vld [vmem:[%s983 + $0x640] sm:$0xff]
        %v1524 = vld [vmem:[%s983 + $0x648] sm:$0xff]
        %v1525 = vld [vmem:[%s983 + $0x650] sm:$0xff]
        %v1526 = vld [vmem:[%s983 + $0x658] sm:$0xff]
        %v1527 = vld [vmem:[%s983 + $0x660] sm:$0xff]
        %v1528 = vld [vmem:[%s983 + $0x668] sm:$0xff]
        %v1529 = vld [vmem:[%s983 + $0x670] sm:$0xff]
        %v1530 = vld [vmem:[%s983 + $0x678] sm:$0xff]
        %v1531 = vld [vmem:[%s983 + $0x680] sm:$0xff]
        %v1532 = vld [vmem:[%s983 + $0x688] sm:$0xff]
        %v1533 = vld [vmem:[%s983 + $0x690] sm:$0xff]
        %v1534 = vld [vmem:[%s983 + $0x698] sm:$0xff]
        %v1535 = vld [vmem:[%s983 + $0x6a0] sm:$0xff]
        %v1536 = vld [vmem:[%s983 + $0x6a8] sm:$0xff]
        %v1537 = vld [vmem:[%s983 + $0x6b0] sm:$0xff]
        %v1538 = vld [vmem:[%s983 + $0x6b8] sm:$0xff]
        %v1539 = vld [vmem:[%s983 + $0x6c0] sm:$0xff]
        %v1540 = vld [vmem:[%s983 + $0x6c8] sm:$0xff]
        %v1541 = vld [vmem:[%s983 + $0x6d0] sm:$0xff]
        %v1542 = vld [vmem:[%s983 + $0x6d8] sm:$0xff]
        %v1543 = vld [vmem:[%s983 + $0x6e0] sm:$0xff]
        %v1544 = vld [vmem:[%s983 + $0x6e8] sm:$0xff]
        %v1545 = vld [vmem:[%s983 + $0x6f0] sm:$0xff]
        %v1546 = vld [vmem:[%s983 + $0x6f8] sm:$0xff]
        %v1547 = vld [vmem:[%s983 + $0x700] sm:$0xff]
        %v1548 = vld [vmem:[%s983 + $0x708] sm:$0xff]
        %v1549 = vld [vmem:[%s983 + $0x710] sm:$0xff]
        %v1550 = vld [vmem:[%s983 + $0x718] sm:$0xff]
        %v1551 = vld [vmem:[%s983 + $0x720] sm:$0xff]
        %v1552 = vld [vmem:[%s983 + $0x728] sm:$0xff]
        %v1553 = vld [vmem:[%s983 + $0x730] sm:$0xff]
        %v1554 = vld [vmem:[%s983 + $0x738] sm:$0xff]
        %v1555 = vld [vmem:[%s983 + $0x740] sm:$0xff]
        %v1556 = vld [vmem:[%s983 + $0x748] sm:$0xff]
        %v1557 = vld [vmem:[%s983 + $0x750] sm:$0xff]
        %v1558 = vld [vmem:[%s983 + $0x758] sm:$0xff]
        %v1559 = vld [vmem:[%s983 + $0x760] sm:$0xff]
        %v1560 = vld [vmem:[%s983 + $0x768] sm:$0xff]
        %v1561 = vld [vmem:[%s983 + $0x770] sm:$0xff]
        %v1562 = vld [vmem:[%s983 + $0x778] sm:$0xff]
        %v1563 = vld [vmem:[%s983 + $0x780] sm:$0xff]
        %v1564 = vld [vmem:[%s983 + $0x788] sm:$0xff]
        %v1565 = vld [vmem:[%s983 + $0x790] sm:$0xff]
        %v1566 = vld [vmem:[%s983 + $0x798] sm:$0xff]
        %v1567 = vld [vmem:[%s983 + $0x7a0] sm:$0xff]
        %v1568 = vld [vmem:[%s983 + $0x7a8] sm:$0xff]
        %v1569 = vld [vmem:[%s983 + $0x7b0] sm:$0xff]
        %v1570 = vld [vmem:[%s983 + $0x7b8] sm:$0xff]
        %v1571 = vld [vmem:[%s983 + $0x7c0] sm:$0xff]
        %v1572 = vld [vmem:[%s983 + $0x7c8] sm:$0xff]
        %v1573 = vld [vmem:[%s983 + $0x7d0] sm:$0xff]
        %v1574 = vld [vmem:[%s983 + $0x7d8] sm:$0xff]
        %v1575 = vld [vmem:[%s983 + $0x7e0] sm:$0xff]
        %v1576 = vld [vmem:[%s983 + $0x7e8] sm:$0xff]
        %v1577 = vld [vmem:[%s983 + $0x7f0] sm:$0xff]
        %v1578 = vld [vmem:[%s983 + $0x7f8] sm:$0xff]
        %v1579 = vld [vmem:[%s1003] sm:$0xff]
        %v1580 = vld [vmem:[%s1003 + $0x8] sm:$0xff]
        %v1581 = vld [vmem:[%s1003 + $0x10] sm:$0xff]
        %v1582 = vld [vmem:[%s1003 + $0x18] sm:$0xff]
        %v1583 = vld [vmem:[%s1003 + $0x20] sm:$0xff]
        %v1584 = vld [vmem:[%s1003 + $0x28] sm:$0xff]
        %v1585 = vld [vmem:[%s1003 + $0x30] sm:$0xff]
        %v1586 = vld [vmem:[%s1003 + $0x38] sm:$0xff]
        %v1587 = vld [vmem:[%s1003 + $0x40] sm:$0xff]
        %v1588 = vld [vmem:[%s1003 + $0x48] sm:$0xff]
        %v1589 = vld [vmem:[%s1003 + $0x50] sm:$0xff]
        %v1590 = vld [vmem:[%s1003 + $0x58] sm:$0xff]
        %v1591 = vld [vmem:[%s1003 + $0x60] sm:$0xff]
        %v1592 = vld [vmem:[%s1003 + $0x68] sm:$0xff]
        %v1593 = vld [vmem:[%s1003 + $0x70] sm:$0xff]
        %v1594 = vld [vmem:[%s1003 + $0x78] sm:$0xff]
        %v1595 = vld [vmem:[%s1003 + $0x80] sm:$0xff]
        %v1596 = vld [vmem:[%s1003 + $0x88] sm:$0xff]
        %v1597 = vld [vmem:[%s1003 + $0x90] sm:$0xff]
        %v1598 = vld [vmem:[%s1003 + $0x98] sm:$0xff]
        %v1599 = vld [vmem:[%s1003 + $0xa0] sm:$0xff]
        %v1600 = vld [vmem:[%s1003 + $0xa8] sm:$0xff]
        %v1601 = vld [vmem:[%s1003 + $0xb0] sm:$0xff]
        %v1602 = vld [vmem:[%s1003 + $0xb8] sm:$0xff]
        %v1603 = vld [vmem:[%s1003 + $0xc0] sm:$0xff]
        %v1604 = vld [vmem:[%s1003 + $0xc8] sm:$0xff]
        %v1605 = vld [vmem:[%s1003 + $0xd0] sm:$0xff]
        %v1606 = vld [vmem:[%s1003 + $0xd8] sm:$0xff]
        %v1607 = vld [vmem:[%s1003 + $0xe0] sm:$0xff]
        %v1608 = vld [vmem:[%s1003 + $0xe8] sm:$0xff]
        %v1609 = vld [vmem:[%s1003 + $0xf0] sm:$0xff]
        %v1610 = vld [vmem:[%s1003 + $0xf8] sm:$0xff]
        %v1611 = vld [vmem:[%s1003 + $0x100] sm:$0xff]
        %v1612 = vld [vmem:[%s1003 + $0x108] sm:$0xff]
        %v1613 = vld [vmem:[%s1003 + $0x110] sm:$0xff]
        %v1614 = vld [vmem:[%s1003 + $0x118] sm:$0xff]
        %v1615 = vld [vmem:[%s1003 + $0x120] sm:$0xff]
        %v1616 = vld [vmem:[%s1003 + $0x128] sm:$0xff]
        %v1617 = vld [vmem:[%s1003 + $0x130] sm:$0xff]
        %v1618 = vld [vmem:[%s1003 + $0x138] sm:$0xff]
        %v1619 = vld [vmem:[%s1003 + $0x140] sm:$0xff]
        %v1620 = vld [vmem:[%s1003 + $0x148] sm:$0xff]
        %v1621 = vld [vmem:[%s1003 + $0x150] sm:$0xff]
        %v1622 = vld [vmem:[%s1003 + $0x158] sm:$0xff]
        %v1623 = vld [vmem:[%s1003 + $0x160] sm:$0xff]
        %v1624 = vld [vmem:[%s1003 + $0x168] sm:$0xff]
        %v1625 = vld [vmem:[%s1003 + $0x170] sm:$0xff]
        %v1626 = vld [vmem:[%s1003 + $0x178] sm:$0xff]
        %v1627 = vld [vmem:[%s1003 + $0x180] sm:$0xff]
        %v1628 = vld [vmem:[%s1003 + $0x188] sm:$0xff]
        %v1629 = vld [vmem:[%s1003 + $0x190] sm:$0xff]
        %v1630 = vld [vmem:[%s1003 + $0x198] sm:$0xff]
        %v1631 = vld [vmem:[%s1003 + $0x1a0] sm:$0xff]
        %v1632 = vld [vmem:[%s1003 + $0x1a8] sm:$0xff]
        %v1633 = vld [vmem:[%s1003 + $0x1b0] sm:$0xff]
        %v1634 = vld [vmem:[%s1003 + $0x1b8] sm:$0xff]
        %v1635 = vld [vmem:[%s1003 + $0x1c0] sm:$0xff]
        %v1636 = vld [vmem:[%s1003 + $0x1c8] sm:$0xff]
        %v1637 = vld [vmem:[%s1003 + $0x1d0] sm:$0xff]
        %v1638 = vld [vmem:[%s1003 + $0x1d8] sm:$0xff]
        %v1639 = vld [vmem:[%s1003 + $0x1e0] sm:$0xff]
        %v1640 = vld [vmem:[%s1003 + $0x1e8] sm:$0xff]
        %v1641 = vld [vmem:[%s1003 + $0x1f0] sm:$0xff]
        %v1642 = vld [vmem:[%s1003 + $0x1f8] sm:$0xff]
        %v1643 = vld [vmem:[%s1003 + $0x200] sm:$0xff]
        %v1644 = vld [vmem:[%s1003 + $0x208] sm:$0xff]
        %v1645 = vld [vmem:[%s1003 + $0x210] sm:$0xff]
        %v1646 = vld [vmem:[%s1003 + $0x218] sm:$0xff]
        %v1647 = vld [vmem:[%s1003 + $0x220] sm:$0xff]
        %v1648 = vld [vmem:[%s1003 + $0x228] sm:$0xff]
        %v1649 = vld [vmem:[%s1003 + $0x230] sm:$0xff]
        %v1650 = vld [vmem:[%s1003 + $0x238] sm:$0xff]
        %v1651 = vld [vmem:[%s1003 + $0x240] sm:$0xff]
        %v1652 = vld [vmem:[%s1003 + $0x248] sm:$0xff]
        %v1653 = vld [vmem:[%s1003 + $0x250] sm:$0xff]
        %v1654 = vld [vmem:[%s1003 + $0x258] sm:$0xff]
        %v1655 = vld [vmem:[%s1003 + $0x260] sm:$0xff]
        %v1656 = vld [vmem:[%s1003 + $0x268] sm:$0xff]
        %v1657 = vld [vmem:[%s1003 + $0x270] sm:$0xff]
        %v1658 = vld [vmem:[%s1003 + $0x278] sm:$0xff]
        %v1659 = vld [vmem:[%s1003 + $0x280] sm:$0xff]
        %v1660 = vld [vmem:[%s1003 + $0x288] sm:$0xff]
        %v1661 = vld [vmem:[%s1003 + $0x290] sm:$0xff]
        %v1662 = vld [vmem:[%s1003 + $0x298] sm:$0xff]
        %v1663 = vld [vmem:[%s1003 + $0x2a0] sm:$0xff]
        %v1664 = vld [vmem:[%s1003 + $0x2a8] sm:$0xff]
        %v1665 = vld [vmem:[%s1003 + $0x2b0] sm:$0xff]
        %v1666 = vld [vmem:[%s1003 + $0x2b8] sm:$0xff]
        %v1667 = vld [vmem:[%s1003 + $0x2c0] sm:$0xff]
        %v1668 = vld [vmem:[%s1003 + $0x2c8] sm:$0xff]
        %v1669 = vld [vmem:[%s1003 + $0x2d0] sm:$0xff]
        %v1670 = vld [vmem:[%s1003 + $0x2d8] sm:$0xff]
        %v1671 = vld [vmem:[%s1003 + $0x2e0] sm:$0xff]
        %v1672 = vld [vmem:[%s1003 + $0x2e8] sm:$0xff]
        %v1673 = vld [vmem:[%s1003 + $0x2f0] sm:$0xff]
        %v1674 = vld [vmem:[%s1003 + $0x2f8] sm:$0xff]
        %v1675 = vld [vmem:[%s1003 + $0x300] sm:$0xff]
        %v1676 = vld [vmem:[%s1003 + $0x308] sm:$0xff]
        %v1677 = vld [vmem:[%s1003 + $0x310] sm:$0xff]
        %v1678 = vld [vmem:[%s1003 + $0x318] sm:$0xff]
        %v1679 = vld [vmem:[%s1003 + $0x320] sm:$0xff]
        %v1680 = vld [vmem:[%s1003 + $0x328] sm:$0xff]
        %v1681 = vld [vmem:[%s1003 + $0x330] sm:$0xff]
        %v1682 = vld [vmem:[%s1003 + $0x338] sm:$0xff]
        %v1683 = vld [vmem:[%s1003 + $0x340] sm:$0xff]
        %v1684 = vld [vmem:[%s1003 + $0x348] sm:$0xff]
        %v1685 = vld [vmem:[%s1003 + $0x350] sm:$0xff]
        %v1686 = vld [vmem:[%s1003 + $0x358] sm:$0xff]
        %v1687 = vld [vmem:[%s1003 + $0x360] sm:$0xff]
        %v1688 = vld [vmem:[%s1003 + $0x368] sm:$0xff]
        %v1689 = vld [vmem:[%s1003 + $0x370] sm:$0xff]
        %v1690 = vld [vmem:[%s1003 + $0x378] sm:$0xff]
        %v1691 = vld [vmem:[%s1003 + $0x380] sm:$0xff]
        %v1692 = vld [vmem:[%s1003 + $0x388] sm:$0xff]
        %v1693 = vld [vmem:[%s1003 + $0x390] sm:$0xff]
        %v1694 = vld [vmem:[%s1003 + $0x398] sm:$0xff]
        %v1695 = vld [vmem:[%s1003 + $0x3a0] sm:$0xff]
        %v1696 = vld [vmem:[%s1003 + $0x3a8] sm:$0xff]
        %v1697 = vld [vmem:[%s1003 + $0x3b0] sm:$0xff]
        %v1698 = vld [vmem:[%s1003 + $0x3b8] sm:$0xff]
        %v1699 = vld [vmem:[%s1003 + $0x3c0] sm:$0xff]
        %v1700 = vld [vmem:[%s1003 + $0x3c8] sm:$0xff]
        %v1701 = vld [vmem:[%s1003 + $0x3d0] sm:$0xff]
        %v1702 = vld [vmem:[%s1003 + $0x3d8] sm:$0xff]
        %v1703 = vld [vmem:[%s1003 + $0x3e0] sm:$0xff]
        %v1704 = vld [vmem:[%s1003 + $0x3e8] sm:$0xff]
        %v1705 = vld [vmem:[%s1003 + $0x3f0] sm:$0xff]
        %v1706 = vld [vmem:[%s1003 + $0x3f8] sm:$0xff]
        %v1707 = vld [vmem:[%s1003 + $0x400] sm:$0xff]
        %v1708 = vld [vmem:[%s1003 + $0x408] sm:$0xff]
        %v1709 = vld [vmem:[%s1003 + $0x410] sm:$0xff]
        %v1710 = vld [vmem:[%s1003 + $0x418] sm:$0xff]
        %v1711 = vld [vmem:[%s1003 + $0x420] sm:$0xff]
        %v1712 = vld [vmem:[%s1003 + $0x428] sm:$0xff]
        %v1713 = vld [vmem:[%s1003 + $0x430] sm:$0xff]
        %v1714 = vld [vmem:[%s1003 + $0x438] sm:$0xff]
        %v1715 = vld [vmem:[%s1003 + $0x440] sm:$0xff]
        %v1716 = vld [vmem:[%s1003 + $0x448] sm:$0xff]
        %v1717 = vld [vmem:[%s1003 + $0x450] sm:$0xff]
        %v1718 = vld [vmem:[%s1003 + $0x458] sm:$0xff]
        %v1719 = vld [vmem:[%s1003 + $0x460] sm:$0xff]
        %v1720 = vld [vmem:[%s1003 + $0x468] sm:$0xff]
        %v1721 = vld [vmem:[%s1003 + $0x470] sm:$0xff]
        %v1722 = vld [vmem:[%s1003 + $0x478] sm:$0xff]
        %v1723 = vld [vmem:[%s1003 + $0x480] sm:$0xff]
        %v1724 = vld [vmem:[%s1003 + $0x488] sm:$0xff]
        %v1725 = vld [vmem:[%s1003 + $0x490] sm:$0xff]
        %v1726 = vld [vmem:[%s1003 + $0x498] sm:$0xff]
        %v1727 = vld [vmem:[%s1003 + $0x4a0] sm:$0xff]
        %v1728 = vld [vmem:[%s1003 + $0x4a8] sm:$0xff]
        %v1729 = vld [vmem:[%s1003 + $0x4b0] sm:$0xff]
        %v1730 = vld [vmem:[%s1003 + $0x4b8] sm:$0xff]
        %v1731 = vld [vmem:[%s1003 + $0x4c0] sm:$0xff]
        %v1732 = vld [vmem:[%s1003 + $0x4c8] sm:$0xff]
        %v1733 = vld [vmem:[%s1003 + $0x4d0] sm:$0xff]
        %v1734 = vld [vmem:[%s1003 + $0x4d8] sm:$0xff]
        %v1735 = vld [vmem:[%s1003 + $0x4e0] sm:$0xff]
        %v1736 = vld [vmem:[%s1003 + $0x4e8] sm:$0xff]
        %v1737 = vld [vmem:[%s1003 + $0x4f0] sm:$0xff]
        %v1738 = vld [vmem:[%s1003 + $0x4f8] sm:$0xff]
        %v1739 = vld [vmem:[%s1003 + $0x500] sm:$0xff]
        %v1740 = vld [vmem:[%s1003 + $0x508] sm:$0xff]
        %v1741 = vld [vmem:[%s1003 + $0x510] sm:$0xff]
        %v1742 = vld [vmem:[%s1003 + $0x518] sm:$0xff]
        %v1743 = vld [vmem:[%s1003 + $0x520] sm:$0xff]
        %v1744 = vld [vmem:[%s1003 + $0x528] sm:$0xff]
        %v1745 = vld [vmem:[%s1003 + $0x530] sm:$0xff]
        %v1746 = vld [vmem:[%s1003 + $0x538] sm:$0xff]
        %v1747 = vld [vmem:[%s1003 + $0x540] sm:$0xff]
        %v1748 = vld [vmem:[%s1003 + $0x548] sm:$0xff]
        %v1749 = vld [vmem:[%s1003 + $0x550] sm:$0xff]
        %v1750 = vld [vmem:[%s1003 + $0x558] sm:$0xff]
        %v1751 = vld [vmem:[%s1003 + $0x560] sm:$0xff]
        %v1752 = vld [vmem:[%s1003 + $0x568] sm:$0xff]
        %v1753 = vld [vmem:[%s1003 + $0x570] sm:$0xff]
        %v1754 = vld [vmem:[%s1003 + $0x578] sm:$0xff]
        %v1755 = vld [vmem:[%s1003 + $0x580] sm:$0xff]
        %v1756 = vld [vmem:[%s1003 + $0x588] sm:$0xff]
        %v1757 = vld [vmem:[%s1003 + $0x590] sm:$0xff]
        %v1758 = vld [vmem:[%s1003 + $0x598] sm:$0xff]
        %v1759 = vld [vmem:[%s1003 + $0x5a0] sm:$0xff]
        %v1760 = vld [vmem:[%s1003 + $0x5a8] sm:$0xff]
        %v1761 = vld [vmem:[%s1003 + $0x5b0] sm:$0xff]
        %v1762 = vld [vmem:[%s1003 + $0x5b8] sm:$0xff]
        %v1763 = vld [vmem:[%s1003 + $0x5c0] sm:$0xff]
        %v1764 = vld [vmem:[%s1003 + $0x5c8] sm:$0xff]
        %v1765 = vld [vmem:[%s1003 + $0x5d0] sm:$0xff]
        %v1766 = vld [vmem:[%s1003 + $0x5d8] sm:$0xff]
        %v1767 = vld [vmem:[%s1003 + $0x5e0] sm:$0xff]
        %v1768 = vld [vmem:[%s1003 + $0x5e8] sm:$0xff]
        %v1769 = vld [vmem:[%s1003 + $0x5f0] sm:$0xff]
        %v1770 = vld [vmem:[%s1003 + $0x5f8] sm:$0xff]
        %v1771 = vld [vmem:[%s1003 + $0x600] sm:$0xff]
        %v1772 = vld [vmem:[%s1003 + $0x608] sm:$0xff]
        %v1773 = vld [vmem:[%s1003 + $0x610] sm:$0xff]
        %v1774 = vld [vmem:[%s1003 + $0x618] sm:$0xff]
        %v1775 = vld [vmem:[%s1003 + $0x620] sm:$0xff]
        %v1776 = vld [vmem:[%s1003 + $0x628] sm:$0xff]
        %v1777 = vld [vmem:[%s1003 + $0x630] sm:$0xff]
        %v1778 = vld [vmem:[%s1003 + $0x638] sm:$0xff]
        %v1779 = vld [vmem:[%s1003 + $0x640] sm:$0xff]
        %v1780 = vld [vmem:[%s1003 + $0x648] sm:$0xff]
        %v1781 = vld [vmem:[%s1003 + $0x650] sm:$0xff]
        %v1782 = vld [vmem:[%s1003 + $0x658] sm:$0xff]
        %v1783 = vld [vmem:[%s1003 + $0x660] sm:$0xff]
        %v1784 = vld [vmem:[%s1003 + $0x668] sm:$0xff]
        %v1785 = vld [vmem:[%s1003 + $0x670] sm:$0xff]
        %v1786 = vld [vmem:[%s1003 + $0x678] sm:$0xff]
        %v1787 = vld [vmem:[%s1003 + $0x680] sm:$0xff]
        %v1788 = vld [vmem:[%s1003 + $0x688] sm:$0xff]
        %v1789 = vld [vmem:[%s1003 + $0x690] sm:$0xff]
        %v1790 = vld [vmem:[%s1003 + $0x698] sm:$0xff]
        %v1791 = vld [vmem:[%s1003 + $0x6a0] sm:$0xff]
        %v1792 = vld [vmem:[%s1003 + $0x6a8] sm:$0xff]
        %v1793 = vld [vmem:[%s1003 + $0x6b0] sm:$0xff]
        %v1794 = vld [vmem:[%s1003 + $0x6b8] sm:$0xff]
        %v1795 = vld [vmem:[%s1003 + $0x6c0] sm:$0xff]
        %v1796 = vld [vmem:[%s1003 + $0x6c8] sm:$0xff]
        %v1797 = vld [vmem:[%s1003 + $0x6d0] sm:$0xff]
        %v1798 = vld [vmem:[%s1003 + $0x6d8] sm:$0xff]
        %v1799 = vld [vmem:[%s1003 + $0x6e0] sm:$0xff]
        %v1800 = vld [vmem:[%s1003 + $0x6e8] sm:$0xff]
        %v1801 = vld [vmem:[%s1003 + $0x6f0] sm:$0xff]
        %v1802 = vld [vmem:[%s1003 + $0x6f8] sm:$0xff]
        %v1803 = vld [vmem:[%s1003 + $0x700] sm:$0xff]
        %v1804 = vld [vmem:[%s1003 + $0x708] sm:$0xff]
        %v1805 = vld [vmem:[%s1003 + $0x710] sm:$0xff]
        %v1806 = vld [vmem:[%s1003 + $0x718] sm:$0xff]
        %v1807 = vld [vmem:[%s1003 + $0x720] sm:$0xff]
        %v1808 = vld [vmem:[%s1003 + $0x728] sm:$0xff]
        %v1809 = vld [vmem:[%s1003 + $0x730] sm:$0xff]
        %v1810 = vld [vmem:[%s1003 + $0x738] sm:$0xff]
        %v1811 = vld [vmem:[%s1003 + $0x740] sm:$0xff]
        %v1812 = vld [vmem:[%s1003 + $0x748] sm:$0xff]
        %v1813 = vld [vmem:[%s1003 + $0x750] sm:$0xff]
        %v1814 = vld [vmem:[%s1003 + $0x758] sm:$0xff]
        %v1815 = vld [vmem:[%s1003 + $0x760] sm:$0xff]
        %v1816 = vld [vmem:[%s1003 + $0x768] sm:$0xff]
        %v1817 = vld [vmem:[%s1003 + $0x770] sm:$0xff]
        %v1818 = vld [vmem:[%s1003 + $0x778] sm:$0xff]
        %v1819 = vld [vmem:[%s1003 + $0x780] sm:$0xff]
        %v1820 = vld [vmem:[%s1003 + $0x788] sm:$0xff]
        %v1821 = vld [vmem:[%s1003 + $0x790] sm:$0xff]
        %v1822 = vld [vmem:[%s1003 + $0x798] sm:$0xff]
        %v1823 = vld [vmem:[%s1003 + $0x7a0] sm:$0xff]
        %v1824 = vld [vmem:[%s1003 + $0x7a8] sm:$0xff]
        %v1825 = vld [vmem:[%s1003 + $0x7b0] sm:$0xff]
        %v1826 = vld [vmem:[%s1003 + $0x7b8] sm:$0xff]
        %v1827 = vld [vmem:[%s1003 + $0x7c0] sm:$0xff]
        %v1828 = vld [vmem:[%s1003 + $0x7c8] sm:$0xff]
        %v1829 = vld [vmem:[%s1003 + $0x7d0] sm:$0xff]
        %v1830 = vld [vmem:[%s1003 + $0x7d8] sm:$0xff]
        %v1831 = vld [vmem:[%s1003 + $0x7e0] sm:$0xff]
        %v1832 = vld [vmem:[%s1003 + $0x7e8] sm:$0xff]
        %v1833 = vld [vmem:[%s1003 + $0x7f0] sm:$0xff]
        %v1834 = vld [vmem:[%s1003 + $0x7f8] sm:$0xff]
        %v1835 = vld [vmem:[%s943] sm:$0x3]
        %v1836 = vld [vmem:[%s953] sm:$0x3]
        %v1837 = vld [vmem:[%s963] sm:$0x3]
        %v1838 = vld [vmem:[%s973] sm:$0x3]
        %v1839 = vld [vmem:[%s993] sm:$0xff]
        %v1840 = vld [vmem:[%s993 + $0x8] sm:$0xff]
        %v1841 = vld [vmem:[%s1013] sm:$0x3]
        %v1842 = vld [vmem:[%s1023] sm:$0x3]
        %v1843 = vld [vmem:[%s1033] sm:$0x3]
        %v1844 = vld [vmem:[%s1043] sm:$0x3]
        %v1845 = vld [vmem:[%s1053] sm:$0x3]
        %v1846 = vpack.c.bf16 %v1191, %v1189
        %v1847 = vpack.c.bf16 %v1192, %v1190
        %v1849 = vperm.slane %v1835, 0
        %v1850 = vperm.slane %v1835, 1
        %v1885 = vunpack.c.l.b16 %v1195
        %v1886 = vunpack.c.h.b16 %v1195
        %v1887 = vunpack.c.l.b16 %v1196
        %v1888 = vunpack.c.h.b16 %v1196
        %v1889 = vunpack.c.l.b16 %v1197
        %v1890 = vunpack.c.h.b16 %v1197
        %v1891 = vunpack.c.l.b16 %v1198
        %v1892 = vunpack.c.h.b16 %v1198
        %v1893 = vunpack.c.l.b16 %v1199
        %v1894 = vunpack.c.h.b16 %v1199
        %v1895 = vunpack.c.l.b16 %v1200
        %v1896 = vunpack.c.h.b16 %v1200
        %v1897 = vunpack.c.l.b16 %v1201
        %v1898 = vunpack.c.h.b16 %v1201
        %v1899 = vunpack.c.l.b16 %v1202
        %v1900 = vunpack.c.h.b16 %v1202
        %v1901 = vunpack.c.l.b16 %v1203
        %v1902 = vunpack.c.h.b16 %v1203
        %v1903 = vunpack.c.l.b16 %v1204
        %v1904 = vunpack.c.h.b16 %v1204
        %v1905 = vunpack.c.l.b16 %v1205
        %v1906 = vunpack.c.h.b16 %v1205
        %v1907 = vunpack.c.l.b16 %v1206
        %v1908 = vunpack.c.h.b16 %v1206
        %v1909 = vunpack.c.l.b16 %v1207
        %v1910 = vunpack.c.h.b16 %v1207
        %v1911 = vunpack.c.l.b16 %v1208
        %v1912 = vunpack.c.h.b16 %v1208
        %v1913 = vunpack.c.l.b16 %v1209
        %v1914 = vunpack.c.h.b16 %v1209
        %v1915 = vunpack.c.l.b16 %v1210
        %v1916 = vunpack.c.h.b16 %v1210
        %v1917 = vunpack.c.l.b16 %v1211
        %v1918 = vunpack.c.h.b16 %v1211
        %v1919 = vunpack.c.l.b16 %v1212
        %v1920 = vunpack.c.h.b16 %v1212
        %v1921 = vunpack.c.l.b16 %v1213
        %v1922 = vunpack.c.h.b16 %v1213
        %v1923 = vunpack.c.l.b16 %v1214
        %v1924 = vunpack.c.h.b16 %v1214
        %v1925 = vunpack.c.l.b16 %v1215
        %v1926 = vunpack.c.h.b16 %v1215
        %v1927 = vunpack.c.l.b16 %v1216
        %v1928 = vunpack.c.h.b16 %v1216
        %v1929 = vunpack.c.l.b16 %v1217
        %v1930 = vunpack.c.h.b16 %v1217
        %v1931 = vunpack.c.l.b16 %v1218
        %v1932 = vunpack.c.h.b16 %v1218
        %v1933 = vunpack.c.l.b16 %v1219
        %v1934 = vunpack.c.h.b16 %v1219
        %v1935 = vunpack.c.l.b16 %v1220
        %v1936 = vunpack.c.h.b16 %v1220
        %v1937 = vunpack.c.l.b16 %v1221
        %v1938 = vunpack.c.h.b16 %v1221
        %v1939 = vunpack.c.l.b16 %v1222
        %v1940 = vunpack.c.h.b16 %v1222
        %v1941 = vunpack.c.l.b16 %v1223
        %v1942 = vunpack.c.h.b16 %v1223
        %v1943 = vunpack.c.l.b16 %v1224
        %v1944 = vunpack.c.h.b16 %v1224
        %v1945 = vunpack.c.l.b16 %v1225
        %v1946 = vunpack.c.h.b16 %v1225
        %v1947 = vunpack.c.l.b16 %v1226
        %v1948 = vunpack.c.h.b16 %v1226
        %v1949 = vpack.c.b16 %v1887, %v1885
        %v1950 = vpack.c.b16 %v1888, %v1886
        %v1951 = vpack.c.b16 %v1891, %v1889
        %v1952 = vpack.c.b16 %v1892, %v1890
        %v1953 = vpack.c.b16 %v1895, %v1893
        %v1954 = vpack.c.b16 %v1896, %v1894
        %v1955 = vpack.c.b16 %v1899, %v1897
        %v1956 = vpack.c.b16 %v1900, %v1898
        %v1957 = vpack.c.b16 %v1903, %v1901
        %v1958 = vpack.c.b16 %v1904, %v1902
        %v1959 = vpack.c.b16 %v1907, %v1905
        %v1960 = vpack.c.b16 %v1908, %v1906
        %v1961 = vpack.c.b16 %v1911, %v1909
        %v1962 = vpack.c.b16 %v1912, %v1910
        %v1963 = vpack.c.b16 %v1915, %v1913
        %v1964 = vpack.c.b16 %v1916, %v1914
        %v1965 = vpack.c.b16 %v1919, %v1917
        %v1966 = vpack.c.b16 %v1920, %v1918
        %v1967 = vpack.c.b16 %v1923, %v1921
        %v1968 = vpack.c.b16 %v1924, %v1922
        %v1969 = vpack.c.b16 %v1927, %v1925
        %v1970 = vpack.c.b16 %v1928, %v1926
        %v1971 = vpack.c.b16 %v1931, %v1929
        %v1972 = vpack.c.b16 %v1932, %v1930
        %v1973 = vpack.c.b16 %v1935, %v1933
        %v1974 = vpack.c.b16 %v1936, %v1934
        %v1975 = vpack.c.b16 %v1939, %v1937
        %v1976 = vpack.c.b16 %v1940, %v1938
        %v1977 = vpack.c.b16 %v1943, %v1941
        %v1978 = vpack.c.b16 %v1944, %v1942
        %v1979 = vpack.c.b16 %v1947, %v1945
        %v1980 = vpack.c.b16 %v1948, %v1946
        %2013 = vmatpush.bf16.msra.mxu0 %v1963
        %2014 = vmatpush.bf16.msra.mxu0 %v1961
        %2015 = vmatpush.bf16.msra.mxu0 %v1959
        %2016 = vmatpush.bf16.msra.mxu0 %v1957
        %2017 = vmatpush.bf16.msra.mxu0 %v1955
        %2018 = vmatpush.bf16.msra.mxu0 %v1953
        %2019 = vmatpush.bf16.msra.mxu0 %v1951
        %2020 = vmatpush.bf16.msra.mxu0 %v1949
        %2021 = vmatmul.bf16.gmra.mxu0 %v1846
        %v2022 = vpop.f32.mrf.mxu0
        %v2023 = vadd.f32 %v1849, %v2022
        %v2024 = vpop.f32.mrf.mxu0
        %v2025 = vadd.f32 %v1849, %v2024
        %2026 = vdwg.mxu0
        %2027 = vmatpush.bf16.msra.mxu0 %v1979
        %2028 = vmatpush.bf16.msra.mxu0 %v1977
        %2029 = vmatpush.bf16.msra.mxu0 %v1975
        %2030 = vmatpush.bf16.msra.mxu0 %v1973
        %2031 = vmatpush.bf16.msra.mxu0 %v1971
        %2032 = vmatpush.bf16.msra.mxu0 %v1969
        %2033 = vmatpush.bf16.msra.mxu0 %v1967
        %2034 = vmatpush.bf16.msra.mxu0 %v1965
        %2035 = vmatmul.bf16.gmra.mxu0 %v1847
        %v2036 = vpop.f32.mrf.mxu0
        %v2037 = vadd.f32 %v2023, %v2036
        %v2038 = vpop.f32.mrf.mxu0
        %v2039 = vadd.f32 %v2025, %v2038
        %2040 = vdwg.mxu0
        %2041 = vmatpush.bf16.msra.mxu0 %v1964
        %2042 = vmatpush.bf16.msra.mxu0 %v1962
        %2043 = vmatpush.bf16.msra.mxu0 %v1960
        %2044 = vmatpush.bf16.msra.mxu0 %v1958
        %2045 = vmatpush.bf16.msra.mxu0 %v1956
        %2046 = vmatpush.bf16.msra.mxu0 %v1954
        %2047 = vmatpush.bf16.msra.mxu0 %v1952
        %2048 = vmatpush.bf16.msra.mxu0 %v1950
        %2049 = vmatmul.bf16.gmra.mxu0 %v1846
        %v2050 = vpop.f32.mrf.mxu0
        %v2051 = vadd.f32 %v1850, %v2050
        %v2052 = vpop.f32.mrf.mxu0
        %v2053 = vadd.f32 %v1850, %v2052
        %2054 = vdwg.mxu0
        %2055 = vmatpush.bf16.msra.mxu0 %v1980
        %2056 = vmatpush.bf16.msra.mxu0 %v1978
        %2057 = vmatpush.bf16.msra.mxu0 %v1976
        %2058 = vmatpush.bf16.msra.mxu0 %v1974
        %2059 = vmatpush.bf16.msra.mxu0 %v1972
        %2060 = vmatpush.bf16.msra.mxu0 %v1970
        %2061 = vmatpush.bf16.msra.mxu0 %v1968
        %2062 = vmatpush.bf16.msra.mxu0 %v1966
        %2063 = vmatmul.bf16.gmra.mxu0 %v1847
        %v2064 = vpop.f32.mrf.mxu0
        %v2065 = vadd.f32 %v2051, %v2064
        %v2066 = vpop.f32.mrf.mxu0
        %v2067 = vadd.f32 %v2053, %v2066
        %2068 = vdwg.mxu0
        %v2070 = vperm.slane %v1836, 0
        %v2071 = vperm.slane %v1836, 1
        %v2106 = vunpack.c.l.b16 %v1227
        %v2107 = vunpack.c.h.b16 %v1227
        %v2108 = vunpack.c.l.b16 %v1228
        %v2109 = vunpack.c.h.b16 %v1228
        %v2110 = vunpack.c.l.b16 %v1229
        %v2111 = vunpack.c.h.b16 %v1229
        %v2112 = vunpack.c.l.b16 %v1230
        %v2113 = vunpack.c.h.b16 %v1230
        %v2114 = vunpack.c.l.b16 %v1231
        %v2115 = vunpack.c.h.b16 %v1231
        %v2116 = vunpack.c.l.b16 %v1232
        %v2117 = vunpack.c.h.b16 %v1232
        %v2118 = vunpack.c.l.b16 %v1233
        %v2119 = vunpack.c.h.b16 %v1233
        %v2120 = vunpack.c.l.b16 %v1234
        %v2121 = vunpack.c.h.b16 %v1234
        %v2122 = vunpack.c.l.b16 %v1235
        %v2123 = vunpack.c.h.b16 %v1235
        %v2124 = vunpack.c.l.b16 %v1236
        %v2125 = vunpack.c.h.b16 %v1236
        %v2126 = vunpack.c.l.b16 %v1237
        %v2127 = vunpack.c.h.b16 %v1237
        %v2128 = vunpack.c.l.b16 %v1238
        %v2129 = vunpack.c.h.b16 %v1238
        %v2130 = vunpack.c.l.b16 %v1239
        %v2131 = vunpack.c.h.b16 %v1239
        %v2132 = vunpack.c.l.b16 %v1240
        %v2133 = vunpack.c.h.b16 %v1240
        %v2134 = vunpack.c.l.b16 %v1241
        %v2135 = vunpack.c.h.b16 %v1241
        %v2136 = vunpack.c.l.b16 %v1242
        %v2137 = vunpack.c.h.b16 %v1242
        %v2138 = vunpack.c.l.b16 %v1243
        %v2139 = vunpack.c.h.b16 %v1243
        %v2140 = vunpack.c.l.b16 %v1244
        %v2141 = vunpack.c.h.b16 %v1244
        %v2142 = vunpack.c.l.b16 %v1245
        %v2143 = vunpack.c.h.b16 %v1245
        %v2144 = vunpack.c.l.b16 %v1246
        %v2145 = vunpack.c.h.b16 %v1246
        %v2146 = vunpack.c.l.b16 %v1247
        %v2147 = vunpack.c.h.b16 %v1247
        %v2148 = vunpack.c.l.b16 %v1248
        %v2149 = vunpack.c.h.b16 %v1248
        %v2150 = vunpack.c.l.b16 %v1249
        %v2151 = vunpack.c.h.b16 %v1249
        %v2152 = vunpack.c.l.b16 %v1250
        %v2153 = vunpack.c.h.b16 %v1250
        %v2154 = vunpack.c.l.b16 %v1251
        %v2155 = vunpack.c.h.b16 %v1251
        %v2156 = vunpack.c.l.b16 %v1252
        %v2157 = vunpack.c.h.b16 %v1252
        %v2158 = vunpack.c.l.b16 %v1253
        %v2159 = vunpack.c.h.b16 %v1253
        %v2160 = vunpack.c.l.b16 %v1254
        %v2161 = vunpack.c.h.b16 %v1254
        %v2162 = vunpack.c.l.b16 %v1255
        %v2163 = vunpack.c.h.b16 %v1255
        %v2164 = vunpack.c.l.b16 %v1256
        %v2165 = vunpack.c.h.b16 %v1256
        %v2166 = vunpack.c.l.b16 %v1257
        %v2167 = vunpack.c.h.b16 %v1257
        %v2168 = vunpack.c.l.b16 %v1258
        %v2169 = vunpack.c.h.b16 %v1258
        %v2170 = vpack.c.b16 %v2108, %v2106
        %v2171 = vpack.c.b16 %v2109, %v2107
        %v2172 = vpack.c.b16 %v2112, %v2110
        %v2173 = vpack.c.b16 %v2113, %v2111
        %v2174 = vpack.c.b16 %v2116, %v2114
        %v2175 = vpack.c.b16 %v2117, %v2115
        %v2176 = vpack.c.b16 %v2120, %v2118
        %v2177 = vpack.c.b16 %v2121, %v2119
        %v2178 = vpack.c.b16 %v2124, %v2122
        %v2179 = vpack.c.b16 %v2125, %v2123
        %v2180 = vpack.c.b16 %v2128, %v2126
        %v2181 = vpack.c.b16 %v2129, %v2127
        %v2182 = vpack.c.b16 %v2132, %v2130
        %v2183 = vpack.c.b16 %v2133, %v2131
        %v2184 = vpack.c.b16 %v2136, %v2134
        %v2185 = vpack.c.b16 %v2137, %v2135
        %v2186 = vpack.c.b16 %v2140, %v2138
        %v2187 = vpack.c.b16 %v2141, %v2139
        %v2188 = vpack.c.b16 %v2144, %v2142
        %v2189 = vpack.c.b16 %v2145, %v2143
        %v2190 = vpack.c.b16 %v2148, %v2146
        %v2191 = vpack.c.b16 %v2149, %v2147
        %v2192 = vpack.c.b16 %v2152, %v2150
        %v2193 = vpack.c.b16 %v2153, %v2151
        %v2194 = vpack.c.b16 %v2156, %v2154
        %v2195 = vpack.c.b16 %v2157, %v2155
        %v2196 = vpack.c.b16 %v2160, %v2158
        %v2197 = vpack.c.b16 %v2161, %v2159
        %v2198 = vpack.c.b16 %v2164, %v2162
        %v2199 = vpack.c.b16 %v2165, %v2163
        %v2200 = vpack.c.b16 %v2168, %v2166
        %v2201 = vpack.c.b16 %v2169, %v2167
        %2234 = vmatpush.bf16.msra.mxu0 %v2184
        %2235 = vmatpush.bf16.msra.mxu0 %v2182
        %2236 = vmatpush.bf16.msra.mxu0 %v2180
        %2237 = vmatpush.bf16.msra.mxu0 %v2178
        %2238 = vmatpush.bf16.msra.mxu0 %v2176
        %2239 = vmatpush.bf16.msra.mxu0 %v2174
        %2240 = vmatpush.bf16.msra.mxu0 %v2172
        %2241 = vmatpush.bf16.msra.mxu0 %v2170
        %2242 = vmatmul.bf16.gmra.mxu0 %v1846
        %v2243 = vpop.f32.mrf.mxu0
        %v2244 = vadd.f32 %v2070, %v2243
        %v2245 = vpop.f32.mrf.mxu0
        %v2246 = vadd.f32 %v2070, %v2245
        %2247 = vdwg.mxu0
        %2248 = vmatpush.bf16.msra.mxu0 %v2200
        %2249 = vmatpush.bf16.msra.mxu0 %v2198
        %2250 = vmatpush.bf16.msra.mxu0 %v2196
        %2251 = vmatpush.bf16.msra.mxu0 %v2194
        %2252 = vmatpush.bf16.msra.mxu0 %v2192
        %2253 = vmatpush.bf16.msra.mxu0 %v2190
        %2254 = vmatpush.bf16.msra.mxu0 %v2188
        %2255 = vmatpush.bf16.msra.mxu0 %v2186
        %2256 = vmatmul.bf16.gmra.mxu0 %v1847
        %v2257 = vpop.f32.mrf.mxu0
        %v2258 = vadd.f32 %v2244, %v2257
        %v2259 = vpop.f32.mrf.mxu0
        %v2260 = vadd.f32 %v2246, %v2259
        %2261 = vdwg.mxu0
        %2262 = vmatpush.bf16.msra.mxu0 %v2185
        %2263 = vmatpush.bf16.msra.mxu0 %v2183
        %2264 = vmatpush.bf16.msra.mxu0 %v2181
        %2265 = vmatpush.bf16.msra.mxu0 %v2179
        %2266 = vmatpush.bf16.msra.mxu0 %v2177
        %2267 = vmatpush.bf16.msra.mxu0 %v2175
        %2268 = vmatpush.bf16.msra.mxu0 %v2173
        %2269 = vmatpush.bf16.msra.mxu0 %v2171
        %2270 = vmatmul.bf16.gmra.mxu0 %v1846
        %v2271 = vpop.f32.mrf.mxu0
        %v2272 = vadd.f32 %v2071, %v2271
        %v2273 = vpop.f32.mrf.mxu0
        %v2274 = vadd.f32 %v2071, %v2273
        %2275 = vdwg.mxu0
        %2276 = vmatpush.bf16.msra.mxu0 %v2201
        %2277 = vmatpush.bf16.msra.mxu0 %v2199
        %2278 = vmatpush.bf16.msra.mxu0 %v2197
        %2279 = vmatpush.bf16.msra.mxu0 %v2195
        %2280 = vmatpush.bf16.msra.mxu0 %v2193
        %2281 = vmatpush.bf16.msra.mxu0 %v2191
        %2282 = vmatpush.bf16.msra.mxu0 %v2189
        %2283 = vmatpush.bf16.msra.mxu0 %v2187
        %2284 = vmatmul.bf16.gmra.mxu0 %v1847
        %v2285 = vpop.f32.mrf.mxu0
        %v2286 = vadd.f32 %v2272, %v2285
        %v2287 = vpop.f32.mrf.mxu0
        %v2288 = vadd.f32 %v2274, %v2287
        %2289 = vdwg.mxu0
        %v2291 = vperm.slane %v1837, 0
        %v2292 = vperm.slane %v1837, 1
        %v2327 = vunpack.c.l.b16 %v1259
        %v2328 = vunpack.c.h.b16 %v1259
        %v2329 = vunpack.c.l.b16 %v1260
        %v2330 = vunpack.c.h.b16 %v1260
        %v2331 = vunpack.c.l.b16 %v1261
        %v2332 = vunpack.c.h.b16 %v1261
        %v2333 = vunpack.c.l.b16 %v1262
        %v2334 = vunpack.c.h.b16 %v1262
        %v2335 = vunpack.c.l.b16 %v1263
        %v2336 = vunpack.c.h.b16 %v1263
        %v2337 = vunpack.c.l.b16 %v1264
        %v2338 = vunpack.c.h.b16 %v1264
        %v2339 = vunpack.c.l.b16 %v1265
        %v2340 = vunpack.c.h.b16 %v1265
        %v2341 = vunpack.c.l.b16 %v1266
        %v2342 = vunpack.c.h.b16 %v1266
        %v2343 = vunpack.c.l.b16 %v1267
        %v2344 = vunpack.c.h.b16 %v1267
        %v2345 = vunpack.c.l.b16 %v1268
        %v2346 = vunpack.c.h.b16 %v1268
        %v2347 = vunpack.c.l.b16 %v1269
        %v2348 = vunpack.c.h.b16 %v1269
        %v2349 = vunpack.c.l.b16 %v1270
        %v2350 = vunpack.c.h.b16 %v1270
        %v2351 = vunpack.c.l.b16 %v1271
        %v2352 = vunpack.c.h.b16 %v1271
        %v2353 = vunpack.c.l.b16 %v1272
        %v2354 = vunpack.c.h.b16 %v1272
        %v2355 = vunpack.c.l.b16 %v1273
        %v2356 = vunpack.c.h.b16 %v1273
        %v2357 = vunpack.c.l.b16 %v1274
        %v2358 = vunpack.c.h.b16 %v1274
        %v2359 = vunpack.c.l.b16 %v1275
        %v2360 = vunpack.c.h.b16 %v1275
        %v2361 = vunpack.c.l.b16 %v1276
        %v2362 = vunpack.c.h.b16 %v1276
        %v2363 = vunpack.c.l.b16 %v1277
        %v2364 = vunpack.c.h.b16 %v1277
        %v2365 = vunpack.c.l.b16 %v1278
        %v2366 = vunpack.c.h.b16 %v1278
        %v2367 = vunpack.c.l.b16 %v1279
        %v2368 = vunpack.c.h.b16 %v1279
        %v2369 = vunpack.c.l.b16 %v1280
        %v2370 = vunpack.c.h.b16 %v1280
        %v2371 = vunpack.c.l.b16 %v1281
        %v2372 = vunpack.c.h.b16 %v1281
        %v2373 = vunpack.c.l.b16 %v1282
        %v2374 = vunpack.c.h.b16 %v1282
        %v2375 = vunpack.c.l.b16 %v1283
        %v2376 = vunpack.c.h.b16 %v1283
        %v2377 = vunpack.c.l.b16 %v1284
        %v2378 = vunpack.c.h.b16 %v1284
        %v2379 = vunpack.c.l.b16 %v1285
        %v2380 = vunpack.c.h.b16 %v1285
        %v2381 = vunpack.c.l.b16 %v1286
        %v2382 = vunpack.c.h.b16 %v1286
        %v2383 = vunpack.c.l.b16 %v1287
        %v2384 = vunpack.c.h.b16 %v1287
        %v2385 = vunpack.c.l.b16 %v1288
        %v2386 = vunpack.c.h.b16 %v1288
        %v2387 = vunpack.c.l.b16 %v1289
        %v2388 = vunpack.c.h.b16 %v1289
        %v2389 = vunpack.c.l.b16 %v1290
        %v2390 = vunpack.c.h.b16 %v1290
        %v2391 = vpack.c.b16 %v2329, %v2327
        %v2392 = vpack.c.b16 %v2330, %v2328
        %v2393 = vpack.c.b16 %v2333, %v2331
        %v2394 = vpack.c.b16 %v2334, %v2332
        %v2395 = vpack.c.b16 %v2337, %v2335
        %v2396 = vpack.c.b16 %v2338, %v2336
        %v2397 = vpack.c.b16 %v2341, %v2339
        %v2398 = vpack.c.b16 %v2342, %v2340
        %v2399 = vpack.c.b16 %v2345, %v2343
        %v2400 = vpack.c.b16 %v2346, %v2344
        %v2401 = vpack.c.b16 %v2349, %v2347
        %v2402 = vpack.c.b16 %v2350, %v2348
        %v2403 = vpack.c.b16 %v2353, %v2351
        %v2404 = vpack.c.b16 %v2354, %v2352
        %v2405 = vpack.c.b16 %v2357, %v2355
        %v2406 = vpack.c.b16 %v2358, %v2356
        %v2407 = vpack.c.b16 %v2361, %v2359
        %v2408 = vpack.c.b16 %v2362, %v2360
        %v2409 = vpack.c.b16 %v2365, %v2363
        %v2410 = vpack.c.b16 %v2366, %v2364
        %v2411 = vpack.c.b16 %v2369, %v2367
        %v2412 = vpack.c.b16 %v2370, %v2368
        %v2413 = vpack.c.b16 %v2373, %v2371
        %v2414 = vpack.c.b16 %v2374, %v2372
        %v2415 = vpack.c.b16 %v2377, %v2375
        %v2416 = vpack.c.b16 %v2378, %v2376
        %v2417 = vpack.c.b16 %v2381, %v2379
        %v2418 = vpack.c.b16 %v2382, %v2380
        %v2419 = vpack.c.b16 %v2385, %v2383
        %v2420 = vpack.c.b16 %v2386, %v2384
        %v2421 = vpack.c.b16 %v2389, %v2387
        %v2422 = vpack.c.b16 %v2390, %v2388
        %2455 = vmatpush.bf16.msra.mxu0 %v2405
        %2456 = vmatpush.bf16.msra.mxu0 %v2403
        %2457 = vmatpush.bf16.msra.mxu0 %v2401
        %2458 = vmatpush.bf16.msra.mxu0 %v2399
        %2459 = vmatpush.bf16.msra.mxu0 %v2397
        %2460 = vmatpush.bf16.msra.mxu0 %v2395
        %2461 = vmatpush.bf16.msra.mxu0 %v2393
        %2462 = vmatpush.bf16.msra.mxu0 %v2391
        %2463 = vmatmul.bf16.gmra.mxu0 %v1846
        %v2464 = vpop.f32.mrf.mxu0
        %v2465 = vadd.f32 %v2291, %v2464
        %v2466 = vpop.f32.mrf.mxu0
        %v2467 = vadd.f32 %v2291, %v2466
        %2468 = vdwg.mxu0
        %2469 = vmatpush.bf16.msra.mxu0 %v2421
        %2470 = vmatpush.bf16.msra.mxu0 %v2419
        %2471 = vmatpush.bf16.msra.mxu0 %v2417
        %2472 = vmatpush.bf16.msra.mxu0 %v2415
        %2473 = vmatpush.bf16.msra.mxu0 %v2413
        %2474 = vmatpush.bf16.msra.mxu0 %v2411
        %2475 = vmatpush.bf16.msra.mxu0 %v2409
        %2476 = vmatpush.bf16.msra.mxu0 %v2407
        %2477 = vmatmul.bf16.gmra.mxu0 %v1847
        %v2478 = vpop.f32.mrf.mxu0
        %v2479 = vadd.f32 %v2465, %v2478
        %v2480 = vpop.f32.mrf.mxu0
        %v2481 = vadd.f32 %v2467, %v2480
        %2482 = vdwg.mxu0
        %2483 = vmatpush.bf16.msra.mxu0 %v2406
        %2484 = vmatpush.bf16.msra.mxu0 %v2404
        %2485 = vmatpush.bf16.msra.mxu0 %v2402
        %2486 = vmatpush.bf16.msra.mxu0 %v2400
        %2487 = vmatpush.bf16.msra.mxu0 %v2398
        %2488 = vmatpush.bf16.msra.mxu0 %v2396
        %2489 = vmatpush.bf16.msra.mxu0 %v2394
        %2490 = vmatpush.bf16.msra.mxu0 %v2392
        %2491 = vmatmul.bf16.gmra.mxu0 %v1846
        %v2492 = vpop.f32.mrf.mxu0
        %v2493 = vadd.f32 %v2292, %v2492
        %v2494 = vpop.f32.mrf.mxu0
        %v2495 = vadd.f32 %v2292, %v2494
        %2496 = vdwg.mxu0
        %2497 = vmatpush.bf16.msra.mxu0 %v2422
        %2498 = vmatpush.bf16.msra.mxu0 %v2420
        %2499 = vmatpush.bf16.msra.mxu0 %v2418
        %2500 = vmatpush.bf16.msra.mxu0 %v2416
        %2501 = vmatpush.bf16.msra.mxu0 %v2414
        %2502 = vmatpush.bf16.msra.mxu0 %v2412
        %2503 = vmatpush.bf16.msra.mxu0 %v2410
        %2504 = vmatpush.bf16.msra.mxu0 %v2408
        %2505 = vmatmul.bf16.gmra.mxu0 %v1847
        %v2506 = vpop.f32.mrf.mxu0
        %v2507 = vadd.f32 %v2493, %v2506
        %v2508 = vpop.f32.mrf.mxu0
        %v2509 = vadd.f32 %v2495, %v2508
        %2510 = vdwg.mxu0
        %2511 = vmatpush.xpose.msra.mxu0 0.0
        %2512 = vmatpush.xpose.msra.mxu0 0.0
        %2513 = vmatpush.xpose.msra.mxu0 0.0
        %2514 = vmatpush.xpose.msra.mxu0 0.0
        %2515 = vmatpush.xpose.msra.mxu0 0.0
        %2516 = vmatpush.xpose.msra.mxu0 0.0
        %2517 = vmatpush.xpose.msra.mxu0 0.0
        %2518 = vmatpush.xpose.msra.mxu0 0.0
        %2519 = vmatpush.xpose.msra.mxu0 0.0
        %2520 = vmatpush.xpose.msra.mxu0 0.0
        %2521 = vmatpush.xpose.msra.mxu0 0.0
        %2522 = vmatpush.xpose.msra.mxu0 0.0
        %2523 = vmatpush.xpose.msra.mxu0 0.0
        %2524 = vmatpush.xpose.msra.mxu0 0.0
        %2525 = vmatpush.xpose.msra.mxu0 0.0
        %2526 = vmatpush.xpose.msra.mxu0 %v2258
        %2527 = vmatmul.f32.gmra.mxu0 %v2037
        %v2528 = vpop.f32.mrf.mxu0
        %v2529 = vadd.f32 0.0, %v2528
        %2530 = vdwg.mxu0
        %2531 = vmatpush.xpose.msra.mxu0 0.0
        %2532 = vmatpush.xpose.msra.mxu0 0.0
        %2533 = vmatpush.xpose.msra.mxu0 0.0
        %2534 = vmatpush.xpose.msra.mxu0 0.0
        %2535 = vmatpush.xpose.msra.mxu0 0.0
        %2536 = vmatpush.xpose.msra.mxu0 0.0
        %2537 = vmatpush.xpose.msra.mxu0 0.0
        %2538 = vmatpush.xpose.msra.mxu0 0.0
        %2539 = vmatpush.xpose.msra.mxu0 0.0
        %2540 = vmatpush.xpose.msra.mxu0 0.0
        %2541 = vmatpush.xpose.msra.mxu0 0.0
        %2542 = vmatpush.xpose.msra.mxu0 0.0
        %2543 = vmatpush.xpose.msra.mxu0 0.0
        %2544 = vmatpush.xpose.msra.mxu0 0.0
        %2545 = vmatpush.xpose.msra.mxu0 0.0
        %2546 = vmatpush.xpose.msra.mxu0 %v2260
        %2547 = vmatmul.f32.gmra.mxu0 %v2039
        %v2548 = vpop.f32.mrf.mxu0
        %v2549 = vadd.f32 0.0, %v2548
        %2550 = vdwg.mxu0
        %v2551 = vmul.f32 %v2529, 0.088388346
        %v2552 = vmul.f32 %v2549, 0.088388346
        %v2555 = vperm.slane %v1193, 0
        %v2556 = vperm.slane %v1194, 0
        %v2559 = vadd.f32 %v2551, %v2555
        %v2560 = vadd.f32 %v2552, %v2556
        %vm2561 = vcmask 64512
        %v2562 = vsel %vm2561, %v2559, -inf
        %2563 = vmax.xlane.f32.xlu0 %v2562
        %v2564 = vpop.xlane.xlu0 %2563
        %v2565 = vsel %vm2561, %v2560, -inf
        %2566 = vmax.xlane.f32.xlu0 %v2565
        %v2567 = vpop.xlane.xlu0 %2566
        %v2568 = vsub.f32 %v2559, %v2564
        %v2569 = vsub.f32 %v2560, %v2567
        %v2570 = vmul.f32 %v2568, 1.442695
        %v2571 = vpow.pop %v2570
        %v2572 = vmul.f32 %v2569, 1.442695
        %v2573 = vpow.pop %v2572
        %v2574 = vsel %vm2561, %v2571, 0.0
        %2575 = vadd.xlane.f32.xlu0 %v2574
        %v2576 = vpop.xlane.xlu0 %2575
        %v2577 = vsel %vm2561, %v2573, 0.0
        %2578 = vadd.xlane.f32.xlu0 %v2577
        %v2579 = vpop.xlane.xlu0 %2578
        %v2580 = vrcp.pop %v2576
        %v2581 = vmul.f32 %v2576, %v2580
        %v2582 = vsub.f32 1.0, %v2581
        %v2583 = vmul.f32 %v2580, %v2582
        %v2584 = vadd.f32 %v2580, %v2583
        %vm2585 = vweird.f32 %v2576
        %vm2586 = vweird.f32 %v2580
        %vm2587 = vmor %vm2585, %vm2586
        %v2588 = vsel %vm2587, %v2580, %v2584
        %v2589 = vand.u32 2147483647, %v2576
        %vm2590 = vcmp.eq.f32.partialorder %v2589, 8.507059e+37
        %v2591 = vand.u32 %v2576, 2147483648
        %v2592 = vor.u32 1.1754944e-38, %v2591
        %v2593 = vsel %vm2590, %v2592, %v2588
        %v2594 = vmul.f32 %v2571, %v2593
        %v2595 = vrcp.pop %v2579
        %v2596 = vmul.f32 %v2579, %v2595
        %v2597 = vsub.f32 1.0, %v2596
        %v2598 = vmul.f32 %v2595, %v2597
        %v2599 = vadd.f32 %v2595, %v2598
        %vm2600 = vweird.f32 %v2579
        %vm2601 = vweird.f32 %v2595
        %vm2602 = vmor %vm2600, %vm2601
        %v2603 = vsel %vm2602, %v2595, %v2599
        %v2604 = vand.u32 2147483647, %v2579
        %vm2605 = vcmp.eq.f32.partialorder %v2604, 8.507059e+37
        %v2606 = vand.u32 %v2579, 2147483648
        %v2607 = vor.u32 1.1754944e-38, %v2606
        %v2608 = vsel %vm2605, %v2607, %v2603
        %v2609 = vmul.f32 %v2573, %v2608
        %v2611 = vsel %vm2561, %v2594, 0
        %2613 = vmatpush.msra.mxu0 0.0
        %2614 = vmatpush.msra.mxu0 0.0
        %2615 = vmatpush.msra.mxu0 0.0
        %2616 = vmatpush.msra.mxu0 0.0
        %2617 = vmatpush.msra.mxu0 0.0
        %2618 = vmatpush.msra.mxu0 0.0
        %2619 = vmatpush.msra.mxu0 0.0
        %2620 = vmatpush.msra.mxu0 0.0
        %2621 = vmatpush.msra.mxu0 0.0
        %2622 = vmatpush.msra.mxu0 0.0
        %2623 = vmatpush.msra.mxu0 0.0
        %2624 = vmatpush.msra.mxu0 0.0
        %2625 = vmatpush.msra.mxu0 0.0
        %2626 = vmatpush.msra.mxu0 0.0
        %2627 = vmatpush.msra.mxu0 0.0
        %2628 = vmatpush.msra.mxu0 %v2479
        %2629 = vmatmul.f32.gmra.mxu0 %v2611
        %v2630 = vpop.f32.mrf.mxu0
        %v2631 = vadd.f32 0.0, %v2630
        %2632 = vdwg.mxu0
        %v2634 = vsel %vm2561, %v2609, 0
        %2636 = vmatpush.msra.mxu0 0.0
        %2637 = vmatpush.msra.mxu0 0.0
        %2638 = vmatpush.msra.mxu0 0.0
        %2639 = vmatpush.msra.mxu0 0.0
        %2640 = vmatpush.msra.mxu0 0.0
        %2641 = vmatpush.msra.mxu0 0.0
        %2642 = vmatpush.msra.mxu0 0.0
        %2643 = vmatpush.msra.mxu0 0.0
        %2644 = vmatpush.msra.mxu0 0.0
        %2645 = vmatpush.msra.mxu0 0.0
        %2646 = vmatpush.msra.mxu0 0.0
        %2647 = vmatpush.msra.mxu0 0.0
        %2648 = vmatpush.msra.mxu0 0.0
        %2649 = vmatpush.msra.mxu0 0.0
        %2650 = vmatpush.msra.mxu0 0.0
        %2651 = vmatpush.msra.mxu0 %v2481
        %2652 = vmatmul.f32.gmra.mxu0 %v2634
        %v2653 = vpop.f32.mrf.mxu0
        %v2654 = vadd.f32 0.0, %v2653
        %2655 = vdwg.mxu0
        %2656 = vmatpush.xpose.msra.mxu0 0.0
        %2657 = vmatpush.xpose.msra.mxu0 0.0
        %2658 = vmatpush.xpose.msra.mxu0 0.0
        %2659 = vmatpush.xpose.msra.mxu0 0.0
        %2660 = vmatpush.xpose.msra.mxu0 0.0
        %2661 = vmatpush.xpose.msra.mxu0 0.0
        %2662 = vmatpush.xpose.msra.mxu0 0.0
        %2663 = vmatpush.xpose.msra.mxu0 0.0
        %2664 = vmatpush.xpose.msra.mxu0 0.0
        %2665 = vmatpush.xpose.msra.mxu0 0.0
        %2666 = vmatpush.xpose.msra.mxu0 0.0
        %2667 = vmatpush.xpose.msra.mxu0 0.0
        %2668 = vmatpush.xpose.msra.mxu0 0.0
        %2669 = vmatpush.xpose.msra.mxu0 0.0
        %2670 = vmatpush.xpose.msra.mxu0 0.0
        %2671 = vmatpush.xpose.msra.mxu0 %v2286
        %2672 = vmatmul.f32.gmra.mxu0 %v2065
        %v2673 = vpop.f32.mrf.mxu0
        %v2674 = vadd.f32 0.0, %v2673
        %2675 = vdwg.mxu0
        %2676 = vmatpush.xpose.msra.mxu0 0.0
        %2677 = vmatpush.xpose.msra.mxu0 0.0
        %2678 = vmatpush.xpose.msra.mxu0 0.0
        %2679 = vmatpush.xpose.msra.mxu0 0.0
        %2680 = vmatpush.xpose.msra.mxu0 0.0
        %2681 = vmatpush.xpose.msra.mxu0 0.0
        %2682 = vmatpush.xpose.msra.mxu0 0.0
        %2683 = vmatpush.xpose.msra.mxu0 0.0
        %2684 = vmatpush.xpose.msra.mxu0 0.0
        %2685 = vmatpush.xpose.msra.mxu0 0.0
        %2686 = vmatpush.xpose.msra.mxu0 0.0
        %2687 = vmatpush.xpose.msra.mxu0 0.0
        %2688 = vmatpush.xpose.msra.mxu0 0.0
        %2689 = vmatpush.xpose.msra.mxu0 0.0
        %2690 = vmatpush.xpose.msra.mxu0 0.0
        %2691 = vmatpush.xpose.msra.mxu0 %v2288
        %2692 = vmatmul.f32.gmra.mxu0 %v2067
        %v2693 = vpop.f32.mrf.mxu0
        %v2694 = vadd.f32 0.0, %v2693
        %2695 = vdwg.mxu0
        %v2696 = vmul.f32 %v2674, 0.088388346
        %v2697 = vmul.f32 %v2694, 0.088388346
        %v2698 = vadd.f32 %v2696, %v2555
        %v2699 = vadd.f32 %v2697, %v2556
        %v2700 = vsel %vm2561, %v2698, -inf
        %2701 = vmax.xlane.f32.xlu0 %v2700
        %v2702 = vpop.xlane.xlu0 %2701
        %v2703 = vsel %vm2561, %v2699, -inf
        %2704 = vmax.xlane.f32.xlu0 %v2703
        %v2705 = vpop.xlane.xlu0 %2704
        %v2706 = vsub.f32 %v2698, %v2702
        %v2707 = vsub.f32 %v2699, %v2705
        %v2708 = vmul.f32 %v2706, 1.442695
        %v2709 = vpow.pop %v2708
        %v2710 = vmul.f32 %v2707, 1.442695
        %v2711 = vpow.pop %v2710
        %v2712 = vsel %vm2561, %v2709, 0.0
        %2713 = vadd.xlane.f32.xlu0 %v2712
        %v2714 = vpop.xlane.xlu0 %2713
        %v2715 = vsel %vm2561, %v2711, 0.0
        %2716 = vadd.xlane.f32.xlu0 %v2715
        %v2717 = vpop.xlane.xlu0 %2716
        %v2718 = vrcp.pop %v2714
        %v2719 = vmul.f32 %v2714, %v2718
        %v2720 = vsub.f32 1.0, %v2719
        %v2721 = vmul.f32 %v2718, %v2720
        %v2722 = vadd.f32 %v2718, %v2721
        %vm2723 = vweird.f32 %v2714
        %vm2724 = vweird.f32 %v2718
        %vm2725 = vmor %vm2723, %vm2724
        %v2726 = vsel %vm2725, %v2718, %v2722
        %v2727 = vand.u32 2147483647, %v2714
        %vm2728 = vcmp.eq.f32.partialorder %v2727, 8.507059e+37
        %v2729 = vand.u32 %v2714, 2147483648
        %v2730 = vor.u32 1.1754944e-38, %v2729
        %v2731 = vsel %vm2728, %v2730, %v2726
        %v2732 = vmul.f32 %v2709, %v2731
        %v2733 = vrcp.pop %v2717
        %v2734 = vmul.f32 %v2717, %v2733
        %v2735 = vsub.f32 1.0, %v2734
        %v2736 = vmul.f32 %v2733, %v2735
        %v2737 = vadd.f32 %v2733, %v2736
        %vm2738 = vweird.f32 %v2717
        %vm2739 = vweird.f32 %v2733
        %vm2740 = vmor %vm2738, %vm2739
        %v2741 = vsel %vm2740, %v2733, %v2737
        %v2742 = vand.u32 2147483647, %v2717
        %vm2743 = vcmp.eq.f32.partialorder %v2742, 8.507059e+37
        %v2744 = vand.u32 %v2717, 2147483648
        %v2745 = vor.u32 1.1754944e-38, %v2744
        %v2746 = vsel %vm2743, %v2745, %v2741
        %v2747 = vmul.f32 %v2711, %v2746
        %v2749 = vsel %vm2561, %v2732, 0
        %2751 = vmatpush.msra.mxu0 0.0
        %2752 = vmatpush.msra.mxu0 0.0
        %2753 = vmatpush.msra.mxu0 0.0
        %2754 = vmatpush.msra.mxu0 0.0
        %2755 = vmatpush.msra.mxu0 0.0
        %2756 = vmatpush.msra.mxu0 0.0
        %2757 = vmatpush.msra.mxu0 0.0
        %2758 = vmatpush.msra.mxu0 0.0
        %2759 = vmatpush.msra.mxu0 0.0
        %2760 = vmatpush.msra.mxu0 0.0
        %2761 = vmatpush.msra.mxu0 0.0
        %2762 = vmatpush.msra.mxu0 0.0
        %2763 = vmatpush.msra.mxu0 0.0
        %2764 = vmatpush.msra.mxu0 0.0
        %2765 = vmatpush.msra.mxu0 0.0
        %2766 = vmatpush.msra.mxu0 %v2507
        %2767 = vmatmul.f32.gmra.mxu0 %v2749
        %v2768 = vpop.f32.mrf.mxu0
        %v2769 = vadd.f32 0.0, %v2768
        %2770 = vdwg.mxu0
        %v2772 = vsel %vm2561, %v2747, 0
        %2774 = vmatpush.msra.mxu0 0.0
        %2775 = vmatpush.msra.mxu0 0.0
        %2776 = vmatpush.msra.mxu0 0.0
        %2777 = vmatpush.msra.mxu0 0.0
        %2778 = vmatpush.msra.mxu0 0.0
        %2779 = vmatpush.msra.mxu0 0.0
        %2780 = vmatpush.msra.mxu0 0.0
        %2781 = vmatpush.msra.mxu0 0.0
        %2782 = vmatpush.msra.mxu0 0.0
        %2783 = vmatpush.msra.mxu0 0.0
        %2784 = vmatpush.msra.mxu0 0.0
        %2785 = vmatpush.msra.mxu0 0.0
        %2786 = vmatpush.msra.mxu0 0.0
        %2787 = vmatpush.msra.mxu0 0.0
        %2788 = vmatpush.msra.mxu0 0.0
        %2789 = vmatpush.msra.mxu0 %v2509
        %2790 = vmatmul.f32.gmra.mxu0 %v2772
        %v2791 = vpop.f32.mrf.mxu0
        %v2792 = vadd.f32 0.0, %v2791
        %2793 = vdwg.mxu0
        %v2794 = vpack.c.bf16 %v2654, %v2631
        %v2795 = vpack.c.bf16 %v2792, %v2769
        %v2797 = vperm.slane %v1838, 0
        %v2798 = vperm.slane %v1838, 1
        %v2833 = vunpack.c.l.b16 %v1291
        %v2834 = vunpack.c.h.b16 %v1291
        %v2835 = vunpack.c.l.b16 %v1292
        %v2836 = vunpack.c.h.b16 %v1292
        %v2837 = vunpack.c.l.b16 %v1293
        %v2838 = vunpack.c.h.b16 %v1293
        %v2839 = vunpack.c.l.b16 %v1294
        %v2840 = vunpack.c.h.b16 %v1294
        %v2841 = vunpack.c.l.b16 %v1295
        %v2842 = vunpack.c.h.b16 %v1295
        %v2843 = vunpack.c.l.b16 %v1296
        %v2844 = vunpack.c.h.b16 %v1296
        %v2845 = vunpack.c.l.b16 %v1297
        %v2846 = vunpack.c.h.b16 %v1297
        %v2847 = vunpack.c.l.b16 %v1298
        %v2848 = vunpack.c.h.b16 %v1298
        %v2849 = vunpack.c.l.b16 %v1299
        %v2850 = vunpack.c.h.b16 %v1299
        %v2851 = vunpack.c.l.b16 %v1300
        %v2852 = vunpack.c.h.b16 %v1300
        %v2853 = vunpack.c.l.b16 %v1301
        %v2854 = vunpack.c.h.b16 %v1301
        %v2855 = vunpack.c.l.b16 %v1302
        %v2856 = vunpack.c.h.b16 %v1302
        %v2857 = vunpack.c.l.b16 %v1303
        %v2858 = vunpack.c.h.b16 %v1303
        %v2859 = vunpack.c.l.b16 %v1304
        %v2860 = vunpack.c.h.b16 %v1304
        %v2861 = vunpack.c.l.b16 %v1305
        %v2862 = vunpack.c.h.b16 %v1305
        %v2863 = vunpack.c.l.b16 %v1306
        %v2864 = vunpack.c.h.b16 %v1306
        %v2865 = vunpack.c.l.b16 %v1307
        %v2866 = vunpack.c.h.b16 %v1307
        %v2867 = vunpack.c.l.b16 %v1308
        %v2868 = vunpack.c.h.b16 %v1308
        %v2869 = vunpack.c.l.b16 %v1309
        %v2870 = vunpack.c.h.b16 %v1309
        %v2871 = vunpack.c.l.b16 %v1310
        %v2872 = vunpack.c.h.b16 %v1310
        %v2873 = vunpack.c.l.b16 %v1311
        %v2874 = vunpack.c.h.b16 %v1311
        %v2875 = vunpack.c.l.b16 %v1312
        %v2876 = vunpack.c.h.b16 %v1312
        %v2877 = vunpack.c.l.b16 %v1313
        %v2878 = vunpack.c.h.b16 %v1313
        %v2879 = vunpack.c.l.b16 %v1314
        %v2880 = vunpack.c.h.b16 %v1314
        %v2881 = vunpack.c.l.b16 %v1315
        %v2882 = vunpack.c.h.b16 %v1315
        %v2883 = vunpack.c.l.b16 %v1316
        %v2884 = vunpack.c.h.b16 %v1316
        %v2885 = vunpack.c.l.b16 %v1317
        %v2886 = vunpack.c.h.b16 %v1317
        %v2887 = vunpack.c.l.b16 %v1318
        %v2888 = vunpack.c.h.b16 %v1318
        %v2889 = vunpack.c.l.b16 %v1319
        %v2890 = vunpack.c.h.b16 %v1319
        %v2891 = vunpack.c.l.b16 %v1320
        %v2892 = vunpack.c.h.b16 %v1320
        %v2893 = vunpack.c.l.b16 %v1321
        %v2894 = vunpack.c.h.b16 %v1321
        %v2895 = vunpack.c.l.b16 %v1322
        %v2896 = vunpack.c.h.b16 %v1322
        %v2897 = vpack.c.b16 %v2835, %v2833
        %v2898 = vpack.c.b16 %v2836, %v2834
        %v2899 = vpack.c.b16 %v2839, %v2837
        %v2900 = vpack.c.b16 %v2840, %v2838
        %v2901 = vpack.c.b16 %v2843, %v2841
        %v2902 = vpack.c.b16 %v2844, %v2842
        %v2903 = vpack.c.b16 %v2847, %v2845
        %v2904 = vpack.c.b16 %v2848, %v2846
        %v2905 = vpack.c.b16 %v2851, %v2849
        %v2906 = vpack.c.b16 %v2852, %v2850
        %v2907 = vpack.c.b16 %v2855, %v2853
        %v2908 = vpack.c.b16 %v2856, %v2854
        %v2909 = vpack.c.b16 %v2859, %v2857
        %v2910 = vpack.c.b16 %v2860, %v2858
        %v2911 = vpack.c.b16 %v2863, %v2861
        %v2912 = vpack.c.b16 %v2864, %v2862
        %v2913 = vpack.c.b16 %v2867, %v2865
        %v2914 = vpack.c.b16 %v2868, %v2866
        %v2915 = vpack.c.b16 %v2871, %v2869
        %v2916 = vpack.c.b16 %v2872, %v2870
        %v2917 = vpack.c.b16 %v2875, %v2873
        %v2918 = vpack.c.b16 %v2876, %v2874
        %v2919 = vpack.c.b16 %v2879, %v2877
        %v2920 = vpack.c.b16 %v2880, %v2878
        %v2921 = vpack.c.b16 %v2883, %v2881
        %v2922 = vpack.c.b16 %v2884, %v2882
        %v2923 = vpack.c.b16 %v2887, %v2885
        %v2924 = vpack.c.b16 %v2888, %v2886
        %v2925 = vpack.c.b16 %v2891, %v2889
        %v2926 = vpack.c.b16 %v2892, %v2890
        %v2927 = vpack.c.b16 %v2895, %v2893
        %v2928 = vpack.c.b16 %v2896, %v2894
        %2961 = vmatpush.bf16.msra.mxu0 %v2911
        %2962 = vmatpush.bf16.msra.mxu0 %v2909
        %2963 = vmatpush.bf16.msra.mxu0 %v2907
        %2964 = vmatpush.bf16.msra.mxu0 %v2905
        %2965 = vmatpush.bf16.msra.mxu0 %v2903
        %2966 = vmatpush.bf16.msra.mxu0 %v2901
        %2967 = vmatpush.bf16.msra.mxu0 %v2899
        %2968 = vmatpush.bf16.msra.mxu0 %v2897
        %2969 = vmatmul.bf16.gmra.mxu0 %v2794
        %v2970 = vpop.f32.mrf.mxu0
        %v2971 = vadd.f32 %v2797, %v2970
        %v2972 = vpop.f32.mrf.mxu0
        %v2973 = vadd.f32 %v2797, %v2972
        %2974 = vdwg.mxu0
        %2975 = vmatpush.bf16.msra.mxu0 %v2927
        %2976 = vmatpush.bf16.msra.mxu0 %v2925
        %2977 = vmatpush.bf16.msra.mxu0 %v2923
        %2978 = vmatpush.bf16.msra.mxu0 %v2921
        %2979 = vmatpush.bf16.msra.mxu0 %v2919
        %2980 = vmatpush.bf16.msra.mxu0 %v2917
        %2981 = vmatpush.bf16.msra.mxu0 %v2915
        %2982 = vmatpush.bf16.msra.mxu0 %v2913
        %2983 = vmatmul.bf16.gmra.mxu0 %v2795
        %v2984 = vpop.f32.mrf.mxu0
        %v2985 = vadd.f32 %v2971, %v2984
        %v2986 = vpop.f32.mrf.mxu0
        %v2987 = vadd.f32 %v2973, %v2986
        %2988 = vdwg.mxu0
        %2989 = vmatpush.bf16.msra.mxu0 %v2912
        %2990 = vmatpush.bf16.msra.mxu0 %v2910
        %2991 = vmatpush.bf16.msra.mxu0 %v2908
        %2992 = vmatpush.bf16.msra.mxu0 %v2906
        %2993 = vmatpush.bf16.msra.mxu0 %v2904
        %2994 = vmatpush.bf16.msra.mxu0 %v2902
        %2995 = vmatpush.bf16.msra.mxu0 %v2900
        %2996 = vmatpush.bf16.msra.mxu0 %v2898
        %2997 = vmatmul.bf16.gmra.mxu0 %v2794
        %v2998 = vpop.f32.mrf.mxu0
        %v2999 = vadd.f32 %v2798, %v2998
        %v3000 = vpop.f32.mrf.mxu0
        %v3001 = vadd.f32 %v2798, %v3000
        %3002 = vdwg.mxu0
        %3003 = vmatpush.bf16.msra.mxu0 %v2928
        %3004 = vmatpush.bf16.msra.mxu0 %v2926
        %3005 = vmatpush.bf16.msra.mxu0 %v2924
        %3006 = vmatpush.bf16.msra.mxu0 %v2922
        %3007 = vmatpush.bf16.msra.mxu0 %v2920
        %3008 = vmatpush.bf16.msra.mxu0 %v2918
        %3009 = vmatpush.bf16.msra.mxu0 %v2916
        %3010 = vmatpush.bf16.msra.mxu0 %v2914
        %3011 = vmatmul.bf16.gmra.mxu0 %v2795
        %v3012 = vpop.f32.mrf.mxu0
        %v3013 = vadd.f32 %v2999, %v3012
        %v3014 = vpop.f32.mrf.mxu0
        %v3015 = vadd.f32 %v3001, %v3014
        %3016 = vdwg.mxu0
        %v3017 = vadd.f32 %v1189, %v2985
        %v3018 = vadd.f32 %v1190, %v3013
        %v3019 = vadd.f32 %v1191, %v2987
        %v3020 = vadd.f32 %v1192, %v3015
        %v3021 = vadd.f32 %v3017, %v3018
        %3022 = vadd.xlane.f32.xlu0 %v3021
        %v3023 = vpop.xlane.xlu0 %3022
        %v3024 = vadd.f32 %v3019, %v3020
        %3025 = vadd.xlane.f32.xlu0 %v3024
        %v3026 = vpop.xlane.xlu0 %3025
        %v3027 = vrcp.pop 256.0
        %v3028 = vmul.f32 256.0, %v3027
        %v3029 = vsub.f32 1.0, %v3028
        %v3030 = vmul.f32 %v3027, %v3029
        %v3031 = vadd.f32 %v3027, %v3030
        %vm3032 = vweird.f32 %v3027
        %v3033 = vsel %vm3032, %v3027, %v3031
        %v3034 = vmul.f32 %v3023, %v3033
        %v3035 = vmul.f32 %v3026, %v3033
        %v3036 = vsub.f32 %v3017, %v3034
        %v3037 = vsub.f32 %v3018, %v3034
        %v3038 = vsub.f32 %v3019, %v3035
        %v3039 = vsub.f32 %v3020, %v3035
        %v3040 = vmul.f32 %v3036, %v3036
        %v3041 = vmul.f32 %v3037, %v3037
        %v3042 = vmul.f32 %v3038, %v3038
        %v3043 = vmul.f32 %v3039, %v3039
        %v3044 = vadd.f32 %v3040, %v3041
        %3045 = vadd.xlane.f32.xlu0 %v3044
        %v3046 = vpop.xlane.xlu0 %3045
        %v3047 = vadd.f32 %v3042, %v3043
        %3048 = vadd.xlane.f32.xlu0 %v3047
        %v3049 = vpop.xlane.xlu0 %3048
        %v3050 = vmul.f32 %v3046, %v3033
        %v3051 = vmul.f32 %v3049, %v3033
        %v3052 = vadd.f32 %v3050, 1e-05
        %v3053 = vadd.f32 %v3051, 1e-05
        %v3054 = vrsqrt.pop %v3052
        %v3055 = vmul.f32 %v3054, %v3052
        %v3056 = vmul.f32 %v3055, %v3054
        %v3057 = vmul.f32 0.5, %v3056
        %v3058 = vsub.f32 1.5, %v3057
        %v3059 = vmul.f32 %v3054, %v3058
        %vm3060 = vweird.f32 %v3052
        %vm3061 = vweird.f32 %v3054
        %vm3062 = vmor %vm3060, %vm3061
        %v3063 = vsel %vm3062, %v3054, %v3059
        %v3064 = vrsqrt.pop %v3053
        %v3065 = vmul.f32 %v3064, %v3053
        %v3066 = vmul.f32 %v3065, %v3064
        %v3067 = vmul.f32 0.5, %v3066
        %v3068 = vsub.f32 1.5, %v3067
        %v3069 = vmul.f32 %v3064, %v3068
        %vm3070 = vweird.f32 %v3053
        %vm3071 = vweird.f32 %v3064
        %vm3072 = vmor %vm3070, %vm3071
        %v3073 = vsel %vm3072, %v3064, %v3069
        %v3074 = vmul.f32 %v3036, %v3063
        %v3075 = vmul.f32 %v3037, %v3063
        %v3076 = vmul.f32 %v3038, %v3073
        %v3077 = vmul.f32 %v3039, %v3073
        %v3079 = vperm.slane %v1842, 0
        %v3080 = vperm.slane %v1842, 1
        %v3083 = vmul.f32 %v3074, %v3079
        %v3084 = vmul.f32 %v3075, %v3080
        %v3085 = vmul.f32 %v3076, %v3079
        %v3086 = vmul.f32 %v3077, %v3080
        %v3088 = vperm.slane %v1843, 0
        %v3089 = vperm.slane %v1843, 1
        %v3092 = vadd.f32 %v3083, %v3088
        %v3093 = vadd.f32 %v3084, %v3089
        %v3094 = vadd.f32 %v3085, %v3088
        %v3095 = vadd.f32 %v3086, %v3089
        %v3096 = vpack.c.bf16 %v3094, %v3092
        %v3097 = vpack.c.bf16 %v3095, %v3093
        %v3100 = vperm.slane %v1839, 0
        %v3101 = vperm.slane %v1839, 1
        %v3102 = vperm.slane %v1839, 2
        %v3103 = vperm.slane %v1839, 3
        %v3104 = vperm.slane %v1839, 4
        %v3105 = vperm.slane %v1839, 5
        %v3106 = vperm.slane %v1839, 6
        %v3107 = vperm.slane %v1839, 7
        %v3108 = vperm.slane %v1840, 0
        %v3109 = vperm.slane %v1840, 1
        %v3110 = vperm.slane %v1840, 2
        %v3111 = vperm.slane %v1840, 3
        %v3112 = vperm.slane %v1840, 4
        %v3113 = vperm.slane %v1840, 5
        %v3114 = vperm.slane %v1840, 6
        %v3115 = vperm.slane %v1840, 7
        %v3388 = vunpack.c.l.b16 %v1323
        %v3389 = vunpack.c.h.b16 %v1323
        %v3390 = vunpack.c.l.b16 %v1324
        %v3391 = vunpack.c.h.b16 %v1324
        %v3392 = vunpack.c.l.b16 %v1325
        %v3393 = vunpack.c.h.b16 %v1325
        %v3394 = vunpack.c.l.b16 %v1326
        %v3395 = vunpack.c.h.b16 %v1326
        %v3396 = vunpack.c.l.b16 %v1327
        %v3397 = vunpack.c.h.b16 %v1327
        %v3398 = vunpack.c.l.b16 %v1328
        %v3399 = vunpack.c.h.b16 %v1328
        %v3400 = vunpack.c.l.b16 %v1329
        %v3401 = vunpack.c.h.b16 %v1329
        %v3402 = vunpack.c.l.b16 %v1330
        %v3403 = vunpack.c.h.b16 %v1330
        %v3404 = vunpack.c.l.b16 %v1331
        %v3405 = vunpack.c.h.b16 %v1331
        %v3406 = vunpack.c.l.b16 %v1332
        %v3407 = vunpack.c.h.b16 %v1332
        %v3408 = vunpack.c.l.b16 %v1333
        %v3409 = vunpack.c.h.b16 %v1333
        %v3410 = vunpack.c.l.b16 %v1334
        %v3411 = vunpack.c.h.b16 %v1334
        %v3412 = vunpack.c.l.b16 %v1335
        %v3413 = vunpack.c.h.b16 %v1335
        %v3414 = vunpack.c.l.b16 %v1336
        %v3415 = vunpack.c.h.b16 %v1336
        %v3416 = vunpack.c.l.b16 %v1337
        %v3417 = vunpack.c.h.b16 %v1337
        %v3418 = vunpack.c.l.b16 %v1338
        %v3419 = vunpack.c.h.b16 %v1338
        %v3420 = vunpack.c.l.b16 %v1339
        %v3421 = vunpack.c.h.b16 %v1339
        %v3422 = vunpack.c.l.b16 %v1340
        %v3423 = vunpack.c.h.b16 %v1340
        %v3424 = vunpack.c.l.b16 %v1341
        %v3425 = vunpack.c.h.b16 %v1341
        %v3426 = vunpack.c.l.b16 %v1342
        %v3427 = vunpack.c.h.b16 %v1342
        %v3428 = vunpack.c.l.b16 %v1343
        %v3429 = vunpack.c.h.b16 %v1343
        %v3430 = vunpack.c.l.b16 %v1344
        %v3431 = vunpack.c.h.b16 %v1344
        %v3432 = vunpack.c.l.b16 %v1345
        %v3433 = vunpack.c.h.b16 %v1345
        %v3434 = vunpack.c.l.b16 %v1346
        %v3435 = vunpack.c.h.b16 %v1346
        %v3436 = vunpack.c.l.b16 %v1347
        %v3437 = vunpack.c.h.b16 %v1347
        %v3438 = vunpack.c.l.b16 %v1348
        %v3439 = vunpack.c.h.b16 %v1348
        %v3440 = vunpack.c.l.b16 %v1349
        %v3441 = vunpack.c.h.b16 %v1349
        %v3442 = vunpack.c.l.b16 %v1350
        %v3443 = vunpack.c.h.b16 %v1350
        %v3444 = vunpack.c.l.b16 %v1351
        %v3445 = vunpack.c.h.b16 %v1351
        %v3446 = vunpack.c.l.b16 %v1352
        %v3447 = vunpack.c.h.b16 %v1352
        %v3448 = vunpack.c.l.b16 %v1353
        %v3449 = vunpack.c.h.b16 %v1353
        %v3450 = vunpack.c.l.b16 %v1354
        %v3451 = vunpack.c.h.b16 %v1354
        %v3452 = vunpack.c.l.b16 %v1355
        %v3453 = vunpack.c.h.b16 %v1355
        %v3454 = vunpack.c.l.b16 %v1356
        %v3455 = vunpack.c.h.b16 %v1356
        %v3456 = vunpack.c.l.b16 %v1357
        %v3457 = vunpack.c.h.b16 %v1357
        %v3458 = vunpack.c.l.b16 %v1358
        %v3459 = vunpack.c.h.b16 %v1358
        %v3460 = vunpack.c.l.b16 %v1359
        %v3461 = vunpack.c.h.b16 %v1359
        %v3462 = vunpack.c.l.b16 %v1360
        %v3463 = vunpack.c.h.b16 %v1360
        %v3464 = vunpack.c.l.b16 %v1361
        %v3465 = vunpack.c.h.b16 %v1361
        %v3466 = vunpack.c.l.b16 %v1362
        %v3467 = vunpack.c.h.b16 %v1362
        %v3468 = vunpack.c.l.b16 %v1363
        %v3469 = vunpack.c.h.b16 %v1363
        %v3470 = vunpack.c.l.b16 %v1364
        %v3471 = vunpack.c.h.b16 %v1364
        %v3472 = vunpack.c.l.b16 %v1365
        %v3473 = vunpack.c.h.b16 %v1365
        %v3474 = vunpack.c.l.b16 %v1366
        %v3475 = vunpack.c.h.b16 %v1366
        %v3476 = vunpack.c.l.b16 %v1367
        %v3477 = vunpack.c.h.b16 %v1367
        %v3478 = vunpack.c.l.b16 %v1368
        %v3479 = vunpack.c.h.b16 %v1368
        %v3480 = vunpack.c.l.b16 %v1369
        %v3481 = vunpack.c.h.b16 %v1369
        %v3482 = vunpack.c.l.b16 %v1370
        %v3483 = vunpack.c.h.b16 %v1370
        %v3484 = vunpack.c.l.b16 %v1371
        %v3485 = vunpack.c.h.b16 %v1371
        %v3486 = vunpack.c.l.b16 %v1372
        %v3487 = vunpack.c.h.b16 %v1372
        %v3488 = vunpack.c.l.b16 %v1373
        %v3489 = vunpack.c.h.b16 %v1373
        %v3490 = vunpack.c.l.b16 %v1374
        %v3491 = vunpack.c.h.b16 %v1374
        %v3492 = vunpack.c.l.b16 %v1375
        %v3493 = vunpack.c.h.b16 %v1375
        %v3494 = vunpack.c.l.b16 %v1376
        %v3495 = vunpack.c.h.b16 %v1376
        %v3496 = vunpack.c.l.b16 %v1377
        %v3497 = vunpack.c.h.b16 %v1377
        %v3498 = vunpack.c.l.b16 %v1378
        %v3499 = vunpack.c.h.b16 %v1378
        %v3500 = vunpack.c.l.b16 %v1379
        %v3501 = vunpack.c.h.b16 %v1379
        %v3502 = vunpack.c.l.b16 %v1380
        %v3503 = vunpack.c.h.b16 %v1380
        %v3504 = vunpack.c.l.b16 %v1381
        %v3505 = vunpack.c.h.b16 %v1381
        %v3506 = vunpack.c.l.b16 %v1382
        %v3507 = vunpack.c.h.b16 %v1382
        %v3508 = vunpack.c.l.b16 %v1383
        %v3509 = vunpack.c.h.b16 %v1383
        %v3510 = vunpack.c.l.b16 %v1384
        %v3511 = vunpack.c.h.b16 %v1384
        %v3512 = vunpack.c.l.b16 %v1385
        %v3513 = vunpack.c.h.b16 %v1385
        %v3514 = vunpack.c.l.b16 %v1386
        %v3515 = vunpack.c.h.b16 %v1386
        %v3516 = vunpack.c.l.b16 %v1387
        %v3517 = vunpack.c.h.b16 %v1387
        %v3518 = vunpack.c.l.b16 %v1388
        %v3519 = vunpack.c.h.b16 %v1388
        %v3520 = vunpack.c.l.b16 %v1389
        %v3521 = vunpack.c.h.b16 %v1389
        %v3522 = vunpack.c.l.b16 %v1390
        %v3523 = vunpack.c.h.b16 %v1390
        %v3524 = vunpack.c.l.b16 %v1391
        %v3525 = vunpack.c.h.b16 %v1391
        %v3526 = vunpack.c.l.b16 %v1392
        %v3527 = vunpack.c.h.b16 %v1392
        %v3528 = vunpack.c.l.b16 %v1393
        %v3529 = vunpack.c.h.b16 %v1393
        %v3530 = vunpack.c.l.b16 %v1394
        %v3531 = vunpack.c.h.b16 %v1394
        %v3532 = vunpack.c.l.b16 %v1395
        %v3533 = vunpack.c.h.b16 %v1395
        %v3534 = vunpack.c.l.b16 %v1396
        %v3535 = vunpack.c.h.b16 %v1396
        %v3536 = vunpack.c.l.b16 %v1397
        %v3537 = vunpack.c.h.b16 %v1397
        %v3538 = vunpack.c.l.b16 %v1398
        %v3539 = vunpack.c.h.b16 %v1398
        %v3540 = vunpack.c.l.b16 %v1399
        %v3541 = vunpack.c.h.b16 %v1399
        %v3542 = vunpack.c.l.b16 %v1400
        %v3543 = vunpack.c.h.b16 %v1400
        %v3544 = vunpack.c.l.b16 %v1401
        %v3545 = vunpack.c.h.b16 %v1401
        %v3546 = vunpack.c.l.b16 %v1402
        %v3547 = vunpack.c.h.b16 %v1402
        %v3548 = vunpack.c.l.b16 %v1403
        %v3549 = vunpack.c.h.b16 %v1403
        %v3550 = vunpack.c.l.b16 %v1404
        %v3551 = vunpack.c.h.b16 %v1404
        %v3552 = vunpack.c.l.b16 %v1405
        %v3553 = vunpack.c.h.b16 %v1405
        %v3554 = vunpack.c.l.b16 %v1406
        %v3555 = vunpack.c.h.b16 %v1406
        %v3556 = vunpack.c.l.b16 %v1407
        %v3557 = vunpack.c.h.b16 %v1407
        %v3558 = vunpack.c.l.b16 %v1408
        %v3559 = vunpack.c.h.b16 %v1408
        %v3560 = vunpack.c.l.b16 %v1409
        %v3561 = vunpack.c.h.b16 %v1409
        %v3562 = vunpack.c.l.b16 %v1410
        %v3563 = vunpack.c.h.b16 %v1410
        %v3564 = vunpack.c.l.b16 %v1411
        %v3565 = vunpack.c.h.b16 %v1411
        %v3566 = vunpack.c.l.b16 %v1412
        %v3567 = vunpack.c.h.b16 %v1412
        %v3568 = vunpack.c.l.b16 %v1413
        %v3569 = vunpack.c.h.b16 %v1413
        %v3570 = vunpack.c.l.b16 %v1414
        %v3571 = vunpack.c.h.b16 %v1414
        %v3572 = vunpack.c.l.b16 %v1415
        %v3573 = vunpack.c.h.b16 %v1415
        %v3574 = vunpack.c.l.b16 %v1416
        %v3575 = vunpack.c.h.b16 %v1416
        %v3576 = vunpack.c.l.b16 %v1417
        %v3577 = vunpack.c.h.b16 %v1417
        %v3578 = vunpack.c.l.b16 %v1418
        %v3579 = vunpack.c.h.b16 %v1418
        %v3580 = vunpack.c.l.b16 %v1419
        %v3581 = vunpack.c.h.b16 %v1419
        %v3582 = vunpack.c.l.b16 %v1420
        %v3583 = vunpack.c.h.b16 %v1420
        %v3584 = vunpack.c.l.b16 %v1421
        %v3585 = vunpack.c.h.b16 %v1421
        %v3586 = vunpack.c.l.b16 %v1422
        %v3587 = vunpack.c.h.b16 %v1422
        %v3588 = vunpack.c.l.b16 %v1423
        %v3589 = vunpack.c.h.b16 %v1423
        %v3590 = vunpack.c.l.b16 %v1424
        %v3591 = vunpack.c.h.b16 %v1424
        %v3592 = vunpack.c.l.b16 %v1425
        %v3593 = vunpack.c.h.b16 %v1425
        %v3594 = vunpack.c.l.b16 %v1426
        %v3595 = vunpack.c.h.b16 %v1426
        %v3596 = vunpack.c.l.b16 %v1427
        %v3597 = vunpack.c.h.b16 %v1427
        %v3598 = vunpack.c.l.b16 %v1428
        %v3599 = vunpack.c.h.b16 %v1428
        %v3600 = vunpack.c.l.b16 %v1429
        %v3601 = vunpack.c.h.b16 %v1429
        %v3602 = vunpack.c.l.b16 %v1430
        %v3603 = vunpack.c.h.b16 %v1430
        %v3604 = vunpack.c.l.b16 %v1431
        %v3605 = vunpack.c.h.b16 %v1431
        %v3606 = vunpack.c.l.b16 %v1432
        %v3607 = vunpack.c.h.b16 %v1432
        %v3608 = vunpack.c.l.b16 %v1433
        %v3609 = vunpack.c.h.b16 %v1433
        %v3610 = vunpack.c.l.b16 %v1434
        %v3611 = vunpack.c.h.b16 %v1434
        %v3612 = vunpack.c.l.b16 %v1435
        %v3613 = vunpack.c.h.b16 %v1435
        %v3614 = vunpack.c.l.b16 %v1436
        %v3615 = vunpack.c.h.b16 %v1436
        %v3616 = vunpack.c.l.b16 %v1437
        %v3617 = vunpack.c.h.b16 %v1437
        %v3618 = vunpack.c.l.b16 %v1438
        %v3619 = vunpack.c.h.b16 %v1438
        %v3620 = vunpack.c.l.b16 %v1439
        %v3621 = vunpack.c.h.b16 %v1439
        %v3622 = vunpack.c.l.b16 %v1440
        %v3623 = vunpack.c.h.b16 %v1440
        %v3624 = vunpack.c.l.b16 %v1441
        %v3625 = vunpack.c.h.b16 %v1441
        %v3626 = vunpack.c.l.b16 %v1442
        %v3627 = vunpack.c.h.b16 %v1442
        %v3628 = vunpack.c.l.b16 %v1443
        %v3629 = vunpack.c.h.b16 %v1443
        %v3630 = vunpack.c.l.b16 %v1444
        %v3631 = vunpack.c.h.b16 %v1444
        %v3632 = vunpack.c.l.b16 %v1445
        %v3633 = vunpack.c.h.b16 %v1445
        %v3634 = vunpack.c.l.b16 %v1446
        %v3635 = vunpack.c.h.b16 %v1446
        %v3636 = vunpack.c.l.b16 %v1447
        %v3637 = vunpack.c.h.b16 %v1447
        %v3638 = vunpack.c.l.b16 %v1448
        %v3639 = vunpack.c.h.b16 %v1448
        %v3640 = vunpack.c.l.b16 %v1449
        %v3641 = vunpack.c.h.b16 %v1449
        %v3642 = vunpack.c.l.b16 %v1450
        %v3643 = vunpack.c.h.b16 %v1450
        %v3644 = vunpack.c.l.b16 %v1451
        %v3645 = vunpack.c.h.b16 %v1451
        %v3646 = vunpack.c.l.b16 %v1452
        %v3647 = vunpack.c.h.b16 %v1452
        %v3648 = vunpack.c.l.b16 %v1453
        %v3649 = vunpack.c.h.b16 %v1453
        %v3650 = vunpack.c.l.b16 %v1454
        %v3651 = vunpack.c.h.b16 %v1454
        %v3652 = vunpack.c.l.b16 %v1455
        %v3653 = vunpack.c.h.b16 %v1455
        %v3654 = vunpack.c.l.b16 %v1456
        %v3655 = vunpack.c.h.b16 %v1456
        %v3656 = vunpack.c.l.b16 %v1457
        %v3657 = vunpack.c.h.b16 %v1457
        %v3658 = vunpack.c.l.b16 %v1458
        %v3659 = vunpack.c.h.b16 %v1458
        %v3660 = vunpack.c.l.b16 %v1459
        %v3661 = vunpack.c.h.b16 %v1459
        %v3662 = vunpack.c.l.b16 %v1460
        %v3663 = vunpack.c.h.b16 %v1460
        %v3664 = vunpack.c.l.b16 %v1461
        %v3665 = vunpack.c.h.b16 %v1461
        %v3666 = vunpack.c.l.b16 %v1462
        %v3667 = vunpack.c.h.b16 %v1462
        %v3668 = vunpack.c.l.b16 %v1463
        %v3669 = vunpack.c.h.b16 %v1463
        %v3670 = vunpack.c.l.b16 %v1464
        %v3671 = vunpack.c.h.b16 %v1464
        %v3672 = vunpack.c.l.b16 %v1465
        %v3673 = vunpack.c.h.b16 %v1465
        %v3674 = vunpack.c.l.b16 %v1466
        %v3675 = vunpack.c.h.b16 %v1466
        %v3676 = vunpack.c.l.b16 %v1467
        %v3677 = vunpack.c.h.b16 %v1467
        %v3678 = vunpack.c.l.b16 %v1468
        %v3679 = vunpack.c.h.b16 %v1468
        %v3680 = vunpack.c.l.b16 %v1469
        %v3681 = vunpack.c.h.b16 %v1469
        %v3682 = vunpack.c.l.b16 %v1470
        %v3683 = vunpack.c.h.b16 %v1470
        %v3684 = vunpack.c.l.b16 %v1471
        %v3685 = vunpack.c.h.b16 %v1471
        %v3686 = vunpack.c.l.b16 %v1472
        %v3687 = vunpack.c.h.b16 %v1472
        %v3688 = vunpack.c.l.b16 %v1473
        %v3689 = vunpack.c.h.b16 %v1473
        %v3690 = vunpack.c.l.b16 %v1474
        %v3691 = vunpack.c.h.b16 %v1474
        %v3692 = vunpack.c.l.b16 %v1475
        %v3693 = vunpack.c.h.b16 %v1475
        %v3694 = vunpack.c.l.b16 %v1476
        %v3695 = vunpack.c.h.b16 %v1476
        %v3696 = vunpack.c.l.b16 %v1477
        %v3697 = vunpack.c.h.b16 %v1477
        %v3698 = vunpack.c.l.b16 %v1478
        %v3699 = vunpack.c.h.b16 %v1478
        %v3700 = vunpack.c.l.b16 %v1479
        %v3701 = vunpack.c.h.b16 %v1479
        %v3702 = vunpack.c.l.b16 %v1480
        %v3703 = vunpack.c.h.b16 %v1480
        %v3704 = vunpack.c.l.b16 %v1481
        %v3705 = vunpack.c.h.b16 %v1481
        %v3706 = vunpack.c.l.b16 %v1482
        %v3707 = vunpack.c.h.b16 %v1482
        %v3708 = vunpack.c.l.b16 %v1483
        %v3709 = vunpack.c.h.b16 %v1483
        %v3710 = vunpack.c.l.b16 %v1484
        %v3711 = vunpack.c.h.b16 %v1484
        %v3712 = vunpack.c.l.b16 %v1485
        %v3713 = vunpack.c.h.b16 %v1485
        %v3714 = vunpack.c.l.b16 %v1486
        %v3715 = vunpack.c.h.b16 %v1486
        %v3716 = vunpack.c.l.b16 %v1487
        %v3717 = vunpack.c.h.b16 %v1487
        %v3718 = vunpack.c.l.b16 %v1488
        %v3719 = vunpack.c.h.b16 %v1488
        %v3720 = vunpack.c.l.b16 %v1489
        %v3721 = vunpack.c.h.b16 %v1489
        %v3722 = vunpack.c.l.b16 %v1490
        %v3723 = vunpack.c.h.b16 %v1490
        %v3724 = vunpack.c.l.b16 %v1491
        %v3725 = vunpack.c.h.b16 %v1491
        %v3726 = vunpack.c.l.b16 %v1492
        %v3727 = vunpack.c.h.b16 %v1492
        %v3728 = vunpack.c.l.b16 %v1493
        %v3729 = vunpack.c.h.b16 %v1493
        %v3730 = vunpack.c.l.b16 %v1494
        %v3731 = vunpack.c.h.b16 %v1494
        %v3732 = vunpack.c.l.b16 %v1495
        %v3733 = vunpack.c.h.b16 %v1495
        %v3734 = vunpack.c.l.b16 %v1496
        %v3735 = vunpack.c.h.b16 %v1496
        %v3736 = vunpack.c.l.b16 %v1497
        %v3737 = vunpack.c.h.b16 %v1497
        %v3738 = vunpack.c.l.b16 %v1498
        %v3739 = vunpack.c.h.b16 %v1498
        %v3740 = vunpack.c.l.b16 %v1499
        %v3741 = vunpack.c.h.b16 %v1499
        %v3742 = vunpack.c.l.b16 %v1500
        %v3743 = vunpack.c.h.b16 %v1500
        %v3744 = vunpack.c.l.b16 %v1501
        %v3745 = vunpack.c.h.b16 %v1501
        %v3746 = vunpack.c.l.b16 %v1502
        %v3747 = vunpack.c.h.b16 %v1502
        %v3748 = vunpack.c.l.b16 %v1503
        %v3749 = vunpack.c.h.b16 %v1503
        %v3750 = vunpack.c.l.b16 %v1504
        %v3751 = vunpack.c.h.b16 %v1504
        %v3752 = vunpack.c.l.b16 %v1505
        %v3753 = vunpack.c.h.b16 %v1505
        %v3754 = vunpack.c.l.b16 %v1506
        %v3755 = vunpack.c.h.b16 %v1506
        %v3756 = vunpack.c.l.b16 %v1507
        %v3757 = vunpack.c.h.b16 %v1507
        %v3758 = vunpack.c.l.b16 %v1508
        %v3759 = vunpack.c.h.b16 %v1508
        %v3760 = vunpack.c.l.b16 %v1509
        %v3761 = vunpack.c.h.b16 %v1509
        %v3762 = vunpack.c.l.b16 %v1510
        %v3763 = vunpack.c.h.b16 %v1510
        %v3764 = vunpack.c.l.b16 %v1511
        %v3765 = vunpack.c.h.b16 %v1511
        %v3766 = vunpack.c.l.b16 %v1512
        %v3767 = vunpack.c.h.b16 %v1512
        %v3768 = vunpack.c.l.b16 %v1513
        %v3769 = vunpack.c.h.b16 %v1513
        %v3770 = vunpack.c.l.b16 %v1514
        %v3771 = vunpack.c.h.b16 %v1514
        %v3772 = vunpack.c.l.b16 %v1515
        %v3773 = vunpack.c.h.b16 %v1515
        %v3774 = vunpack.c.l.b16 %v1516
        %v3775 = vunpack.c.h.b16 %v1516
        %v3776 = vunpack.c.l.b16 %v1517
        %v3777 = vunpack.c.h.b16 %v1517
        %v3778 = vunpack.c.l.b16 %v1518
        %v3779 = vunpack.c.h.b16 %v1518
        %v3780 = vunpack.c.l.b16 %v1519
        %v3781 = vunpack.c.h.b16 %v1519
        %v3782 = vunpack.c.l.b16 %v1520
        %v3783 = vunpack.c.h.b16 %v1520
        %v3784 = vunpack.c.l.b16 %v1521
        %v3785 = vunpack.c.h.b16 %v1521
        %v3786 = vunpack.c.l.b16 %v1522
        %v3787 = vunpack.c.h.b16 %v1522
        %v3788 = vunpack.c.l.b16 %v1523
        %v3789 = vunpack.c.h.b16 %v1523
        %v3790 = vunpack.c.l.b16 %v1524
        %v3791 = vunpack.c.h.b16 %v1524
        %v3792 = vunpack.c.l.b16 %v1525
        %v3793 = vunpack.c.h.b16 %v1525
        %v3794 = vunpack.c.l.b16 %v1526
        %v3795 = vunpack.c.h.b16 %v1526
        %v3796 = vunpack.c.l.b16 %v1527
        %v3797 = vunpack.c.h.b16 %v1527
        %v3798 = vunpack.c.l.b16 %v1528
        %v3799 = vunpack.c.h.b16 %v1528
        %v3800 = vunpack.c.l.b16 %v1529
        %v3801 = vunpack.c.h.b16 %v1529
        %v3802 = vunpack.c.l.b16 %v1530
        %v3803 = vunpack.c.h.b16 %v1530
        %v3804 = vunpack.c.l.b16 %v1531
        %v3805 = vunpack.c.h.b16 %v1531
        %v3806 = vunpack.c.l.b16 %v1532
        %v3807 = vunpack.c.h.b16 %v1532
        %v3808 = vunpack.c.l.b16 %v1533
        %v3809 = vunpack.c.h.b16 %v1533
        %v3810 = vunpack.c.l.b16 %v1534
        %v3811 = vunpack.c.h.b16 %v1534
        %v3812 = vunpack.c.l.b16 %v1535
        %v3813 = vunpack.c.h.b16 %v1535
        %v3814 = vunpack.c.l.b16 %v1536
        %v3815 = vunpack.c.h.b16 %v1536
        %v3816 = vunpack.c.l.b16 %v1537
        %v3817 = vunpack.c.h.b16 %v1537
        %v3818 = vunpack.c.l.b16 %v1538
        %v3819 = vunpack.c.h.b16 %v1538
        %v3820 = vunpack.c.l.b16 %v1539
        %v3821 = vunpack.c.h.b16 %v1539
        %v3822 = vunpack.c.l.b16 %v1540
        %v3823 = vunpack.c.h.b16 %v1540
        %v3824 = vunpack.c.l.b16 %v1541
        %v3825 = vunpack.c.h.b16 %v1541
        %v3826 = vunpack.c.l.b16 %v1542
        %v3827 = vunpack.c.h.b16 %v1542
        %v3828 = vunpack.c.l.b16 %v1543
        %v3829 = vunpack.c.h.b16 %v1543
        %v3830 = vunpack.c.l.b16 %v1544
        %v3831 = vunpack.c.h.b16 %v1544
        %v3832 = vunpack.c.l.b16 %v1545
        %v3833 = vunpack.c.h.b16 %v1545
        %v3834 = vunpack.c.l.b16 %v1546
        %v3835 = vunpack.c.h.b16 %v1546
        %v3836 = vunpack.c.l.b16 %v1547
        %v3837 = vunpack.c.h.b16 %v1547
        %v3838 = vunpack.c.l.b16 %v1548
        %v3839 = vunpack.c.h.b16 %v1548
        %v3840 = vunpack.c.l.b16 %v1549
        %v3841 = vunpack.c.h.b16 %v1549
        %v3842 = vunpack.c.l.b16 %v1550
        %v3843 = vunpack.c.h.b16 %v1550
        %v3844 = vunpack.c.l.b16 %v1551
        %v3845 = vunpack.c.h.b16 %v1551
        %v3846 = vunpack.c.l.b16 %v1552
        %v3847 = vunpack.c.h.b16 %v1552
        %v3848 = vunpack.c.l.b16 %v1553
        %v3849 = vunpack.c.h.b16 %v1553
        %v3850 = vunpack.c.l.b16 %v1554
        %v3851 = vunpack.c.h.b16 %v1554
        %v3852 = vunpack.c.l.b16 %v1555
        %v3853 = vunpack.c.h.b16 %v1555
        %v3854 = vunpack.c.l.b16 %v1556
        %v3855 = vunpack.c.h.b16 %v1556
        %v3856 = vunpack.c.l.b16 %v1557
        %v3857 = vunpack.c.h.b16 %v1557
        %v3858 = vunpack.c.l.b16 %v1558
        %v3859 = vunpack.c.h.b16 %v1558
        %v3860 = vunpack.c.l.b16 %v1559
        %v3861 = vunpack.c.h.b16 %v1559
        %v3862 = vunpack.c.l.b16 %v1560
        %v3863 = vunpack.c.h.b16 %v1560
        %v3864 = vunpack.c.l.b16 %v1561
        %v3865 = vunpack.c.h.b16 %v1561
        %v3866 = vunpack.c.l.b16 %v1562
        %v3867 = vunpack.c.h.b16 %v1562
        %v3868 = vunpack.c.l.b16 %v1563
        %v3869 = vunpack.c.h.b16 %v1563
        %v3870 = vunpack.c.l.b16 %v1564
        %v3871 = vunpack.c.h.b16 %v1564
        %v3872 = vunpack.c.l.b16 %v1565
        %v3873 = vunpack.c.h.b16 %v1565
        %v3874 = vunpack.c.l.b16 %v1566
        %v3875 = vunpack.c.h.b16 %v1566
        %v3876 = vunpack.c.l.b16 %v1567
        %v3877 = vunpack.c.h.b16 %v1567
        %v3878 = vunpack.c.l.b16 %v1568
        %v3879 = vunpack.c.h.b16 %v1568
        %v3880 = vunpack.c.l.b16 %v1569
        %v3881 = vunpack.c.h.b16 %v1569
        %v3882 = vunpack.c.l.b16 %v1570
        %v3883 = vunpack.c.h.b16 %v1570
        %v3884 = vunpack.c.l.b16 %v1571
        %v3885 = vunpack.c.h.b16 %v1571
        %v3886 = vunpack.c.l.b16 %v1572
        %v3887 = vunpack.c.h.b16 %v1572
        %v3888 = vunpack.c.l.b16 %v1573
        %v3889 = vunpack.c.h.b16 %v1573
        %v3890 = vunpack.c.l.b16 %v1574
        %v3891 = vunpack.c.h.b16 %v1574
        %v3892 = vunpack.c.l.b16 %v1575
        %v3893 = vunpack.c.h.b16 %v1575
        %v3894 = vunpack.c.l.b16 %v1576
        %v3895 = vunpack.c.h.b16 %v1576
        %v3896 = vunpack.c.l.b16 %v1577
        %v3897 = vunpack.c.h.b16 %v1577
        %v3898 = vunpack.c.l.b16 %v1578
        %v3899 = vunpack.c.h.b16 %v1578
        %v3900 = vpack.c.b16 %v3404, %v3388
        %v3901 = vpack.c.b16 %v3405, %v3389
        %v3902 = vpack.c.b16 %v3406, %v3390
        %v3903 = vpack.c.b16 %v3407, %v3391
        %v3904 = vpack.c.b16 %v3408, %v3392
        %v3905 = vpack.c.b16 %v3409, %v3393
        %v3906 = vpack.c.b16 %v3410, %v3394
        %v3907 = vpack.c.b16 %v3411, %v3395
        %v3908 = vpack.c.b16 %v3412, %v3396
        %v3909 = vpack.c.b16 %v3413, %v3397
        %v3910 = vpack.c.b16 %v3414, %v3398
        %v3911 = vpack.c.b16 %v3415, %v3399
        %v3912 = vpack.c.b16 %v3416, %v3400
        %v3913 = vpack.c.b16 %v3417, %v3401
        %v3914 = vpack.c.b16 %v3418, %v3402
        %v3915 = vpack.c.b16 %v3419, %v3403
        %v3916 = vpack.c.b16 %v3436, %v3420
        %v3917 = vpack.c.b16 %v3437, %v3421
        %v3918 = vpack.c.b16 %v3438, %v3422
        %v3919 = vpack.c.b16 %v3439, %v3423
        %v3920 = vpack.c.b16 %v3440, %v3424
        %v3921 = vpack.c.b16 %v3441, %v3425
        %v3922 = vpack.c.b16 %v3442, %v3426
        %v3923 = vpack.c.b16 %v3443, %v3427
        %v3924 = vpack.c.b16 %v3444, %v3428
        %v3925 = vpack.c.b16 %v3445, %v3429
        %v3926 = vpack.c.b16 %v3446, %v3430
        %v3927 = vpack.c.b16 %v3447, %v3431
        %v3928 = vpack.c.b16 %v3448, %v3432
        %v3929 = vpack.c.b16 %v3449, %v3433
        %v3930 = vpack.c.b16 %v3450, %v3434
        %v3931 = vpack.c.b16 %v3451, %v3435
        %v3932 = vpack.c.b16 %v3468, %v3452
        %v3933 = vpack.c.b16 %v3469, %v3453
        %v3934 = vpack.c.b16 %v3470, %v3454
        %v3935 = vpack.c.b16 %v3471, %v3455
        %v3936 = vpack.c.b16 %v3472, %v3456
        %v3937 = vpack.c.b16 %v3473, %v3457
        %v3938 = vpack.c.b16 %v3474, %v3458
        %v3939 = vpack.c.b16 %v3475, %v3459
        %v3940 = vpack.c.b16 %v3476, %v3460
        %v3941 = vpack.c.b16 %v3477, %v3461
        %v3942 = vpack.c.b16 %v3478, %v3462
        %v3943 = vpack.c.b16 %v3479, %v3463
        %v3944 = vpack.c.b16 %v3480, %v3464
        %v3945 = vpack.c.b16 %v3481, %v3465
        %v3946 = vpack.c.b16 %v3482, %v3466
        %v3947 = vpack.c.b16 %v3483, %v3467
        %v3948 = vpack.c.b16 %v3500, %v3484
        %v3949 = vpack.c.b16 %v3501, %v3485
        %v3950 = vpack.c.b16 %v3502, %v3486
        %v3951 = vpack.c.b16 %v3503, %v3487
        %v3952 = vpack.c.b16 %v3504, %v3488
        %v3953 = vpack.c.b16 %v3505, %v3489
        %v3954 = vpack.c.b16 %v3506, %v3490
        %v3955 = vpack.c.b16 %v3507, %v3491
        %v3956 = vpack.c.b16 %v3508, %v3492
        %v3957 = vpack.c.b16 %v3509, %v3493
        %v3958 = vpack.c.b16 %v3510, %v3494
        %v3959 = vpack.c.b16 %v3511, %v3495
        %v3960 = vpack.c.b16 %v3512, %v3496
        %v3961 = vpack.c.b16 %v3513, %v3497
        %v3962 = vpack.c.b16 %v3514, %v3498
        %v3963 = vpack.c.b16 %v3515, %v3499
        %v3964 = vpack.c.b16 %v3532, %v3516
        %v3965 = vpack.c.b16 %v3533, %v3517
        %v3966 = vpack.c.b16 %v3534, %v3518
        %v3967 = vpack.c.b16 %v3535, %v3519
        %v3968 = vpack.c.b16 %v3536, %v3520
        %v3969 = vpack.c.b16 %v3537, %v3521
        %v3970 = vpack.c.b16 %v3538, %v3522
        %v3971 = vpack.c.b16 %v3539, %v3523
        %v3972 = vpack.c.b16 %v3540, %v3524
        %v3973 = vpack.c.b16 %v3541, %v3525
        %v3974 = vpack.c.b16 %v3542, %v3526
        %v3975 = vpack.c.b16 %v3543, %v3527
        %v3976 = vpack.c.b16 %v3544, %v3528
        %v3977 = vpack.c.b16 %v3545, %v3529
        %v3978 = vpack.c.b16 %v3546, %v3530
        %v3979 = vpack.c.b16 %v3547, %v3531
        %v3980 = vpack.c.b16 %v3564, %v3548
        %v3981 = vpack.c.b16 %v3565, %v3549
        %v3982 = vpack.c.b16 %v3566, %v3550
        %v3983 = vpack.c.b16 %v3567, %v3551
        %v3984 = vpack.c.b16 %v3568, %v3552
        %v3985 = vpack.c.b16 %v3569, %v3553
        %v3986 = vpack.c.b16 %v3570, %v3554
        %v3987 = vpack.c.b16 %v3571, %v3555
        %v3988 = vpack.c.b16 %v3572, %v3556
        %v3989 = vpack.c.b16 %v3573, %v3557
        %v3990 = vpack.c.b16 %v3574, %v3558
        %v3991 = vpack.c.b16 %v3575, %v3559
        %v3992 = vpack.c.b16 %v3576, %v3560
        %v3993 = vpack.c.b16 %v3577, %v3561
        %v3994 = vpack.c.b16 %v3578, %v3562
        %v3995 = vpack.c.b16 %v3579, %v3563
        %v3996 = vpack.c.b16 %v3596, %v3580
        %v3997 = vpack.c.b16 %v3597, %v3581
        %v3998 = vpack.c.b16 %v3598, %v3582
        %v3999 = vpack.c.b16 %v3599, %v3583
        %v4000 = vpack.c.b16 %v3600, %v3584
        %v4001 = vpack.c.b16 %v3601, %v3585
        %v4002 = vpack.c.b16 %v3602, %v3586
        %v4003 = vpack.c.b16 %v3603, %v3587
        %v4004 = vpack.c.b16 %v3604, %v3588
        %v4005 = vpack.c.b16 %v3605, %v3589
        %v4006 = vpack.c.b16 %v3606, %v3590
        %v4007 = vpack.c.b16 %v3607, %v3591
        %v4008 = vpack.c.b16 %v3608, %v3592
        %v4009 = vpack.c.b16 %v3609, %v3593
        %v4010 = vpack.c.b16 %v3610, %v3594
        %v4011 = vpack.c.b16 %v3611, %v3595
        %v4012 = vpack.c.b16 %v3628, %v3612
        %v4013 = vpack.c.b16 %v3629, %v3613
        %v4014 = vpack.c.b16 %v3630, %v3614
        %v4015 = vpack.c.b16 %v3631, %v3615
        %v4016 = vpack.c.b16 %v3632, %v3616
        %v4017 = vpack.c.b16 %v3633, %v3617
        %v4018 = vpack.c.b16 %v3634, %v3618
        %v4019 = vpack.c.b16 %v3635, %v3619
        %v4020 = vpack.c.b16 %v3636, %v3620
        %v4021 = vpack.c.b16 %v3637, %v3621
        %v4022 = vpack.c.b16 %v3638, %v3622
        %v4023 = vpack.c.b16 %v3639, %v3623
        %v4024 = vpack.c.b16 %v3640, %v3624
        %v4025 = vpack.c.b16 %v3641, %v3625
        %v4026 = vpack.c.b16 %v3642, %v3626
        %v4027 = vpack.c.b16 %v3643, %v3627
        %v4028 = vpack.c.b16 %v3660, %v3644
        %v4029 = vpack.c.b16 %v3661, %v3645
        %v4030 = vpack.c.b16 %v3662, %v3646
        %v4031 = vpack.c.b16 %v3663, %v3647
        %v4032 = vpack.c.b16 %v3664, %v3648
        %v4033 = vpack.c.b16 %v3665, %v3649
        %v4034 = vpack.c.b16 %v3666, %v3650
        %v4035 = vpack.c.b16 %v3667, %v3651
        %v4036 = vpack.c.b16 %v3668, %v3652
        %v4037 = vpack.c.b16 %v3669, %v3653
        %v4038 = vpack.c.b16 %v3670, %v3654
        %v4039 = vpack.c.b16 %v3671, %v3655
        %v4040 = vpack.c.b16 %v3672, %v3656
        %v4041 = vpack.c.b16 %v3673, %v3657
        %v4042 = vpack.c.b16 %v3674, %v3658
        %v4043 = vpack.c.b16 %v3675, %v3659
        %v4044 = vpack.c.b16 %v3692, %v3676
        %v4045 = vpack.c.b16 %v3693, %v3677
        %v4046 = vpack.c.b16 %v3694, %v3678
        %v4047 = vpack.c.b16 %v3695, %v3679
        %v4048 = vpack.c.b16 %v3696, %v3680
        %v4049 = vpack.c.b16 %v3697, %v3681
        %v4050 = vpack.c.b16 %v3698, %v3682
        %v4051 = vpack.c.b16 %v3699, %v3683
        %v4052 = vpack.c.b16 %v3700, %v3684
        %v4053 = vpack.c.b16 %v3701, %v3685
        %v4054 = vpack.c.b16 %v3702, %v3686
        %v4055 = vpack.c.b16 %v3703, %v3687
        %v4056 = vpack.c.b16 %v3704, %v3688
        %v4057 = vpack.c.b16 %v3705, %v3689
        %v4058 = vpack.c.b16 %v3706, %v3690
        %v4059 = vpack.c.b16 %v3707, %v3691
        %v4060 = vpack.c.b16 %v3724, %v3708
        %v4061 = vpack.c.b16 %v3725, %v3709
        %v4062 = vpack.c.b16 %v3726, %v3710
        %v4063 = vpack.c.b16 %v3727, %v3711
        %v4064 = vpack.c.b16 %v3728, %v3712
        %v4065 = vpack.c.b16 %v3729, %v3713
        %v4066 = vpack.c.b16 %v3730, %v3714
        %v4067 = vpack.c.b16 %v3731, %v3715
        %v4068 = vpack.c.b16 %v3732, %v3716
        %v4069 = vpack.c.b16 %v3733, %v3717
        %v4070 = vpack.c.b16 %v3734, %v3718
        %v4071 = vpack.c.b16 %v3735, %v3719
        %v4072 = vpack.c.b16 %v3736, %v3720
        %v4073 = vpack.c.b16 %v3737, %v3721
        %v4074 = vpack.c.b16 %v3738, %v3722
        %v4075 = vpack.c.b16 %v3739, %v3723
        %v4076 = vpack.c.b16 %v3756, %v3740
        %v4077 = vpack.c.b16 %v3757, %v3741
        %v4078 = vpack.c.b16 %v3758, %v3742
        %v4079 = vpack.c.b16 %v3759, %v3743
        %v4080 = vpack.c.b16 %v3760, %v3744
        %v4081 = vpack.c.b16 %v3761, %v3745
        %v4082 = vpack.c.b16 %v3762, %v3746
        %v4083 = vpack.c.b16 %v3763, %v3747
        %v4084 = vpack.c.b16 %v3764, %v3748
        %v4085 = vpack.c.b16 %v3765, %v3749
        %v4086 = vpack.c.b16 %v3766, %v3750
        %v4087 = vpack.c.b16 %v3767, %v3751
        %v4088 = vpack.c.b16 %v3768, %v3752
        %v4089 = vpack.c.b16 %v3769, %v3753
        %v4090 = vpack.c.b16 %v3770, %v3754
        %v4091 = vpack.c.b16 %v3771, %v3755
        %v4092 = vpack.c.b16 %v3788, %v3772
        %v4093 = vpack.c.b16 %v3789, %v3773
        %v4094 = vpack.c.b16 %v3790, %v3774
        %v4095 = vpack.c.b16 %v3791, %v3775
        %v4096 = vpack.c.b16 %v3792, %v3776
        %v4097 = vpack.c.b16 %v3793, %v3777
        %v4098 = vpack.c.b16 %v3794, %v3778
        %v4099 = vpack.c.b16 %v3795, %v3779
        %v4100 = vpack.c.b16 %v3796, %v3780
        %v4101 = vpack.c.b16 %v3797, %v3781
        %v4102 = vpack.c.b16 %v3798, %v3782
        %v4103 = vpack.c.b16 %v3799, %v3783
        %v4104 = vpack.c.b16 %v3800, %v3784
        %v4105 = vpack.c.b16 %v3801, %v3785
        %v4106 = vpack.c.b16 %v3802, %v3786
        %v4107 = vpack.c.b16 %v3803, %v3787
        %v4108 = vpack.c.b16 %v3820, %v3804
        %v4109 = vpack.c.b16 %v3821, %v3805
        %v4110 = vpack.c.b16 %v3822, %v3806
        %v4111 = vpack.c.b16 %v3823, %v3807
        %v4112 = vpack.c.b16 %v3824, %v3808
        %v4113 = vpack.c.b16 %v3825, %v3809
        %v4114 = vpack.c.b16 %v3826, %v3810
        %v4115 = vpack.c.b16 %v3827, %v3811
        %v4116 = vpack.c.b16 %v3828, %v3812
        %v4117 = vpack.c.b16 %v3829, %v3813
        %v4118 = vpack.c.b16 %v3830, %v3814
        %v4119 = vpack.c.b16 %v3831, %v3815
        %v4120 = vpack.c.b16 %v3832, %v3816
        %v4121 = vpack.c.b16 %v3833, %v3817
        %v4122 = vpack.c.b16 %v3834, %v3818
        %v4123 = vpack.c.b16 %v3835, %v3819
        %v4124 = vpack.c.b16 %v3852, %v3836
        %v4125 = vpack.c.b16 %v3853, %v3837
        %v4126 = vpack.c.b16 %v3854, %v3838
        %v4127 = vpack.c.b16 %v3855, %v3839
        %v4128 = vpack.c.b16 %v3856, %v3840
        %v4129 = vpack.c.b16 %v3857, %v3841
        %v4130 = vpack.c.b16 %v3858, %v3842
        %v4131 = vpack.c.b16 %v3859, %v3843
        %v4132 = vpack.c.b16 %v3860, %v3844
        %v4133 = vpack.c.b16 %v3861, %v3845
        %v4134 = vpack.c.b16 %v3862, %v3846
        %v4135 = vpack.c.b16 %v3863, %v3847
        %v4136 = vpack.c.b16 %v3864, %v3848
        %v4137 = vpack.c.b16 %v3865, %v3849
        %v4138 = vpack.c.b16 %v3866, %v3850
        %v4139 = vpack.c.b16 %v3867, %v3851
        %v4140 = vpack.c.b16 %v3884, %v3868
        %v4141 = vpack.c.b16 %v3885, %v3869
        %v4142 = vpack.c.b16 %v3886, %v3870
        %v4143 = vpack.c.b16 %v3887, %v3871
        %v4144 = vpack.c.b16 %v3888, %v3872
        %v4145 = vpack.c.b16 %v3889, %v3873
        %v4146 = vpack.c.b16 %v3890, %v3874
        %v4147 = vpack.c.b16 %v3891, %v3875
        %v4148 = vpack.c.b16 %v3892, %v3876
        %v4149 = vpack.c.b16 %v3893, %v3877
        %v4150 = vpack.c.b16 %v3894, %v3878
        %v4151 = vpack.c.b16 %v3895, %v3879
        %v4152 = vpack.c.b16 %v3896, %v3880
        %v4153 = vpack.c.b16 %v3897, %v3881
        %v4154 = vpack.c.b16 %v3898, %v3882
        %v4155 = vpack.c.b16 %v3899, %v3883
        %4412 = vmatpush.bf16.msra.mxu0 %v4012
        %4413 = vmatpush.bf16.msra.mxu0 %v3996
        %4414 = vmatpush.bf16.msra.mxu0 %v3980
        %4415 = vmatpush.bf16.msra.mxu0 %v3964
        %4416 = vmatpush.bf16.msra.mxu0 %v3948
        %4417 = vmatpush.bf16.msra.mxu0 %v3932
        %4418 = vmatpush.bf16.msra.mxu0 %v3916
        %4419 = vmatpush.bf16.msra.mxu0 %v3900
        %4420 = vmatmul.bf16.gmra.mxu0 %v3096
        %v4421 = vpop.f32.mrf.mxu0
        %v4422 = vadd.f32 %v3100, %v4421
        %v4423 = vpop.f32.mrf.mxu0
        %v4424 = vadd.f32 %v3100, %v4423
        %4425 = vdwg.mxu0
        %4426 = vmatpush.bf16.msra.mxu0 %v4140
        %4427 = vmatpush.bf16.msra.mxu0 %v4124
        %4428 = vmatpush.bf16.msra.mxu0 %v4108
        %4429 = vmatpush.bf16.msra.mxu0 %v4092
        %4430 = vmatpush.bf16.msra.mxu0 %v4076
        %4431 = vmatpush.bf16.msra.mxu0 %v4060
        %4432 = vmatpush.bf16.msra.mxu0 %v4044
        %4433 = vmatpush.bf16.msra.mxu0 %v4028
        %4434 = vmatmul.bf16.gmra.mxu0 %v3097
        %v4435 = vpop.f32.mrf.mxu0
        %v4436 = vadd.f32 %v4422, %v4435
        %v4437 = vpop.f32.mrf.mxu0
        %v4438 = vadd.f32 %v4424, %v4437
        %4439 = vdwg.mxu0
        %4440 = vmatpush.bf16.msra.mxu0 %v4013
        %4441 = vmatpush.bf16.msra.mxu0 %v3997
        %4442 = vmatpush.bf16.msra.mxu0 %v3981
        %4443 = vmatpush.bf16.msra.mxu0 %v3965
        %4444 = vmatpush.bf16.msra.mxu0 %v3949
        %4445 = vmatpush.bf16.msra.mxu0 %v3933
        %4446 = vmatpush.bf16.msra.mxu0 %v3917
        %4447 = vmatpush.bf16.msra.mxu0 %v3901
        %4448 = vmatmul.bf16.gmra.mxu0 %v3096
        %v4449 = vpop.f32.mrf.mxu0
        %v4450 = vadd.f32 %v3101, %v4449
        %v4451 = vpop.f32.mrf.mxu0
        %v4452 = vadd.f32 %v3101, %v4451
        %4453 = vdwg.mxu0
        %4454 = vmatpush.bf16.msra.mxu0 %v4141
        %4455 = vmatpush.bf16.msra.mxu0 %v4125
        %4456 = vmatpush.bf16.msra.mxu0 %v4109
        %4457 = vmatpush.bf16.msra.mxu0 %v4093
        %4458 = vmatpush.bf16.msra.mxu0 %v4077
        %4459 = vmatpush.bf16.msra.mxu0 %v4061
        %4460 = vmatpush.bf16.msra.mxu0 %v4045
        %4461 = vmatpush.bf16.msra.mxu0 %v4029
        %4462 = vmatmul.bf16.gmra.mxu0 %v3097
        %v4463 = vpop.f32.mrf.mxu0
        %v4464 = vadd.f32 %v4450, %v4463
        %v4465 = vpop.f32.mrf.mxu0
        %v4466 = vadd.f32 %v4452, %v4465
        %4467 = vdwg.mxu0
        %4468 = vmatpush.bf16.msra.mxu0 %v4014
        %4469 = vmatpush.bf16.msra.mxu0 %v3998
        %4470 = vmatpush.bf16.msra.mxu0 %v3982
        %4471 = vmatpush.bf16.msra.mxu0 %v3966
        %4472 = vmatpush.bf16.msra.mxu0 %v3950
        %4473 = vmatpush.bf16.msra.mxu0 %v3934
        %4474 = vmatpush.bf16.msra.mxu0 %v3918
        %4475 = vmatpush.bf16.msra.mxu0 %v3902
        %4476 = vmatmul.bf16.gmra.mxu0 %v3096
        %v4477 = vpop.f32.mrf.mxu0
        %v4478 = vadd.f32 %v3102, %v4477
        %v4479 = vpop.f32.mrf.mxu0
        %v4480 = vadd.f32 %v3102, %v4479
        %4481 = vdwg.mxu0
        %4482 = vmatpush.bf16.msra.mxu0 %v4142
        %4483 = vmatpush.bf16.msra.mxu0 %v4126
        %4484 = vmatpush.bf16.msra.mxu0 %v4110
        %4485 = vmatpush.bf16.msra.mxu0 %v4094
        %4486 = vmatpush.bf16.msra.mxu0 %v4078
        %4487 = vmatpush.bf16.msra.mxu0 %v4062
        %4488 = vmatpush.bf16.msra.mxu0 %v4046
        %4489 = vmatpush.bf16.msra.mxu0 %v4030
        %4490 = vmatmul.bf16.gmra.mxu0 %v3097
        %v4491 = vpop.f32.mrf.mxu0
        %v4492 = vadd.f32 %v4478, %v4491
        %v4493 = vpop.f32.mrf.mxu0
        %v4494 = vadd.f32 %v4480, %v4493
        %4495 = vdwg.mxu0
        %4496 = vmatpush.bf16.msra.mxu0 %v4015
        %4497 = vmatpush.bf16.msra.mxu0 %v3999
        %4498 = vmatpush.bf16.msra.mxu0 %v3983
        %4499 = vmatpush.bf16.msra.mxu0 %v3967
        %4500 = vmatpush.bf16.msra.mxu0 %v3951
        %4501 = vmatpush.bf16.msra.mxu0 %v3935
        %4502 = vmatpush.bf16.msra.mxu0 %v3919
        %4503 = vmatpush.bf16.msra.mxu0 %v3903
        %4504 = vmatmul.bf16.gmra.mxu0 %v3096
        %v4505 = vpop.f32.mrf.mxu0
        %v4506 = vadd.f32 %v3103, %v4505
        %v4507 = vpop.f32.mrf.mxu0
        %v4508 = vadd.f32 %v3103, %v4507
        %4509 = vdwg.mxu0
        %4510 = vmatpush.bf16.msra.mxu0 %v4143
        %4511 = vmatpush.bf16.msra.mxu0 %v4127
        %4512 = vmatpush.bf16.msra.mxu0 %v4111
        %4513 = vmatpush.bf16.msra.mxu0 %v4095
        %4514 = vmatpush.bf16.msra.mxu0 %v4079
        %4515 = vmatpush.bf16.msra.mxu0 %v4063
        %4516 = vmatpush.bf16.msra.mxu0 %v4047
        %4517 = vmatpush.bf16.msra.mxu0 %v4031
        %4518 = vmatmul.bf16.gmra.mxu0 %v3097
        %v4519 = vpop.f32.mrf.mxu0
        %v4520 = vadd.f32 %v4506, %v4519
        %v4521 = vpop.f32.mrf.mxu0
        %v4522 = vadd.f32 %v4508, %v4521
        %4523 = vdwg.mxu0
        %4524 = vmatpush.bf16.msra.mxu0 %v4016
        %4525 = vmatpush.bf16.msra.mxu0 %v4000
        %4526 = vmatpush.bf16.msra.mxu0 %v3984
        %4527 = vmatpush.bf16.msra.mxu0 %v3968
        %4528 = vmatpush.bf16.msra.mxu0 %v3952
        %4529 = vmatpush.bf16.msra.mxu0 %v3936
        %4530 = vmatpush.bf16.msra.mxu0 %v3920
        %4531 = vmatpush.bf16.msra.mxu0 %v3904
        %4532 = vmatmul.bf16.gmra.mxu0 %v3096
        %v4533 = vpop.f32.mrf.mxu0
        %v4534 = vadd.f32 %v3104, %v4533
        %v4535 = vpop.f32.mrf.mxu0
        %v4536 = vadd.f32 %v3104, %v4535
        %4537 = vdwg.mxu0
        %4538 = vmatpush.bf16.msra.mxu0 %v4144
        %4539 = vmatpush.bf16.msra.mxu0 %v4128
        %4540 = vmatpush.bf16.msra.mxu0 %v4112
        %4541 = vmatpush.bf16.msra.mxu0 %v4096
        %4542 = vmatpush.bf16.msra.mxu0 %v4080
        %4543 = vmatpush.bf16.msra.mxu0 %v4064
        %4544 = vmatpush.bf16.msra.mxu0 %v4048
        %4545 = vmatpush.bf16.msra.mxu0 %v4032
        %4546 = vmatmul.bf16.gmra.mxu0 %v3097
        %v4547 = vpop.f32.mrf.mxu0
        %v4548 = vadd.f32 %v4534, %v4547
        %v4549 = vpop.f32.mrf.mxu0
        %v4550 = vadd.f32 %v4536, %v4549
        %4551 = vdwg.mxu0
        %4552 = vmatpush.bf16.msra.mxu0 %v4017
        %4553 = vmatpush.bf16.msra.mxu0 %v4001
        %4554 = vmatpush.bf16.msra.mxu0 %v3985
        %4555 = vmatpush.bf16.msra.mxu0 %v3969
        %4556 = vmatpush.bf16.msra.mxu0 %v3953
        %4557 = vmatpush.bf16.msra.mxu0 %v3937
        %4558 = vmatpush.bf16.msra.mxu0 %v3921
        %4559 = vmatpush.bf16.msra.mxu0 %v3905
        %4560 = vmatmul.bf16.gmra.mxu0 %v3096
        %v4561 = vpop.f32.mrf.mxu0
        %v4562 = vadd.f32 %v3105, %v4561
        %v4563 = vpop.f32.mrf.mxu0
        %v4564 = vadd.f32 %v3105, %v4563
        %4565 = vdwg.mxu0
        %4566 = vmatpush.bf16.msra.mxu0 %v4145
        %4567 = vmatpush.bf16.msra.mxu0 %v4129
        %4568 = vmatpush.bf16.msra.mxu0 %v4113
        %4569 = vmatpush.bf16.msra.mxu0 %v4097
        %4570 = vmatpush.bf16.msra.mxu0 %v4081
        %4571 = vmatpush.bf16.msra.mxu0 %v4065
        %4572 = vmatpush.bf16.msra.mxu0 %v4049
        %4573 = vmatpush.bf16.msra.mxu0 %v4033
        %4574 = vmatmul.bf16.gmra.mxu0 %v3097
        %v4575 = vpop.f32.mrf.mxu0
        %v4576 = vadd.f32 %v4562, %v4575
        %v4577 = vpop.f32.mrf.mxu0
        %v4578 = vadd.f32 %v4564, %v4577
        %4579 = vdwg.mxu0
        %4580 = vmatpush.bf16.msra.mxu0 %v4018
        %4581 = vmatpush.bf16.msra.mxu0 %v4002
        %4582 = vmatpush.bf16.msra.mxu0 %v3986
        %4583 = vmatpush.bf16.msra.mxu0 %v3970
        %4584 = vmatpush.bf16.msra.mxu0 %v3954
        %4585 = vmatpush.bf16.msra.mxu0 %v3938
        %4586 = vmatpush.bf16.msra.mxu0 %v3922
        %4587 = vmatpush.bf16.msra.mxu0 %v3906
        %4588 = vmatmul.bf16.gmra.mxu0 %v3096
        %v4589 = vpop.f32.mrf.mxu0
        %v4590 = vadd.f32 %v3106, %v4589
        %v4591 = vpop.f32.mrf.mxu0
        %v4592 = vadd.f32 %v3106, %v4591
        %4593 = vdwg.mxu0
        %4594 = vmatpush.bf16.msra.mxu0 %v4146
        %4595 = vmatpush.bf16.msra.mxu0 %v4130
        %4596 = vmatpush.bf16.msra.mxu0 %v4114
        %4597 = vmatpush.bf16.msra.mxu0 %v4098
        %4598 = vmatpush.bf16.msra.mxu0 %v4082
        %4599 = vmatpush.bf16.msra.mxu0 %v4066
        %4600 = vmatpush.bf16.msra.mxu0 %v4050
        %4601 = vmatpush.bf16.msra.mxu0 %v4034
        %4602 = vmatmul.bf16.gmra.mxu0 %v3097
        %v4603 = vpop.f32.mrf.mxu0
        %v4604 = vadd.f32 %v4590, %v4603
        %v4605 = vpop.f32.mrf.mxu0
        %v4606 = vadd.f32 %v4592, %v4605
        %4607 = vdwg.mxu0
        %4608 = vmatpush.bf16.msra.mxu0 %v4019
        %4609 = vmatpush.bf16.msra.mxu0 %v4003
        %4610 = vmatpush.bf16.msra.mxu0 %v3987
        %4611 = vmatpush.bf16.msra.mxu0 %v3971
        %4612 = vmatpush.bf16.msra.mxu0 %v3955
        %4613 = vmatpush.bf16.msra.mxu0 %v3939
        %4614 = vmatpush.bf16.msra.mxu0 %v3923
        %4615 = vmatpush.bf16.msra.mxu0 %v3907
        %4616 = vmatmul.bf16.gmra.mxu0 %v3096
        %v4617 = vpop.f32.mrf.mxu0
        %v4618 = vadd.f32 %v3107, %v4617
        %v4619 = vpop.f32.mrf.mxu0
        %v4620 = vadd.f32 %v3107, %v4619
        %4621 = vdwg.mxu0
        %4622 = vmatpush.bf16.msra.mxu0 %v4147
        %4623 = vmatpush.bf16.msra.mxu0 %v4131
        %4624 = vmatpush.bf16.msra.mxu0 %v4115
        %4625 = vmatpush.bf16.msra.mxu0 %v4099
        %4626 = vmatpush.bf16.msra.mxu0 %v4083
        %4627 = vmatpush.bf16.msra.mxu0 %v4067
        %4628 = vmatpush.bf16.msra.mxu0 %v4051
        %4629 = vmatpush.bf16.msra.mxu0 %v4035
        %4630 = vmatmul.bf16.gmra.mxu0 %v3097
        %v4631 = vpop.f32.mrf.mxu0
        %v4632 = vadd.f32 %v4618, %v4631
        %v4633 = vpop.f32.mrf.mxu0
        %v4634 = vadd.f32 %v4620, %v4633
        %4635 = vdwg.mxu0
        %4636 = vmatpush.bf16.msra.mxu0 %v4020
        %4637 = vmatpush.bf16.msra.mxu0 %v4004
        %4638 = vmatpush.bf16.msra.mxu0 %v3988
        %4639 = vmatpush.bf16.msra.mxu0 %v3972
        %4640 = vmatpush.bf16.msra.mxu0 %v3956
        %4641 = vmatpush.bf16.msra.mxu0 %v3940
        %4642 = vmatpush.bf16.msra.mxu0 %v3924
        %4643 = vmatpush.bf16.msra.mxu0 %v3908
        %4644 = vmatmul.bf16.gmra.mxu0 %v3096
        %v4645 = vpop.f32.mrf.mxu0
        %v4646 = vadd.f32 %v3108, %v4645
        %v4647 = vpop.f32.mrf.mxu0
        %v4648 = vadd.f32 %v3108, %v4647
        %4649 = vdwg.mxu0
        %4650 = vmatpush.bf16.msra.mxu0 %v4148
        %4651 = vmatpush.bf16.msra.mxu0 %v4132
        %4652 = vmatpush.bf16.msra.mxu0 %v4116
        %4653 = vmatpush.bf16.msra.mxu0 %v4100
        %4654 = vmatpush.bf16.msra.mxu0 %v4084
        %4655 = vmatpush.bf16.msra.mxu0 %v4068
        %4656 = vmatpush.bf16.msra.mxu0 %v4052
        %4657 = vmatpush.bf16.msra.mxu0 %v4036
        %4658 = vmatmul.bf16.gmra.mxu0 %v3097
        %v4659 = vpop.f32.mrf.mxu0
        %v4660 = vadd.f32 %v4646, %v4659
        %v4661 = vpop.f32.mrf.mxu0
        %v4662 = vadd.f32 %v4648, %v4661
        %4663 = vdwg.mxu0
        %4664 = vmatpush.bf16.msra.mxu0 %v4021
        %4665 = vmatpush.bf16.msra.mxu0 %v4005
        %4666 = vmatpush.bf16.msra.mxu0 %v3989
        %4667 = vmatpush.bf16.msra.mxu0 %v3973
        %4668 = vmatpush.bf16.msra.mxu0 %v3957
        %4669 = vmatpush.bf16.msra.mxu0 %v3941
        %4670 = vmatpush.bf16.msra.mxu0 %v3925
        %4671 = vmatpush.bf16.msra.mxu0 %v3909
        %4672 = vmatmul.bf16.gmra.mxu0 %v3096
        %v4673 = vpop.f32.mrf.mxu0
        %v4674 = vadd.f32 %v3109, %v4673
        %v4675 = vpop.f32.mrf.mxu0
        %v4676 = vadd.f32 %v3109, %v4675
        %4677 = vdwg.mxu0
        %4678 = vmatpush.bf16.msra.mxu0 %v4149
        %4679 = vmatpush.bf16.msra.mxu0 %v4133
        %4680 = vmatpush.bf16.msra.mxu0 %v4117
        %4681 = vmatpush.bf16.msra.mxu0 %v4101
        %4682 = vmatpush.bf16.msra.mxu0 %v4085
        %4683 = vmatpush.bf16.msra.mxu0 %v4069
        %4684 = vmatpush.bf16.msra.mxu0 %v4053
        %4685 = vmatpush.bf16.msra.mxu0 %v4037
        %4686 = vmatmul.bf16.gmra.mxu0 %v3097
        %v4687 = vpop.f32.mrf.mxu0
        %v4688 = vadd.f32 %v4674, %v4687
        %v4689 = vpop.f32.mrf.mxu0
        %v4690 = vadd.f32 %v4676, %v4689
        %4691 = vdwg.mxu0
        %4692 = vmatpush.bf16.msra.mxu0 %v4022
        %4693 = vmatpush.bf16.msra.mxu0 %v4006
        %4694 = vmatpush.bf16.msra.mxu0 %v3990
        %4695 = vmatpush.bf16.msra.mxu0 %v3974
        %4696 = vmatpush.bf16.msra.mxu0 %v3958
        %4697 = vmatpush.bf16.msra.mxu0 %v3942
        %4698 = vmatpush.bf16.msra.mxu0 %v3926
        %4699 = vmatpush.bf16.msra.mxu0 %v3910
        %4700 = vmatmul.bf16.gmra.mxu0 %v3096
        %v4701 = vpop.f32.mrf.mxu0
        %v4702 = vadd.f32 %v3110, %v4701
        %v4703 = vpop.f32.mrf.mxu0
        %v4704 = vadd.f32 %v3110, %v4703
        %4705 = vdwg.mxu0
        %4706 = vmatpush.bf16.msra.mxu0 %v4150
        %4707 = vmatpush.bf16.msra.mxu0 %v4134
        %4708 = vmatpush.bf16.msra.mxu0 %v4118
        %4709 = vmatpush.bf16.msra.mxu0 %v4102
        %4710 = vmatpush.bf16.msra.mxu0 %v4086
        %4711 = vmatpush.bf16.msra.mxu0 %v4070
        %4712 = vmatpush.bf16.msra.mxu0 %v4054
        %4713 = vmatpush.bf16.msra.mxu0 %v4038
        %4714 = vmatmul.bf16.gmra.mxu0 %v3097
        %v4715 = vpop.f32.mrf.mxu0
        %v4716 = vadd.f32 %v4702, %v4715
        %v4717 = vpop.f32.mrf.mxu0
        %v4718 = vadd.f32 %v4704, %v4717
        %4719 = vdwg.mxu0
        %4720 = vmatpush.bf16.msra.mxu0 %v4023
        %4721 = vmatpush.bf16.msra.mxu0 %v4007
        %4722 = vmatpush.bf16.msra.mxu0 %v3991
        %4723 = vmatpush.bf16.msra.mxu0 %v3975
        %4724 = vmatpush.bf16.msra.mxu0 %v3959
        %4725 = vmatpush.bf16.msra.mxu0 %v3943
        %4726 = vmatpush.bf16.msra.mxu0 %v3927
        %4727 = vmatpush.bf16.msra.mxu0 %v3911
        %4728 = vmatmul.bf16.gmra.mxu0 %v3096
        %v4729 = vpop.f32.mrf.mxu0
        %v4730 = vadd.f32 %v3111, %v4729
        %v4731 = vpop.f32.mrf.mxu0
        %v4732 = vadd.f32 %v3111, %v4731
        %4733 = vdwg.mxu0
        %4734 = vmatpush.bf16.msra.mxu0 %v4151
        %4735 = vmatpush.bf16.msra.mxu0 %v4135
        %4736 = vmatpush.bf16.msra.mxu0 %v4119
        %4737 = vmatpush.bf16.msra.mxu0 %v4103
        %4738 = vmatpush.bf16.msra.mxu0 %v4087
        %4739 = vmatpush.bf16.msra.mxu0 %v4071
        %4740 = vmatpush.bf16.msra.mxu0 %v4055
        %4741 = vmatpush.bf16.msra.mxu0 %v4039
        %4742 = vmatmul.bf16.gmra.mxu0 %v3097
        %v4743 = vpop.f32.mrf.mxu0
        %v4744 = vadd.f32 %v4730, %v4743
        %v4745 = vpop.f32.mrf.mxu0
        %v4746 = vadd.f32 %v4732, %v4745
        %4747 = vdwg.mxu0
        %4748 = vmatpush.bf16.msra.mxu0 %v4024
        %4749 = vmatpush.bf16.msra.mxu0 %v4008
        %4750 = vmatpush.bf16.msra.mxu0 %v3992
        %4751 = vmatpush.bf16.msra.mxu0 %v3976
        %4752 = vmatpush.bf16.msra.mxu0 %v3960
        %4753 = vmatpush.bf16.msra.mxu0 %v3944
        %4754 = vmatpush.bf16.msra.mxu0 %v3928
        %4755 = vmatpush.bf16.msra.mxu0 %v3912
        %4756 = vmatmul.bf16.gmra.mxu0 %v3096
        %v4757 = vpop.f32.mrf.mxu0
        %v4758 = vadd.f32 %v3112, %v4757
        %v4759 = vpop.f32.mrf.mxu0
        %v4760 = vadd.f32 %v3112, %v4759
        %4761 = vdwg.mxu0
        %4762 = vmatpush.bf16.msra.mxu0 %v4152
        %4763 = vmatpush.bf16.msra.mxu0 %v4136
        %4764 = vmatpush.bf16.msra.mxu0 %v4120
        %4765 = vmatpush.bf16.msra.mxu0 %v4104
        %4766 = vmatpush.bf16.msra.mxu0 %v4088
        %4767 = vmatpush.bf16.msra.mxu0 %v4072
        %4768 = vmatpush.bf16.msra.mxu0 %v4056
        %4769 = vmatpush.bf16.msra.mxu0 %v4040
        %4770 = vmatmul.bf16.gmra.mxu0 %v3097
        %v4771 = vpop.f32.mrf.mxu0
        %v4772 = vadd.f32 %v4758, %v4771
        %v4773 = vpop.f32.mrf.mxu0
        %v4774 = vadd.f32 %v4760, %v4773
        %4775 = vdwg.mxu0
        %4776 = vmatpush.bf16.msra.mxu0 %v4025
        %4777 = vmatpush.bf16.msra.mxu0 %v4009
        %4778 = vmatpush.bf16.msra.mxu0 %v3993
        %4779 = vmatpush.bf16.msra.mxu0 %v3977
        %4780 = vmatpush.bf16.msra.mxu0 %v3961
        %4781 = vmatpush.bf16.msra.mxu0 %v3945
        %4782 = vmatpush.bf16.msra.mxu0 %v3929
        %4783 = vmatpush.bf16.msra.mxu0 %v3913
        %4784 = vmatmul.bf16.gmra.mxu0 %v3096
        %v4785 = vpop.f32.mrf.mxu0
        %v4786 = vadd.f32 %v3113, %v4785
        %v4787 = vpop.f32.mrf.mxu0
        %v4788 = vadd.f32 %v3113, %v4787
        %4789 = vdwg.mxu0
        %4790 = vmatpush.bf16.msra.mxu0 %v4153
        %4791 = vmatpush.bf16.msra.mxu0 %v4137
        %4792 = vmatpush.bf16.msra.mxu0 %v4121
        %4793 = vmatpush.bf16.msra.mxu0 %v4105
        %4794 = vmatpush.bf16.msra.mxu0 %v4089
        %4795 = vmatpush.bf16.msra.mxu0 %v4073
        %4796 = vmatpush.bf16.msra.mxu0 %v4057
        %4797 = vmatpush.bf16.msra.mxu0 %v4041
        %4798 = vmatmul.bf16.gmra.mxu0 %v3097
        %v4799 = vpop.f32.mrf.mxu0
        %v4800 = vadd.f32 %v4786, %v4799
        %v4801 = vpop.f32.mrf.mxu0
        %v4802 = vadd.f32 %v4788, %v4801
        %4803 = vdwg.mxu0
        %4804 = vmatpush.bf16.msra.mxu0 %v4026
        %4805 = vmatpush.bf16.msra.mxu0 %v4010
        %4806 = vmatpush.bf16.msra.mxu0 %v3994
        %4807 = vmatpush.bf16.msra.mxu0 %v3978
        %4808 = vmatpush.bf16.msra.mxu0 %v3962
        %4809 = vmatpush.bf16.msra.mxu0 %v3946
        %4810 = vmatpush.bf16.msra.mxu0 %v3930
        %4811 = vmatpush.bf16.msra.mxu0 %v3914
        %4812 = vmatmul.bf16.gmra.mxu0 %v3096
        %v4813 = vpop.f32.mrf.mxu0
        %v4814 = vadd.f32 %v3114, %v4813
        %v4815 = vpop.f32.mrf.mxu0
        %v4816 = vadd.f32 %v3114, %v4815
        %4817 = vdwg.mxu0
        %4818 = vmatpush.bf16.msra.mxu0 %v4154
        %4819 = vmatpush.bf16.msra.mxu0 %v4138
        %4820 = vmatpush.bf16.msra.mxu0 %v4122
        %4821 = vmatpush.bf16.msra.mxu0 %v4106
        %4822 = vmatpush.bf16.msra.mxu0 %v4090
        %4823 = vmatpush.bf16.msra.mxu0 %v4074
        %4824 = vmatpush.bf16.msra.mxu0 %v4058
        %4825 = vmatpush.bf16.msra.mxu0 %v4042
        %4826 = vmatmul.bf16.gmra.mxu0 %v3097
        %v4827 = vpop.f32.mrf.mxu0
        %v4828 = vadd.f32 %v4814, %v4827
        %v4829 = vpop.f32.mrf.mxu0
        %v4830 = vadd.f32 %v4816, %v4829
        %4831 = vdwg.mxu0
        %4832 = vmatpush.bf16.msra.mxu0 %v4027
        %4833 = vmatpush.bf16.msra.mxu0 %v4011
        %4834 = vmatpush.bf16.msra.mxu0 %v3995
        %4835 = vmatpush.bf16.msra.mxu0 %v3979
        %4836 = vmatpush.bf16.msra.mxu0 %v3963
        %4837 = vmatpush.bf16.msra.mxu0 %v3947
        %4838 = vmatpush.bf16.msra.mxu0 %v3931
        %4839 = vmatpush.bf16.msra.mxu0 %v3915
        %4840 = vmatmul.bf16.gmra.mxu0 %v3096
        %v4841 = vpop.f32.mrf.mxu0
        %v4842 = vadd.f32 %v3115, %v4841
        %v4843 = vpop.f32.mrf.mxu0
        %v4844 = vadd.f32 %v3115, %v4843
        %4845 = vdwg.mxu0
        %4846 = vmatpush.bf16.msra.mxu0 %v4155
        %4847 = vmatpush.bf16.msra.mxu0 %v4139
        %4848 = vmatpush.bf16.msra.mxu0 %v4123
        %4849 = vmatpush.bf16.msra.mxu0 %v4107
        %4850 = vmatpush.bf16.msra.mxu0 %v4091
        %4851 = vmatpush.bf16.msra.mxu0 %v4075
        %4852 = vmatpush.bf16.msra.mxu0 %v4059
        %4853 = vmatpush.bf16.msra.mxu0 %v4043
        %4854 = vmatmul.bf16.gmra.mxu0 %v3097
        %v4855 = vpop.f32.mrf.mxu0
        %v4856 = vadd.f32 %v4842, %v4855
        %v4857 = vpop.f32.mrf.mxu0
        %v4858 = vadd.f32 %v4844, %v4857
        %4859 = vdwg.mxu0
        %v4860 = vmax.f32 %v4436, 0.0
        %v4861 = vmax.f32 %v4464, 0.0
        %v4862 = vmax.f32 %v4492, 0.0
        %v4863 = vmax.f32 %v4520, 0.0
        %v4864 = vmax.f32 %v4548, 0.0
        %v4865 = vmax.f32 %v4576, 0.0
        %v4866 = vmax.f32 %v4604, 0.0
        %v4867 = vmax.f32 %v4632, 0.0
        %v4868 = vmax.f32 %v4660, 0.0
        %v4869 = vmax.f32 %v4688, 0.0
        %v4870 = vmax.f32 %v4716, 0.0
        %v4871 = vmax.f32 %v4744, 0.0
        %v4872 = vmax.f32 %v4772, 0.0
        %v4873 = vmax.f32 %v4800, 0.0
        %v4874 = vmax.f32 %v4828, 0.0
        %v4875 = vmax.f32 %v4856, 0.0
        %v4876 = vmax.f32 %v4438, 0.0
        %v4877 = vmax.f32 %v4466, 0.0
        %v4878 = vmax.f32 %v4494, 0.0
        %v4879 = vmax.f32 %v4522, 0.0
        %v4880 = vmax.f32 %v4550, 0.0
        %v4881 = vmax.f32 %v4578, 0.0
        %v4882 = vmax.f32 %v4606, 0.0
        %v4883 = vmax.f32 %v4634, 0.0
        %v4884 = vmax.f32 %v4662, 0.0
        %v4885 = vmax.f32 %v4690, 0.0
        %v4886 = vmax.f32 %v4718, 0.0
        %v4887 = vmax.f32 %v4746, 0.0
        %v4888 = vmax.f32 %v4774, 0.0
        %v4889 = vmax.f32 %v4802, 0.0
        %v4890 = vmax.f32 %v4830, 0.0
        %v4891 = vmax.f32 %v4858, 0.0
        %v4892 = vpack.c.bf16 %v4876, %v4860
        %v4893 = vpack.c.bf16 %v4877, %v4861
        %v4894 = vpack.c.bf16 %v4878, %v4862
        %v4895 = vpack.c.bf16 %v4879, %v4863
        %v4896 = vpack.c.bf16 %v4880, %v4864
        %v4897 = vpack.c.bf16 %v4881, %v4865
        %v4898 = vpack.c.bf16 %v4882, %v4866
        %v4899 = vpack.c.bf16 %v4883, %v4867
        %v4900 = vpack.c.bf16 %v4884, %v4868
        %v4901 = vpack.c.bf16 %v4885, %v4869
        %v4902 = vpack.c.bf16 %v4886, %v4870
        %v4903 = vpack.c.bf16 %v4887, %v4871
        %v4904 = vpack.c.bf16 %v4888, %v4872
        %v4905 = vpack.c.bf16 %v4889, %v4873
        %v4906 = vpack.c.bf16 %v4890, %v4874
        %v4907 = vpack.c.bf16 %v4891, %v4875
        %v4909 = vperm.slane %v1841, 0
        %v4910 = vperm.slane %v1841, 1
        %v5169 = vunpack.c.l.b16 %v1579
        %v5170 = vunpack.c.h.b16 %v1579
        %v5171 = vunpack.c.l.b16 %v1580
        %v5172 = vunpack.c.h.b16 %v1580
        %v5173 = vunpack.c.l.b16 %v1581
        %v5174 = vunpack.c.h.b16 %v1581
        %v5175 = vunpack.c.l.b16 %v1582
        %v5176 = vunpack.c.h.b16 %v1582
        %v5177 = vunpack.c.l.b16 %v1583
        %v5178 = vunpack.c.h.b16 %v1583
        %v5179 = vunpack.c.l.b16 %v1584
        %v5180 = vunpack.c.h.b16 %v1584
        %v5181 = vunpack.c.l.b16 %v1585
        %v5182 = vunpack.c.h.b16 %v1585
        %v5183 = vunpack.c.l.b16 %v1586
        %v5184 = vunpack.c.h.b16 %v1586
        %v5185 = vunpack.c.l.b16 %v1587
        %v5186 = vunpack.c.h.b16 %v1587
        %v5187 = vunpack.c.l.b16 %v1588
        %v5188 = vunpack.c.h.b16 %v1588
        %v5189 = vunpack.c.l.b16 %v1589
        %v5190 = vunpack.c.h.b16 %v1589
        %v5191 = vunpack.c.l.b16 %v1590
        %v5192 = vunpack.c.h.b16 %v1590
        %v5193 = vunpack.c.l.b16 %v1591
        %v5194 = vunpack.c.h.b16 %v1591
        %v5195 = vunpack.c.l.b16 %v1592
        %v5196 = vunpack.c.h.b16 %v1592
        %v5197 = vunpack.c.l.b16 %v1593
        %v5198 = vunpack.c.h.b16 %v1593
        %v5199 = vunpack.c.l.b16 %v1594
        %v5200 = vunpack.c.h.b16 %v1594
        %v5201 = vunpack.c.l.b16 %v1595
        %v5202 = vunpack.c.h.b16 %v1595
        %v5203 = vunpack.c.l.b16 %v1596
        %v5204 = vunpack.c.h.b16 %v1596
        %v5205 = vunpack.c.l.b16 %v1597
        %v5206 = vunpack.c.h.b16 %v1597
        %v5207 = vunpack.c.l.b16 %v1598
        %v5208 = vunpack.c.h.b16 %v1598
        %v5209 = vunpack.c.l.b16 %v1599
        %v5210 = vunpack.c.h.b16 %v1599
        %v5211 = vunpack.c.l.b16 %v1600
        %v5212 = vunpack.c.h.b16 %v1600
        %v5213 = vunpack.c.l.b16 %v1601
        %v5214 = vunpack.c.h.b16 %v1601
        %v5215 = vunpack.c.l.b16 %v1602
        %v5216 = vunpack.c.h.b16 %v1602
        %v5217 = vunpack.c.l.b16 %v1603
        %v5218 = vunpack.c.h.b16 %v1603
        %v5219 = vunpack.c.l.b16 %v1604
        %v5220 = vunpack.c.h.b16 %v1604
        %v5221 = vunpack.c.l.b16 %v1605
        %v5222 = vunpack.c.h.b16 %v1605
        %v5223 = vunpack.c.l.b16 %v1606
        %v5224 = vunpack.c.h.b16 %v1606
        %v5225 = vunpack.c.l.b16 %v1607
        %v5226 = vunpack.c.h.b16 %v1607
        %v5227 = vunpack.c.l.b16 %v1608
        %v5228 = vunpack.c.h.b16 %v1608
        %v5229 = vunpack.c.l.b16 %v1609
        %v5230 = vunpack.c.h.b16 %v1609
        %v5231 = vunpack.c.l.b16 %v1610
        %v5232 = vunpack.c.h.b16 %v1610
        %v5233 = vunpack.c.l.b16 %v1611
        %v5234 = vunpack.c.h.b16 %v1611
        %v5235 = vunpack.c.l.b16 %v1612
        %v5236 = vunpack.c.h.b16 %v1612
        %v5237 = vunpack.c.l.b16 %v1613
        %v5238 = vunpack.c.h.b16 %v1613
        %v5239 = vunpack.c.l.b16 %v1614
        %v5240 = vunpack.c.h.b16 %v1614
        %v5241 = vunpack.c.l.b16 %v1615
        %v5242 = vunpack.c.h.b16 %v1615
        %v5243 = vunpack.c.l.b16 %v1616
        %v5244 = vunpack.c.h.b16 %v1616
        %v5245 = vunpack.c.l.b16 %v1617
        %v5246 = vunpack.c.h.b16 %v1617
        %v5247 = vunpack.c.l.b16 %v1618
        %v5248 = vunpack.c.h.b16 %v1618
        %v5249 = vunpack.c.l.b16 %v1619
        %v5250 = vunpack.c.h.b16 %v1619
        %v5251 = vunpack.c.l.b16 %v1620
        %v5252 = vunpack.c.h.b16 %v1620
        %v5253 = vunpack.c.l.b16 %v1621
        %v5254 = vunpack.c.h.b16 %v1621
        %v5255 = vunpack.c.l.b16 %v1622
        %v5256 = vunpack.c.h.b16 %v1622
        %v5257 = vunpack.c.l.b16 %v1623
        %v5258 = vunpack.c.h.b16 %v1623
        %v5259 = vunpack.c.l.b16 %v1624
        %v5260 = vunpack.c.h.b16 %v1624
        %v5261 = vunpack.c.l.b16 %v1625
        %v5262 = vunpack.c.h.b16 %v1625
        %v5263 = vunpack.c.l.b16 %v1626
        %v5264 = vunpack.c.h.b16 %v1626
        %v5265 = vunpack.c.l.b16 %v1627
        %v5266 = vunpack.c.h.b16 %v1627
        %v5267 = vunpack.c.l.b16 %v1628
        %v5268 = vunpack.c.h.b16 %v1628
        %v5269 = vunpack.c.l.b16 %v1629
        %v5270 = vunpack.c.h.b16 %v1629
        %v5271 = vunpack.c.l.b16 %v1630
        %v5272 = vunpack.c.h.b16 %v1630
        %v5273 = vunpack.c.l.b16 %v1631
        %v5274 = vunpack.c.h.b16 %v1631
        %v5275 = vunpack.c.l.b16 %v1632
        %v5276 = vunpack.c.h.b16 %v1632
        %v5277 = vunpack.c.l.b16 %v1633
        %v5278 = vunpack.c.h.b16 %v1633
        %v5279 = vunpack.c.l.b16 %v1634
        %v5280 = vunpack.c.h.b16 %v1634
        %v5281 = vunpack.c.l.b16 %v1635
        %v5282 = vunpack.c.h.b16 %v1635
        %v5283 = vunpack.c.l.b16 %v1636
        %v5284 = vunpack.c.h.b16 %v1636
        %v5285 = vunpack.c.l.b16 %v1637
        %v5286 = vunpack.c.h.b16 %v1637
        %v5287 = vunpack.c.l.b16 %v1638
        %v5288 = vunpack.c.h.b16 %v1638
        %v5289 = vunpack.c.l.b16 %v1639
        %v5290 = vunpack.c.h.b16 %v1639
        %v5291 = vunpack.c.l.b16 %v1640
        %v5292 = vunpack.c.h.b16 %v1640
        %v5293 = vunpack.c.l.b16 %v1641
        %v5294 = vunpack.c.h.b16 %v1641
        %v5295 = vunpack.c.l.b16 %v1642
        %v5296 = vunpack.c.h.b16 %v1642
        %v5297 = vunpack.c.l.b16 %v1643
        %v5298 = vunpack.c.h.b16 %v1643
        %v5299 = vunpack.c.l.b16 %v1644
        %v5300 = vunpack.c.h.b16 %v1644
        %v5301 = vunpack.c.l.b16 %v1645
        %v5302 = vunpack.c.h.b16 %v1645
        %v5303 = vunpack.c.l.b16 %v1646
        %v5304 = vunpack.c.h.b16 %v1646
        %v5305 = vunpack.c.l.b16 %v1647
        %v5306 = vunpack.c.h.b16 %v1647
        %v5307 = vunpack.c.l.b16 %v1648
        %v5308 = vunpack.c.h.b16 %v1648
        %v5309 = vunpack.c.l.b16 %v1649
        %v5310 = vunpack.c.h.b16 %v1649
        %v5311 = vunpack.c.l.b16 %v1650
        %v5312 = vunpack.c.h.b16 %v1650
        %v5313 = vunpack.c.l.b16 %v1651
        %v5314 = vunpack.c.h.b16 %v1651
        %v5315 = vunpack.c.l.b16 %v1652
        %v5316 = vunpack.c.h.b16 %v1652
        %v5317 = vunpack.c.l.b16 %v1653
        %v5318 = vunpack.c.h.b16 %v1653
        %v5319 = vunpack.c.l.b16 %v1654
        %v5320 = vunpack.c.h.b16 %v1654
        %v5321 = vunpack.c.l.b16 %v1655
        %v5322 = vunpack.c.h.b16 %v1655
        %v5323 = vunpack.c.l.b16 %v1656
        %v5324 = vunpack.c.h.b16 %v1656
        %v5325 = vunpack.c.l.b16 %v1657
        %v5326 = vunpack.c.h.b16 %v1657
        %v5327 = vunpack.c.l.b16 %v1658
        %v5328 = vunpack.c.h.b16 %v1658
        %v5329 = vunpack.c.l.b16 %v1659
        %v5330 = vunpack.c.h.b16 %v1659
        %v5331 = vunpack.c.l.b16 %v1660
        %v5332 = vunpack.c.h.b16 %v1660
        %v5333 = vunpack.c.l.b16 %v1661
        %v5334 = vunpack.c.h.b16 %v1661
        %v5335 = vunpack.c.l.b16 %v1662
        %v5336 = vunpack.c.h.b16 %v1662
        %v5337 = vunpack.c.l.b16 %v1663
        %v5338 = vunpack.c.h.b16 %v1663
        %v5339 = vunpack.c.l.b16 %v1664
        %v5340 = vunpack.c.h.b16 %v1664
        %v5341 = vunpack.c.l.b16 %v1665
        %v5342 = vunpack.c.h.b16 %v1665
        %v5343 = vunpack.c.l.b16 %v1666
        %v5344 = vunpack.c.h.b16 %v1666
        %v5345 = vunpack.c.l.b16 %v1667
        %v5346 = vunpack.c.h.b16 %v1667
        %v5347 = vunpack.c.l.b16 %v1668
        %v5348 = vunpack.c.h.b16 %v1668
        %v5349 = vunpack.c.l.b16 %v1669
        %v5350 = vunpack.c.h.b16 %v1669
        %v5351 = vunpack.c.l.b16 %v1670
        %v5352 = vunpack.c.h.b16 %v1670
        %v5353 = vunpack.c.l.b16 %v1671
        %v5354 = vunpack.c.h.b16 %v1671
        %v5355 = vunpack.c.l.b16 %v1672
        %v5356 = vunpack.c.h.b16 %v1672
        %v5357 = vunpack.c.l.b16 %v1673
        %v5358 = vunpack.c.h.b16 %v1673
        %v5359 = vunpack.c.l.b16 %v1674
        %v5360 = vunpack.c.h.b16 %v1674
        %v5361 = vunpack.c.l.b16 %v1675
        %v5362 = vunpack.c.h.b16 %v1675
        %v5363 = vunpack.c.l.b16 %v1676
        %v5364 = vunpack.c.h.b16 %v1676
        %v5365 = vunpack.c.l.b16 %v1677
        %v5366 = vunpack.c.h.b16 %v1677
        %v5367 = vunpack.c.l.b16 %v1678
        %v5368 = vunpack.c.h.b16 %v1678
        %v5369 = vunpack.c.l.b16 %v1679
        %v5370 = vunpack.c.h.b16 %v1679
        %v5371 = vunpack.c.l.b16 %v1680
        %v5372 = vunpack.c.h.b16 %v1680
        %v5373 = vunpack.c.l.b16 %v1681
        %v5374 = vunpack.c.h.b16 %v1681
        %v5375 = vunpack.c.l.b16 %v1682
        %v5376 = vunpack.c.h.b16 %v1682
        %v5377 = vunpack.c.l.b16 %v1683
        %v5378 = vunpack.c.h.b16 %v1683
        %v5379 = vunpack.c.l.b16 %v1684
        %v5380 = vunpack.c.h.b16 %v1684
        %v5381 = vunpack.c.l.b16 %v1685
        %v5382 = vunpack.c.h.b16 %v1685
        %v5383 = vunpack.c.l.b16 %v1686
        %v5384 = vunpack.c.h.b16 %v1686
        %v5385 = vunpack.c.l.b16 %v1687
        %v5386 = vunpack.c.h.b16 %v1687
        %v5387 = vunpack.c.l.b16 %v1688
        %v5388 = vunpack.c.h.b16 %v1688
        %v5389 = vunpack.c.l.b16 %v1689
        %v5390 = vunpack.c.h.b16 %v1689
        %v5391 = vunpack.c.l.b16 %v1690
        %v5392 = vunpack.c.h.b16 %v1690
        %v5393 = vunpack.c.l.b16 %v1691
        %v5394 = vunpack.c.h.b16 %v1691
        %v5395 = vunpack.c.l.b16 %v1692
        %v5396 = vunpack.c.h.b16 %v1692
        %v5397 = vunpack.c.l.b16 %v1693
        %v5398 = vunpack.c.h.b16 %v1693
        %v5399 = vunpack.c.l.b16 %v1694
        %v5400 = vunpack.c.h.b16 %v1694
        %v5401 = vunpack.c.l.b16 %v1695
        %v5402 = vunpack.c.h.b16 %v1695
        %v5403 = vunpack.c.l.b16 %v1696
        %v5404 = vunpack.c.h.b16 %v1696
        %v5405 = vunpack.c.l.b16 %v1697
        %v5406 = vunpack.c.h.b16 %v1697
        %v5407 = vunpack.c.l.b16 %v1698
        %v5408 = vunpack.c.h.b16 %v1698
        %v5409 = vunpack.c.l.b16 %v1699
        %v5410 = vunpack.c.h.b16 %v1699
        %v5411 = vunpack.c.l.b16 %v1700
        %v5412 = vunpack.c.h.b16 %v1700
        %v5413 = vunpack.c.l.b16 %v1701
        %v5414 = vunpack.c.h.b16 %v1701
        %v5415 = vunpack.c.l.b16 %v1702
        %v5416 = vunpack.c.h.b16 %v1702
        %v5417 = vunpack.c.l.b16 %v1703
        %v5418 = vunpack.c.h.b16 %v1703
        %v5419 = vunpack.c.l.b16 %v1704
        %v5420 = vunpack.c.h.b16 %v1704
        %v5421 = vunpack.c.l.b16 %v1705
        %v5422 = vunpack.c.h.b16 %v1705
        %v5423 = vunpack.c.l.b16 %v1706
        %v5424 = vunpack.c.h.b16 %v1706
        %v5425 = vunpack.c.l.b16 %v1707
        %v5426 = vunpack.c.h.b16 %v1707
        %v5427 = vunpack.c.l.b16 %v1708
        %v5428 = vunpack.c.h.b16 %v1708
        %v5429 = vunpack.c.l.b16 %v1709
        %v5430 = vunpack.c.h.b16 %v1709
        %v5431 = vunpack.c.l.b16 %v1710
        %v5432 = vunpack.c.h.b16 %v1710
        %v5433 = vunpack.c.l.b16 %v1711
        %v5434 = vunpack.c.h.b16 %v1711
        %v5435 = vunpack.c.l.b16 %v1712
        %v5436 = vunpack.c.h.b16 %v1712
        %v5437 = vunpack.c.l.b16 %v1713
        %v5438 = vunpack.c.h.b16 %v1713
        %v5439 = vunpack.c.l.b16 %v1714
        %v5440 = vunpack.c.h.b16 %v1714
        %v5441 = vunpack.c.l.b16 %v1715
        %v5442 = vunpack.c.h.b16 %v1715
        %v5443 = vunpack.c.l.b16 %v1716
        %v5444 = vunpack.c.h.b16 %v1716
        %v5445 = vunpack.c.l.b16 %v1717
        %v5446 = vunpack.c.h.b16 %v1717
        %v5447 = vunpack.c.l.b16 %v1718
        %v5448 = vunpack.c.h.b16 %v1718
        %v5449 = vunpack.c.l.b16 %v1719
        %v5450 = vunpack.c.h.b16 %v1719
        %v5451 = vunpack.c.l.b16 %v1720
        %v5452 = vunpack.c.h.b16 %v1720
        %v5453 = vunpack.c.l.b16 %v1721
        %v5454 = vunpack.c.h.b16 %v1721
        %v5455 = vunpack.c.l.b16 %v1722
        %v5456 = vunpack.c.h.b16 %v1722
        %v5457 = vunpack.c.l.b16 %v1723
        %v5458 = vunpack.c.h.b16 %v1723
        %v5459 = vunpack.c.l.b16 %v1724
        %v5460 = vunpack.c.h.b16 %v1724
        %v5461 = vunpack.c.l.b16 %v1725
        %v5462 = vunpack.c.h.b16 %v1725
        %v5463 = vunpack.c.l.b16 %v1726
        %v5464 = vunpack.c.h.b16 %v1726
        %v5465 = vunpack.c.l.b16 %v1727
        %v5466 = vunpack.c.h.b16 %v1727
        %v5467 = vunpack.c.l.b16 %v1728
        %v5468 = vunpack.c.h.b16 %v1728
        %v5469 = vunpack.c.l.b16 %v1729
        %v5470 = vunpack.c.h.b16 %v1729
        %v5471 = vunpack.c.l.b16 %v1730
        %v5472 = vunpack.c.h.b16 %v1730
        %v5473 = vunpack.c.l.b16 %v1731
        %v5474 = vunpack.c.h.b16 %v1731
        %v5475 = vunpack.c.l.b16 %v1732
        %v5476 = vunpack.c.h.b16 %v1732
        %v5477 = vunpack.c.l.b16 %v1733
        %v5478 = vunpack.c.h.b16 %v1733
        %v5479 = vunpack.c.l.b16 %v1734
        %v5480 = vunpack.c.h.b16 %v1734
        %v5481 = vunpack.c.l.b16 %v1735
        %v5482 = vunpack.c.h.b16 %v1735
        %v5483 = vunpack.c.l.b16 %v1736
        %v5484 = vunpack.c.h.b16 %v1736
        %v5485 = vunpack.c.l.b16 %v1737
        %v5486 = vunpack.c.h.b16 %v1737
        %v5487 = vunpack.c.l.b16 %v1738
        %v5488 = vunpack.c.h.b16 %v1738
        %v5489 = vunpack.c.l.b16 %v1739
        %v5490 = vunpack.c.h.b16 %v1739
        %v5491 = vunpack.c.l.b16 %v1740
        %v5492 = vunpack.c.h.b16 %v1740
        %v5493 = vunpack.c.l.b16 %v1741
        %v5494 = vunpack.c.h.b16 %v1741
        %v5495 = vunpack.c.l.b16 %v1742
        %v5496 = vunpack.c.h.b16 %v1742
        %v5497 = vunpack.c.l.b16 %v1743
        %v5498 = vunpack.c.h.b16 %v1743
        %v5499 = vunpack.c.l.b16 %v1744
        %v5500 = vunpack.c.h.b16 %v1744
        %v5501 = vunpack.c.l.b16 %v1745
        %v5502 = vunpack.c.h.b16 %v1745
        %v5503 = vunpack.c.l.b16 %v1746
        %v5504 = vunpack.c.h.b16 %v1746
        %v5505 = vunpack.c.l.b16 %v1747
        %v5506 = vunpack.c.h.b16 %v1747
        %v5507 = vunpack.c.l.b16 %v1748
        %v5508 = vunpack.c.h.b16 %v1748
        %v5509 = vunpack.c.l.b16 %v1749
        %v5510 = vunpack.c.h.b16 %v1749
        %v5511 = vunpack.c.l.b16 %v1750
        %v5512 = vunpack.c.h.b16 %v1750
        %v5513 = vunpack.c.l.b16 %v1751
        %v5514 = vunpack.c.h.b16 %v1751
        %v5515 = vunpack.c.l.b16 %v1752
        %v5516 = vunpack.c.h.b16 %v1752
        %v5517 = vunpack.c.l.b16 %v1753
        %v5518 = vunpack.c.h.b16 %v1753
        %v5519 = vunpack.c.l.b16 %v1754
        %v5520 = vunpack.c.h.b16 %v1754
        %v5521 = vunpack.c.l.b16 %v1755
        %v5522 = vunpack.c.h.b16 %v1755
        %v5523 = vunpack.c.l.b16 %v1756
        %v5524 = vunpack.c.h.b16 %v1756
        %v5525 = vunpack.c.l.b16 %v1757
        %v5526 = vunpack.c.h.b16 %v1757
        %v5527 = vunpack.c.l.b16 %v1758
        %v5528 = vunpack.c.h.b16 %v1758
        %v5529 = vunpack.c.l.b16 %v1759
        %v5530 = vunpack.c.h.b16 %v1759
        %v5531 = vunpack.c.l.b16 %v1760
        %v5532 = vunpack.c.h.b16 %v1760
        %v5533 = vunpack.c.l.b16 %v1761
        %v5534 = vunpack.c.h.b16 %v1761
        %v5535 = vunpack.c.l.b16 %v1762
        %v5536 = vunpack.c.h.b16 %v1762
        %v5537 = vunpack.c.l.b16 %v1763
        %v5538 = vunpack.c.h.b16 %v1763
        %v5539 = vunpack.c.l.b16 %v1764
        %v5540 = vunpack.c.h.b16 %v1764
        %v5541 = vunpack.c.l.b16 %v1765
        %v5542 = vunpack.c.h.b16 %v1765
        %v5543 = vunpack.c.l.b16 %v1766
        %v5544 = vunpack.c.h.b16 %v1766
        %v5545 = vunpack.c.l.b16 %v1767
        %v5546 = vunpack.c.h.b16 %v1767
        %v5547 = vunpack.c.l.b16 %v1768
        %v5548 = vunpack.c.h.b16 %v1768
        %v5549 = vunpack.c.l.b16 %v1769
        %v5550 = vunpack.c.h.b16 %v1769
        %v5551 = vunpack.c.l.b16 %v1770
        %v5552 = vunpack.c.h.b16 %v1770
        %v5553 = vunpack.c.l.b16 %v1771
        %v5554 = vunpack.c.h.b16 %v1771
        %v5555 = vunpack.c.l.b16 %v1772
        %v5556 = vunpack.c.h.b16 %v1772
        %v5557 = vunpack.c.l.b16 %v1773
        %v5558 = vunpack.c.h.b16 %v1773
        %v5559 = vunpack.c.l.b16 %v1774
        %v5560 = vunpack.c.h.b16 %v1774
        %v5561 = vunpack.c.l.b16 %v1775
        %v5562 = vunpack.c.h.b16 %v1775
        %v5563 = vunpack.c.l.b16 %v1776
        %v5564 = vunpack.c.h.b16 %v1776
        %v5565 = vunpack.c.l.b16 %v1777
        %v5566 = vunpack.c.h.b16 %v1777
        %v5567 = vunpack.c.l.b16 %v1778
        %v5568 = vunpack.c.h.b16 %v1778
        %v5569 = vunpack.c.l.b16 %v1779
        %v5570 = vunpack.c.h.b16 %v1779
        %v5571 = vunpack.c.l.b16 %v1780
        %v5572 = vunpack.c.h.b16 %v1780
        %v5573 = vunpack.c.l.b16 %v1781
        %v5574 = vunpack.c.h.b16 %v1781
        %v5575 = vunpack.c.l.b16 %v1782
        %v5576 = vunpack.c.h.b16 %v1782
        %v5577 = vunpack.c.l.b16 %v1783
        %v5578 = vunpack.c.h.b16 %v1783
        %v5579 = vunpack.c.l.b16 %v1784
        %v5580 = vunpack.c.h.b16 %v1784
        %v5581 = vunpack.c.l.b16 %v1785
        %v5582 = vunpack.c.h.b16 %v1785
        %v5583 = vunpack.c.l.b16 %v1786
        %v5584 = vunpack.c.h.b16 %v1786
        %v5585 = vunpack.c.l.b16 %v1787
        %v5586 = vunpack.c.h.b16 %v1787
        %v5587 = vunpack.c.l.b16 %v1788
        %v5588 = vunpack.c.h.b16 %v1788
        %v5589 = vunpack.c.l.b16 %v1789
        %v5590 = vunpack.c.h.b16 %v1789
        %v5591 = vunpack.c.l.b16 %v1790
        %v5592 = vunpack.c.h.b16 %v1790
        %v5593 = vunpack.c.l.b16 %v1791
        %v5594 = vunpack.c.h.b16 %v1791
        %v5595 = vunpack.c.l.b16 %v1792
        %v5596 = vunpack.c.h.b16 %v1792
        %v5597 = vunpack.c.l.b16 %v1793
        %v5598 = vunpack.c.h.b16 %v1793
        %v5599 = vunpack.c.l.b16 %v1794
        %v5600 = vunpack.c.h.b16 %v1794
        %v5601 = vunpack.c.l.b16 %v1795
        %v5602 = vunpack.c.h.b16 %v1795
        %v5603 = vunpack.c.l.b16 %v1796
        %v5604 = vunpack.c.h.b16 %v1796
        %v5605 = vunpack.c.l.b16 %v1797
        %v5606 = vunpack.c.h.b16 %v1797
        %v5607 = vunpack.c.l.b16 %v1798
        %v5608 = vunpack.c.h.b16 %v1798
        %v5609 = vunpack.c.l.b16 %v1799
        %v5610 = vunpack.c.h.b16 %v1799
        %v5611 = vunpack.c.l.b16 %v1800
        %v5612 = vunpack.c.h.b16 %v1800
        %v5613 = vunpack.c.l.b16 %v1801
        %v5614 = vunpack.c.h.b16 %v1801
        %v5615 = vunpack.c.l.b16 %v1802
        %v5616 = vunpack.c.h.b16 %v1802
        %v5617 = vunpack.c.l.b16 %v1803
        %v5618 = vunpack.c.h.b16 %v1803
        %v5619 = vunpack.c.l.b16 %v1804
        %v5620 = vunpack.c.h.b16 %v1804
        %v5621 = vunpack.c.l.b16 %v1805
        %v5622 = vunpack.c.h.b16 %v1805
        %v5623 = vunpack.c.l.b16 %v1806
        %v5624 = vunpack.c.h.b16 %v1806
        %v5625 = vunpack.c.l.b16 %v1807
        %v5626 = vunpack.c.h.b16 %v1807
        %v5627 = vunpack.c.l.b16 %v1808
        %v5628 = vunpack.c.h.b16 %v1808
        %v5629 = vunpack.c.l.b16 %v1809
        %v5630 = vunpack.c.h.b16 %v1809
        %v5631 = vunpack.c.l.b16 %v1810
        %v5632 = vunpack.c.h.b16 %v1810
        %v5633 = vunpack.c.l.b16 %v1811
        %v5634 = vunpack.c.h.b16 %v1811
        %v5635 = vunpack.c.l.b16 %v1812
        %v5636 = vunpack.c.h.b16 %v1812
        %v5637 = vunpack.c.l.b16 %v1813
        %v5638 = vunpack.c.h.b16 %v1813
        %v5639 = vunpack.c.l.b16 %v1814
        %v5640 = vunpack.c.h.b16 %v1814
        %v5641 = vunpack.c.l.b16 %v1815
        %v5642 = vunpack.c.h.b16 %v1815
        %v5643 = vunpack.c.l.b16 %v1816
        %v5644 = vunpack.c.h.b16 %v1816
        %v5645 = vunpack.c.l.b16 %v1817
        %v5646 = vunpack.c.h.b16 %v1817
        %v5647 = vunpack.c.l.b16 %v1818
        %v5648 = vunpack.c.h.b16 %v1818
        %v5649 = vunpack.c.l.b16 %v1819
        %v5650 = vunpack.c.h.b16 %v1819
        %v5651 = vunpack.c.l.b16 %v1820
        %v5652 = vunpack.c.h.b16 %v1820
        %v5653 = vunpack.c.l.b16 %v1821
        %v5654 = vunpack.c.h.b16 %v1821
        %v5655 = vunpack.c.l.b16 %v1822
        %v5656 = vunpack.c.h.b16 %v1822
        %v5657 = vunpack.c.l.b16 %v1823
        %v5658 = vunpack.c.h.b16 %v1823
        %v5659 = vunpack.c.l.b16 %v1824
        %v5660 = vunpack.c.h.b16 %v1824
        %v5661 = vunpack.c.l.b16 %v1825
        %v5662 = vunpack.c.h.b16 %v1825
        %v5663 = vunpack.c.l.b16 %v1826
        %v5664 = vunpack.c.h.b16 %v1826
        %v5665 = vunpack.c.l.b16 %v1827
        %v5666 = vunpack.c.h.b16 %v1827
        %v5667 = vunpack.c.l.b16 %v1828
        %v5668 = vunpack.c.h.b16 %v1828
        %v5669 = vunpack.c.l.b16 %v1829
        %v5670 = vunpack.c.h.b16 %v1829
        %v5671 = vunpack.c.l.b16 %v1830
        %v5672 = vunpack.c.h.b16 %v1830
        %v5673 = vunpack.c.l.b16 %v1831
        %v5674 = vunpack.c.h.b16 %v1831
        %v5675 = vunpack.c.l.b16 %v1832
        %v5676 = vunpack.c.h.b16 %v1832
        %v5677 = vunpack.c.l.b16 %v1833
        %v5678 = vunpack.c.h.b16 %v1833
        %v5679 = vunpack.c.l.b16 %v1834
        %v5680 = vunpack.c.h.b16 %v1834
        %v5681 = vpack.c.b16 %v5171, %v5169
        %v5682 = vpack.c.b16 %v5172, %v5170
        %v5683 = vpack.c.b16 %v5175, %v5173
        %v5684 = vpack.c.b16 %v5176, %v5174
        %v5685 = vpack.c.b16 %v5179, %v5177
        %v5686 = vpack.c.b16 %v5180, %v5178
        %v5687 = vpack.c.b16 %v5183, %v5181
        %v5688 = vpack.c.b16 %v5184, %v5182
        %v5689 = vpack.c.b16 %v5187, %v5185
        %v5690 = vpack.c.b16 %v5188, %v5186
        %v5691 = vpack.c.b16 %v5191, %v5189
        %v5692 = vpack.c.b16 %v5192, %v5190
        %v5693 = vpack.c.b16 %v5195, %v5193
        %v5694 = vpack.c.b16 %v5196, %v5194
        %v5695 = vpack.c.b16 %v5199, %v5197
        %v5696 = vpack.c.b16 %v5200, %v5198
        %v5697 = vpack.c.b16 %v5203, %v5201
        %v5698 = vpack.c.b16 %v5204, %v5202
        %v5699 = vpack.c.b16 %v5207, %v5205
        %v5700 = vpack.c.b16 %v5208, %v5206
        %v5701 = vpack.c.b16 %v5211, %v5209
        %v5702 = vpack.c.b16 %v5212, %v5210
        %v5703 = vpack.c.b16 %v5215, %v5213
        %v5704 = vpack.c.b16 %v5216, %v5214
        %v5705 = vpack.c.b16 %v5219, %v5217
        %v5706 = vpack.c.b16 %v5220, %v5218
        %v5707 = vpack.c.b16 %v5223, %v5221
        %v5708 = vpack.c.b16 %v5224, %v5222
        %v5709 = vpack.c.b16 %v5227, %v5225
        %v5710 = vpack.c.b16 %v5228, %v5226
        %v5711 = vpack.c.b16 %v5231, %v5229
        %v5712 = vpack.c.b16 %v5232, %v5230
        %v5713 = vpack.c.b16 %v5235, %v5233
        %v5714 = vpack.c.b16 %v5236, %v5234
        %v5715 = vpack.c.b16 %v5239, %v5237
        %v5716 = vpack.c.b16 %v5240, %v5238
        %v5717 = vpack.c.b16 %v5243, %v5241
        %v5718 = vpack.c.b16 %v5244, %v5242
        %v5719 = vpack.c.b16 %v5247, %v5245
        %v5720 = vpack.c.b16 %v5248, %v5246
        %v5721 = vpack.c.b16 %v5251, %v5249
        %v5722 = vpack.c.b16 %v5252, %v5250
        %v5723 = vpack.c.b16 %v5255, %v5253
        %v5724 = vpack.c.b16 %v5256, %v5254
        %v5725 = vpack.c.b16 %v5259, %v5257
        %v5726 = vpack.c.b16 %v5260, %v5258
        %v5727 = vpack.c.b16 %v5263, %v5261
        %v5728 = vpack.c.b16 %v5264, %v5262
        %v5729 = vpack.c.b16 %v5267, %v5265
        %v5730 = vpack.c.b16 %v5268, %v5266
        %v5731 = vpack.c.b16 %v5271, %v5269
        %v5732 = vpack.c.b16 %v5272, %v5270
        %v5733 = vpack.c.b16 %v5275, %v5273
        %v5734 = vpack.c.b16 %v5276, %v5274
        %v5735 = vpack.c.b16 %v5279, %v5277
        %v5736 = vpack.c.b16 %v5280, %v5278
        %v5737 = vpack.c.b16 %v5283, %v5281
        %v5738 = vpack.c.b16 %v5284, %v5282
        %v5739 = vpack.c.b16 %v5287, %v5285
        %v5740 = vpack.c.b16 %v5288, %v5286
        %v5741 = vpack.c.b16 %v5291, %v5289
        %v5742 = vpack.c.b16 %v5292, %v5290
        %v5743 = vpack.c.b16 %v5295, %v5293
        %v5744 = vpack.c.b16 %v5296, %v5294
        %v5745 = vpack.c.b16 %v5299, %v5297
        %v5746 = vpack.c.b16 %v5300, %v5298
        %v5747 = vpack.c.b16 %v5303, %v5301
        %v5748 = vpack.c.b16 %v5304, %v5302
        %v5749 = vpack.c.b16 %v5307, %v5305
        %v5750 = vpack.c.b16 %v5308, %v5306
        %v5751 = vpack.c.b16 %v5311, %v5309
        %v5752 = vpack.c.b16 %v5312, %v5310
        %v5753 = vpack.c.b16 %v5315, %v5313
        %v5754 = vpack.c.b16 %v5316, %v5314
        %v5755 = vpack.c.b16 %v5319, %v5317
        %v5756 = vpack.c.b16 %v5320, %v5318
        %v5757 = vpack.c.b16 %v5323, %v5321
        %v5758 = vpack.c.b16 %v5324, %v5322
        %v5759 = vpack.c.b16 %v5327, %v5325
        %v5760 = vpack.c.b16 %v5328, %v5326
        %v5761 = vpack.c.b16 %v5331, %v5329
        %v5762 = vpack.c.b16 %v5332, %v5330
        %v5763 = vpack.c.b16 %v5335, %v5333
        %v5764 = vpack.c.b16 %v5336, %v5334
        %v5765 = vpack.c.b16 %v5339, %v5337
        %v5766 = vpack.c.b16 %v5340, %v5338
        %v5767 = vpack.c.b16 %v5343, %v5341
        %v5768 = vpack.c.b16 %v5344, %v5342
        %v5769 = vpack.c.b16 %v5347, %v5345
        %v5770 = vpack.c.b16 %v5348, %v5346
        %v5771 = vpack.c.b16 %v5351, %v5349
        %v5772 = vpack.c.b16 %v5352, %v5350
        %v5773 = vpack.c.b16 %v5355, %v5353
        %v5774 = vpack.c.b16 %v5356, %v5354
        %v5775 = vpack.c.b16 %v5359, %v5357
        %v5776 = vpack.c.b16 %v5360, %v5358
        %v5777 = vpack.c.b16 %v5363, %v5361
        %v5778 = vpack.c.b16 %v5364, %v5362
        %v5779 = vpack.c.b16 %v5367, %v5365
        %v5780 = vpack.c.b16 %v5368, %v5366
        %v5781 = vpack.c.b16 %v5371, %v5369
        %v5782 = vpack.c.b16 %v5372, %v5370
        %v5783 = vpack.c.b16 %v5375, %v5373
        %v5784 = vpack.c.b16 %v5376, %v5374
        %v5785 = vpack.c.b16 %v5379, %v5377
        %v5786 = vpack.c.b16 %v5380, %v5378
        %v5787 = vpack.c.b16 %v5383, %v5381
        %v5788 = vpack.c.b16 %v5384, %v5382
        %v5789 = vpack.c.b16 %v5387, %v5385
        %v5790 = vpack.c.b16 %v5388, %v5386
        %v5791 = vpack.c.b16 %v5391, %v5389
        %v5792 = vpack.c.b16 %v5392, %v5390
        %v5793 = vpack.c.b16 %v5395, %v5393
        %v5794 = vpack.c.b16 %v5396, %v5394
        %v5795 = vpack.c.b16 %v5399, %v5397
        %v5796 = vpack.c.b16 %v5400, %v5398
        %v5797 = vpack.c.b16 %v5403, %v5401
        %v5798 = vpack.c.b16 %v5404, %v5402
        %v5799 = vpack.c.b16 %v5407, %v5405
        %v5800 = vpack.c.b16 %v5408, %v5406
        %v5801 = vpack.c.b16 %v5411, %v5409
        %v5802 = vpack.c.b16 %v5412, %v5410
        %v5803 = vpack.c.b16 %v5415, %v5413
        %v5804 = vpack.c.b16 %v5416, %v5414
        %v5805 = vpack.c.b16 %v5419, %v5417
        %v5806 = vpack.c.b16 %v5420, %v5418
        %v5807 = vpack.c.b16 %v5423, %v5421
        %v5808 = vpack.c.b16 %v5424, %v5422
        %v5809 = vpack.c.b16 %v5427, %v5425
        %v5810 = vpack.c.b16 %v5428, %v5426
        %v5811 = vpack.c.b16 %v5431, %v5429
        %v5812 = vpack.c.b16 %v5432, %v5430
        %v5813 = vpack.c.b16 %v5435, %v5433
        %v5814 = vpack.c.b16 %v5436, %v5434
        %v5815 = vpack.c.b16 %v5439, %v5437
        %v5816 = vpack.c.b16 %v5440, %v5438
        %v5817 = vpack.c.b16 %v5443, %v5441
        %v5818 = vpack.c.b16 %v5444, %v5442
        %v5819 = vpack.c.b16 %v5447, %v5445
        %v5820 = vpack.c.b16 %v5448, %v5446
        %v5821 = vpack.c.b16 %v5451, %v5449
        %v5822 = vpack.c.b16 %v5452, %v5450
        %v5823 = vpack.c.b16 %v5455, %v5453
        %v5824 = vpack.c.b16 %v5456, %v5454
        %v5825 = vpack.c.b16 %v5459, %v5457
        %v5826 = vpack.c.b16 %v5460, %v5458
        %v5827 = vpack.c.b16 %v5463, %v5461
        %v5828 = vpack.c.b16 %v5464, %v5462
        %v5829 = vpack.c.b16 %v5467, %v5465
        %v5830 = vpack.c.b16 %v5468, %v5466
        %v5831 = vpack.c.b16 %v5471, %v5469
        %v5832 = vpack.c.b16 %v5472, %v5470
        %v5833 = vpack.c.b16 %v5475, %v5473
        %v5834 = vpack.c.b16 %v5476, %v5474
        %v5835 = vpack.c.b16 %v5479, %v5477
        %v5836 = vpack.c.b16 %v5480, %v5478
        %v5837 = vpack.c.b16 %v5483, %v5481
        %v5838 = vpack.c.b16 %v5484, %v5482
        %v5839 = vpack.c.b16 %v5487, %v5485
        %v5840 = vpack.c.b16 %v5488, %v5486
        %v5841 = vpack.c.b16 %v5491, %v5489
        %v5842 = vpack.c.b16 %v5492, %v5490
        %v5843 = vpack.c.b16 %v5495, %v5493
        %v5844 = vpack.c.b16 %v5496, %v5494
        %v5845 = vpack.c.b16 %v5499, %v5497
        %v5846 = vpack.c.b16 %v5500, %v5498
        %v5847 = vpack.c.b16 %v5503, %v5501
        %v5848 = vpack.c.b16 %v5504, %v5502
        %v5849 = vpack.c.b16 %v5507, %v5505
        %v5850 = vpack.c.b16 %v5508, %v5506
        %v5851 = vpack.c.b16 %v5511, %v5509
        %v5852 = vpack.c.b16 %v5512, %v5510
        %v5853 = vpack.c.b16 %v5515, %v5513
        %v5854 = vpack.c.b16 %v5516, %v5514
        %v5855 = vpack.c.b16 %v5519, %v5517
        %v5856 = vpack.c.b16 %v5520, %v5518
        %v5857 = vpack.c.b16 %v5523, %v5521
        %v5858 = vpack.c.b16 %v5524, %v5522
        %v5859 = vpack.c.b16 %v5527, %v5525
        %v5860 = vpack.c.b16 %v5528, %v5526
        %v5861 = vpack.c.b16 %v5531, %v5529
        %v5862 = vpack.c.b16 %v5532, %v5530
        %v5863 = vpack.c.b16 %v5535, %v5533
        %v5864 = vpack.c.b16 %v5536, %v5534
        %v5865 = vpack.c.b16 %v5539, %v5537
        %v5866 = vpack.c.b16 %v5540, %v5538
        %v5867 = vpack.c.b16 %v5543, %v5541
        %v5868 = vpack.c.b16 %v5544, %v5542
        %v5869 = vpack.c.b16 %v5547, %v5545
        %v5870 = vpack.c.b16 %v5548, %v5546
        %v5871 = vpack.c.b16 %v5551, %v5549
        %v5872 = vpack.c.b16 %v5552, %v5550
        %v5873 = vpack.c.b16 %v5555, %v5553
        %v5874 = vpack.c.b16 %v5556, %v5554
        %v5875 = vpack.c.b16 %v5559, %v5557
        %v5876 = vpack.c.b16 %v5560, %v5558
        %v5877 = vpack.c.b16 %v5563, %v5561
        %v5878 = vpack.c.b16 %v5564, %v5562
        %v5879 = vpack.c.b16 %v5567, %v5565
        %v5880 = vpack.c.b16 %v5568, %v5566
        %v5881 = vpack.c.b16 %v5571, %v5569
        %v5882 = vpack.c.b16 %v5572, %v5570
        %v5883 = vpack.c.b16 %v5575, %v5573
        %v5884 = vpack.c.b16 %v5576, %v5574
        %v5885 = vpack.c.b16 %v5579, %v5577
        %v5886 = vpack.c.b16 %v5580, %v5578
        %v5887 = vpack.c.b16 %v5583, %v5581
        %v5888 = vpack.c.b16 %v5584, %v5582
        %v5889 = vpack.c.b16 %v5587, %v5585
        %v5890 = vpack.c.b16 %v5588, %v5586
        %v5891 = vpack.c.b16 %v5591, %v5589
        %v5892 = vpack.c.b16 %v5592, %v5590
        %v5893 = vpack.c.b16 %v5595, %v5593
        %v5894 = vpack.c.b16 %v5596, %v5594
        %v5895 = vpack.c.b16 %v5599, %v5597
        %v5896 = vpack.c.b16 %v5600, %v5598
        %v5897 = vpack.c.b16 %v5603, %v5601
        %v5898 = vpack.c.b16 %v5604, %v5602
        %v5899 = vpack.c.b16 %v5607, %v5605
        %v5900 = vpack.c.b16 %v5608, %v5606
        %v5901 = vpack.c.b16 %v5611, %v5609
        %v5902 = vpack.c.b16 %v5612, %v5610
        %v5903 = vpack.c.b16 %v5615, %v5613
        %v5904 = vpack.c.b16 %v5616, %v5614
        %v5905 = vpack.c.b16 %v5619, %v5617
        %v5906 = vpack.c.b16 %v5620, %v5618
        %v5907 = vpack.c.b16 %v5623, %v5621
        %v5908 = vpack.c.b16 %v5624, %v5622
        %v5909 = vpack.c.b16 %v5627, %v5625
        %v5910 = vpack.c.b16 %v5628, %v5626
        %v5911 = vpack.c.b16 %v5631, %v5629
        %v5912 = vpack.c.b16 %v5632, %v5630
        %v5913 = vpack.c.b16 %v5635, %v5633
        %v5914 = vpack.c.b16 %v5636, %v5634
        %v5915 = vpack.c.b16 %v5639, %v5637
        %v5916 = vpack.c.b16 %v5640, %v5638
        %v5917 = vpack.c.b16 %v5643, %v5641
        %v5918 = vpack.c.b16 %v5644, %v5642
        %v5919 = vpack.c.b16 %v5647, %v5645
        %v5920 = vpack.c.b16 %v5648, %v5646
        %v5921 = vpack.c.b16 %v5651, %v5649
        %v5922 = vpack.c.b16 %v5652, %v5650
        %v5923 = vpack.c.b16 %v5655, %v5653
        %v5924 = vpack.c.b16 %v5656, %v5654
        %v5925 = vpack.c.b16 %v5659, %v5657
        %v5926 = vpack.c.b16 %v5660, %v5658
        %v5927 = vpack.c.b16 %v5663, %v5661
        %v5928 = vpack.c.b16 %v5664, %v5662
        %v5929 = vpack.c.b16 %v5667, %v5665
        %v5930 = vpack.c.b16 %v5668, %v5666
        %v5931 = vpack.c.b16 %v5671, %v5669
        %v5932 = vpack.c.b16 %v5672, %v5670
        %v5933 = vpack.c.b16 %v5675, %v5673
        %v5934 = vpack.c.b16 %v5676, %v5674
        %v5935 = vpack.c.b16 %v5679, %v5677
        %v5936 = vpack.c.b16 %v5680, %v5678
        %6193 = vmatpush.bf16.msra.mxu0 %v5695
        %6194 = vmatpush.bf16.msra.mxu0 %v5693
        %6195 = vmatpush.bf16.msra.mxu0 %v5691
        %6196 = vmatpush.bf16.msra.mxu0 %v5689
        %6197 = vmatpush.bf16.msra.mxu0 %v5687
        %6198 = vmatpush.bf16.msra.mxu0 %v5685
        %6199 = vmatpush.bf16.msra.mxu0 %v5683
        %6200 = vmatpush.bf16.msra.mxu0 %v5681
        %6201 = vmatmul.bf16.gmra.mxu0 %v4892
        %v6202 = vpop.f32.mrf.mxu0
        %v6203 = vadd.f32 %v4909, %v6202
        %v6204 = vpop.f32.mrf.mxu0
        %v6205 = vadd.f32 %v4909, %v6204
        %6206 = vdwg.mxu0
        %6207 = vmatpush.bf16.msra.mxu0 %v5711
        %6208 = vmatpush.bf16.msra.mxu0 %v5709
        %6209 = vmatpush.bf16.msra.mxu0 %v5707
        %6210 = vmatpush.bf16.msra.mxu0 %v5705
        %6211 = vmatpush.bf16.msra.mxu0 %v5703
        %6212 = vmatpush.bf16.msra.mxu0 %v5701
        %6213 = vmatpush.bf16.msra.mxu0 %v5699
        %6214 = vmatpush.bf16.msra.mxu0 %v5697
        %6215 = vmatmul.bf16.gmra.mxu0 %v4893
        %v6216 = vpop.f32.mrf.mxu0
        %v6217 = vadd.f32 %v6203, %v6216
        %v6218 = vpop.f32.mrf.mxu0
        %v6219 = vadd.f32 %v6205, %v6218
        %6220 = vdwg.mxu0
        %6221 = vmatpush.bf16.msra.mxu0 %v5727
        %6222 = vmatpush.bf16.msra.mxu0 %v5725
        %6223 = vmatpush.bf16.msra.mxu0 %v5723
        %6224 = vmatpush.bf16.msra.mxu0 %v5721
        %6225 = vmatpush.bf16.msra.mxu0 %v5719
        %6226 = vmatpush.bf16.msra.mxu0 %v5717
        %6227 = vmatpush.bf16.msra.mxu0 %v5715
        %6228 = vmatpush.bf16.msra.mxu0 %v5713
        %6229 = vmatmul.bf16.gmra.mxu0 %v4894
        %v6230 = vpop.f32.mrf.mxu0
        %v6231 = vadd.f32 %v6217, %v6230
        %v6232 = vpop.f32.mrf.mxu0
        %v6233 = vadd.f32 %v6219, %v6232
        %6234 = vdwg.mxu0
        %6235 = vmatpush.bf16.msra.mxu0 %v5743
        %6236 = vmatpush.bf16.msra.mxu0 %v5741
        %6237 = vmatpush.bf16.msra.mxu0 %v5739
        %6238 = vmatpush.bf16.msra.mxu0 %v5737
        %6239 = vmatpush.bf16.msra.mxu0 %v5735
        %6240 = vmatpush.bf16.msra.mxu0 %v5733
        %6241 = vmatpush.bf16.msra.mxu0 %v5731
        %6242 = vmatpush.bf16.msra.mxu0 %v5729
        %6243 = vmatmul.bf16.gmra.mxu0 %v4895
        %v6244 = vpop.f32.mrf.mxu0
        %v6245 = vadd.f32 %v6231, %v6244
        %v6246 = vpop.f32.mrf.mxu0
        %v6247 = vadd.f32 %v6233, %v6246
        %6248 = vdwg.mxu0
        %6249 = vmatpush.bf16.msra.mxu0 %v5759
        %6250 = vmatpush.bf16.msra.mxu0 %v5757
        %6251 = vmatpush.bf16.msra.mxu0 %v5755
        %6252 = vmatpush.bf16.msra.mxu0 %v5753
        %6253 = vmatpush.bf16.msra.mxu0 %v5751
        %6254 = vmatpush.bf16.msra.mxu0 %v5749
        %6255 = vmatpush.bf16.msra.mxu0 %v5747
        %6256 = vmatpush.bf16.msra.mxu0 %v5745
        %6257 = vmatmul.bf16.gmra.mxu0 %v4896
        %v6258 = vpop.f32.mrf.mxu0
        %v6259 = vadd.f32 %v6245, %v6258
        %v6260 = vpop.f32.mrf.mxu0
        %v6261 = vadd.f32 %v6247, %v6260
        %6262 = vdwg.mxu0
        %6263 = vmatpush.bf16.msra.mxu0 %v5775
        %6264 = vmatpush.bf16.msra.mxu0 %v5773
        %6265 = vmatpush.bf16.msra.mxu0 %v5771
        %6266 = vmatpush.bf16.msra.mxu0 %v5769
        %6267 = vmatpush.bf16.msra.mxu0 %v5767
        %6268 = vmatpush.bf16.msra.mxu0 %v5765
        %6269 = vmatpush.bf16.msra.mxu0 %v5763
        %6270 = vmatpush.bf16.msra.mxu0 %v5761
        %6271 = vmatmul.bf16.gmra.mxu0 %v4897
        %v6272 = vpop.f32.mrf.mxu0
        %v6273 = vadd.f32 %v6259, %v6272
        %v6274 = vpop.f32.mrf.mxu0
        %v6275 = vadd.f32 %v6261, %v6274
        %6276 = vdwg.mxu0
        %6277 = vmatpush.bf16.msra.mxu0 %v5791
        %6278 = vmatpush.bf16.msra.mxu0 %v5789
        %6279 = vmatpush.bf16.msra.mxu0 %v5787
        %6280 = vmatpush.bf16.msra.mxu0 %v5785
        %6281 = vmatpush.bf16.msra.mxu0 %v5783
        %6282 = vmatpush.bf16.msra.mxu0 %v5781
        %6283 = vmatpush.bf16.msra.mxu0 %v5779
        %6284 = vmatpush.bf16.msra.mxu0 %v5777
        %6285 = vmatmul.bf16.gmra.mxu0 %v4898
        %v6286 = vpop.f32.mrf.mxu0
        %v6287 = vadd.f32 %v6273, %v6286
        %v6288 = vpop.f32.mrf.mxu0
        %v6289 = vadd.f32 %v6275, %v6288
        %6290 = vdwg.mxu0
        %6291 = vmatpush.bf16.msra.mxu0 %v5807
        %6292 = vmatpush.bf16.msra.mxu0 %v5805
        %6293 = vmatpush.bf16.msra.mxu0 %v5803
        %6294 = vmatpush.bf16.msra.mxu0 %v5801
        %6295 = vmatpush.bf16.msra.mxu0 %v5799
        %6296 = vmatpush.bf16.msra.mxu0 %v5797
        %6297 = vmatpush.bf16.msra.mxu0 %v5795
        %6298 = vmatpush.bf16.msra.mxu0 %v5793
        %6299 = vmatmul.bf16.gmra.mxu0 %v4899
        %v6300 = vpop.f32.mrf.mxu0
        %v6301 = vadd.f32 %v6287, %v6300
        %v6302 = vpop.f32.mrf.mxu0
        %v6303 = vadd.f32 %v6289, %v6302
        %6304 = vdwg.mxu0
        %6305 = vmatpush.bf16.msra.mxu0 %v5823
        %6306 = vmatpush.bf16.msra.mxu0 %v5821
        %6307 = vmatpush.bf16.msra.mxu0 %v5819
        %6308 = vmatpush.bf16.msra.mxu0 %v5817
        %6309 = vmatpush.bf16.msra.mxu0 %v5815
        %6310 = vmatpush.bf16.msra.mxu0 %v5813
        %6311 = vmatpush.bf16.msra.mxu0 %v5811
        %6312 = vmatpush.bf16.msra.mxu0 %v5809
        %6313 = vmatmul.bf16.gmra.mxu0 %v4900
        %v6314 = vpop.f32.mrf.mxu0
        %v6315 = vadd.f32 %v6301, %v6314
        %v6316 = vpop.f32.mrf.mxu0
        %v6317 = vadd.f32 %v6303, %v6316
        %6318 = vdwg.mxu0
        %6319 = vmatpush.bf16.msra.mxu0 %v5839
        %6320 = vmatpush.bf16.msra.mxu0 %v5837
        %6321 = vmatpush.bf16.msra.mxu0 %v5835
        %6322 = vmatpush.bf16.msra.mxu0 %v5833
        %6323 = vmatpush.bf16.msra.mxu0 %v5831
        %6324 = vmatpush.bf16.msra.mxu0 %v5829
        %6325 = vmatpush.bf16.msra.mxu0 %v5827
        %6326 = vmatpush.bf16.msra.mxu0 %v5825
        %6327 = vmatmul.bf16.gmra.mxu0 %v4901
        %v6328 = vpop.f32.mrf.mxu0
        %v6329 = vadd.f32 %v6315, %v6328
        %v6330 = vpop.f32.mrf.mxu0
        %v6331 = vadd.f32 %v6317, %v6330
        %6332 = vdwg.mxu0
        %6333 = vmatpush.bf16.msra.mxu0 %v5855
        %6334 = vmatpush.bf16.msra.mxu0 %v5853
        %6335 = vmatpush.bf16.msra.mxu0 %v5851
        %6336 = vmatpush.bf16.msra.mxu0 %v5849
        %6337 = vmatpush.bf16.msra.mxu0 %v5847
        %6338 = vmatpush.bf16.msra.mxu0 %v5845
        %6339 = vmatpush.bf16.msra.mxu0 %v5843
        %6340 = vmatpush.bf16.msra.mxu0 %v5841
        %6341 = vmatmul.bf16.gmra.mxu0 %v4902
        %v6342 = vpop.f32.mrf.mxu0
        %v6343 = vadd.f32 %v6329, %v6342
        %v6344 = vpop.f32.mrf.mxu0
        %v6345 = vadd.f32 %v6331, %v6344
        %6346 = vdwg.mxu0
        %6347 = vmatpush.bf16.msra.mxu0 %v5871
        %6348 = vmatpush.bf16.msra.mxu0 %v5869
        %6349 = vmatpush.bf16.msra.mxu0 %v5867
        %6350 = vmatpush.bf16.msra.mxu0 %v5865
        %6351 = vmatpush.bf16.msra.mxu0 %v5863
        %6352 = vmatpush.bf16.msra.mxu0 %v5861
        %6353 = vmatpush.bf16.msra.mxu0 %v5859
        %6354 = vmatpush.bf16.msra.mxu0 %v5857
        %6355 = vmatmul.bf16.gmra.mxu0 %v4903
        %v6356 = vpop.f32.mrf.mxu0
        %v6357 = vadd.f32 %v6343, %v6356
        %v6358 = vpop.f32.mrf.mxu0
        %v6359 = vadd.f32 %v6345, %v6358
        %6360 = vdwg.mxu0
        %6361 = vmatpush.bf16.msra.mxu0 %v5887
        %6362 = vmatpush.bf16.msra.mxu0 %v5885
        %6363 = vmatpush.bf16.msra.mxu0 %v5883
        %6364 = vmatpush.bf16.msra.mxu0 %v5881
        %6365 = vmatpush.bf16.msra.mxu0 %v5879
        %6366 = vmatpush.bf16.msra.mxu0 %v5877
        %6367 = vmatpush.bf16.msra.mxu0 %v5875
        %6368 = vmatpush.bf16.msra.mxu0 %v5873
        %6369 = vmatmul.bf16.gmra.mxu0 %v4904
        %v6370 = vpop.f32.mrf.mxu0
        %v6371 = vadd.f32 %v6357, %v6370
        %v6372 = vpop.f32.mrf.mxu0
        %v6373 = vadd.f32 %v6359, %v6372
        %6374 = vdwg.mxu0
        %6375 = vmatpush.bf16.msra.mxu0 %v5903
        %6376 = vmatpush.bf16.msra.mxu0 %v5901
        %6377 = vmatpush.bf16.msra.mxu0 %v5899
        %6378 = vmatpush.bf16.msra.mxu0 %v5897
        %6379 = vmatpush.bf16.msra.mxu0 %v5895
        %6380 = vmatpush.bf16.msra.mxu0 %v5893
        %6381 = vmatpush.bf16.msra.mxu0 %v5891
        %6382 = vmatpush.bf16.msra.mxu0 %v5889
        %6383 = vmatmul.bf16.gmra.mxu0 %v4905
        %v6384 = vpop.f32.mrf.mxu0
        %v6385 = vadd.f32 %v6371, %v6384
        %v6386 = vpop.f32.mrf.mxu0
        %v6387 = vadd.f32 %v6373, %v6386
        %6388 = vdwg.mxu0
        %6389 = vmatpush.bf16.msra.mxu0 %v5919
        %6390 = vmatpush.bf16.msra.mxu0 %v5917
        %6391 = vmatpush.bf16.msra.mxu0 %v5915
        %6392 = vmatpush.bf16.msra.mxu0 %v5913
        %6393 = vmatpush.bf16.msra.mxu0 %v5911
        %6394 = vmatpush.bf16.msra.mxu0 %v5909
        %6395 = vmatpush.bf16.msra.mxu0 %v5907
        %6396 = vmatpush.bf16.msra.mxu0 %v5905
        %6397 = vmatmul.bf16.gmra.mxu0 %v4906
        %v6398 = vpop.f32.mrf.mxu0
        %v6399 = vadd.f32 %v6385, %v6398
        %v6400 = vpop.f32.mrf.mxu0
        %v6401 = vadd.f32 %v6387, %v6400
        %6402 = vdwg.mxu0
        %6403 = vmatpush.bf16.msra.mxu0 %v5935
        %6404 = vmatpush.bf16.msra.mxu0 %v5933
        %6405 = vmatpush.bf16.msra.mxu0 %v5931
        %6406 = vmatpush.bf16.msra.mxu0 %v5929
        %6407 = vmatpush.bf16.msra.mxu0 %v5927
        %6408 = vmatpush.bf16.msra.mxu0 %v5925
        %6409 = vmatpush.bf16.msra.mxu0 %v5923
        %6410 = vmatpush.bf16.msra.mxu0 %v5921
        %6411 = vmatmul.bf16.gmra.mxu0 %v4907
        %v6412 = vpop.f32.mrf.mxu0
        %v6413 = vadd.f32 %v6399, %v6412
        %v6414 = vpop.f32.mrf.mxu0
        %v6415 = vadd.f32 %v6401, %v6414
        %6416 = vdwg.mxu0
        %6417 = vmatpush.bf16.msra.mxu0 %v5696
        %6418 = vmatpush.bf16.msra.mxu0 %v5694
        %6419 = vmatpush.bf16.msra.mxu0 %v5692
        %6420 = vmatpush.bf16.msra.mxu0 %v5690
        %6421 = vmatpush.bf16.msra.mxu0 %v5688
        %6422 = vmatpush.bf16.msra.mxu0 %v5686
        %6423 = vmatpush.bf16.msra.mxu0 %v5684
        %6424 = vmatpush.bf16.msra.mxu0 %v5682
        %6425 = vmatmul.bf16.gmra.mxu0 %v4892
        %v6426 = vpop.f32.mrf.mxu0
        %v6427 = vadd.f32 %v4910, %v6426
        %v6428 = vpop.f32.mrf.mxu0
        %v6429 = vadd.f32 %v4910, %v6428
        %6430 = vdwg.mxu0
        %6431 = vmatpush.bf16.msra.mxu0 %v5712
        %6432 = vmatpush.bf16.msra.mxu0 %v5710
        %6433 = vmatpush.bf16.msra.mxu0 %v5708
        %6434 = vmatpush.bf16.msra.mxu0 %v5706
        %6435 = vmatpush.bf16.msra.mxu0 %v5704
        %6436 = vmatpush.bf16.msra.mxu0 %v5702
        %6437 = vmatpush.bf16.msra.mxu0 %v5700
        %6438 = vmatpush.bf16.msra.mxu0 %v5698
        %6439 = vmatmul.bf16.gmra.mxu0 %v4893
        %v6440 = vpop.f32.mrf.mxu0
        %v6441 = vadd.f32 %v6427, %v6440
        %v6442 = vpop.f32.mrf.mxu0
        %v6443 = vadd.f32 %v6429, %v6442
        %6444 = vdwg.mxu0
        %6445 = vmatpush.bf16.msra.mxu0 %v5728
        %6446 = vmatpush.bf16.msra.mxu0 %v5726
        %6447 = vmatpush.bf16.msra.mxu0 %v5724
        %6448 = vmatpush.bf16.msra.mxu0 %v5722
        %6449 = vmatpush.bf16.msra.mxu0 %v5720
        %6450 = vmatpush.bf16.msra.mxu0 %v5718
        %6451 = vmatpush.bf16.msra.mxu0 %v5716
        %6452 = vmatpush.bf16.msra.mxu0 %v5714
        %6453 = vmatmul.bf16.gmra.mxu0 %v4894
        %v6454 = vpop.f32.mrf.mxu0
        %v6455 = vadd.f32 %v6441, %v6454
        %v6456 = vpop.f32.mrf.mxu0
        %v6457 = vadd.f32 %v6443, %v6456
        %6458 = vdwg.mxu0
        %6459 = vmatpush.bf16.msra.mxu0 %v5744
        %6460 = vmatpush.bf16.msra.mxu0 %v5742
        %6461 = vmatpush.bf16.msra.mxu0 %v5740
        %6462 = vmatpush.bf16.msra.mxu0 %v5738
        %6463 = vmatpush.bf16.msra.mxu0 %v5736
        %6464 = vmatpush.bf16.msra.mxu0 %v5734
        %6465 = vmatpush.bf16.msra.mxu0 %v5732
        %6466 = vmatpush.bf16.msra.mxu0 %v5730
        %6467 = vmatmul.bf16.gmra.mxu0 %v4895
        %v6468 = vpop.f32.mrf.mxu0
        %v6469 = vadd.f32 %v6455, %v6468
        %v6470 = vpop.f32.mrf.mxu0
        %v6471 = vadd.f32 %v6457, %v6470
        %6472 = vdwg.mxu0
        %6473 = vmatpush.bf16.msra.mxu0 %v5760
        %6474 = vmatpush.bf16.msra.mxu0 %v5758
        %6475 = vmatpush.bf16.msra.mxu0 %v5756
        %6476 = vmatpush.bf16.msra.mxu0 %v5754
        %6477 = vmatpush.bf16.msra.mxu0 %v5752
        %6478 = vmatpush.bf16.msra.mxu0 %v5750
        %6479 = vmatpush.bf16.msra.mxu0 %v5748
        %6480 = vmatpush.bf16.msra.mxu0 %v5746
        %6481 = vmatmul.bf16.gmra.mxu0 %v4896
        %v6482 = vpop.f32.mrf.mxu0
        %v6483 = vadd.f32 %v6469, %v6482
        %v6484 = vpop.f32.mrf.mxu0
        %v6485 = vadd.f32 %v6471, %v6484
        %6486 = vdwg.mxu0
        %6487 = vmatpush.bf16.msra.mxu0 %v5776
        %6488 = vmatpush.bf16.msra.mxu0 %v5774
        %6489 = vmatpush.bf16.msra.mxu0 %v5772
        %6490 = vmatpush.bf16.msra.mxu0 %v5770
        %6491 = vmatpush.bf16.msra.mxu0 %v5768
        %6492 = vmatpush.bf16.msra.mxu0 %v5766
        %6493 = vmatpush.bf16.msra.mxu0 %v5764
        %6494 = vmatpush.bf16.msra.mxu0 %v5762
        %6495 = vmatmul.bf16.gmra.mxu0 %v4897
        %v6496 = vpop.f32.mrf.mxu0
        %v6497 = vadd.f32 %v6483, %v6496
        %v6498 = vpop.f32.mrf.mxu0
        %v6499 = vadd.f32 %v6485, %v6498
        %6500 = vdwg.mxu0
        %6501 = vmatpush.bf16.msra.mxu0 %v5792
        %6502 = vmatpush.bf16.msra.mxu0 %v5790
        %6503 = vmatpush.bf16.msra.mxu0 %v5788
        %6504 = vmatpush.bf16.msra.mxu0 %v5786
        %6505 = vmatpush.bf16.msra.mxu0 %v5784
        %6506 = vmatpush.bf16.msra.mxu0 %v5782
        %6507 = vmatpush.bf16.msra.mxu0 %v5780
        %6508 = vmatpush.bf16.msra.mxu0 %v5778
        %6509 = vmatmul.bf16.gmra.mxu0 %v4898
        %v6510 = vpop.f32.mrf.mxu0
        %v6511 = vadd.f32 %v6497, %v6510
        %v6512 = vpop.f32.mrf.mxu0
        %v6513 = vadd.f32 %v6499, %v6512
        %6514 = vdwg.mxu0
        %6515 = vmatpush.bf16.msra.mxu0 %v5808
        %6516 = vmatpush.bf16.msra.mxu0 %v5806
        %6517 = vmatpush.bf16.msra.mxu0 %v5804
        %6518 = vmatpush.bf16.msra.mxu0 %v5802
        %6519 = vmatpush.bf16.msra.mxu0 %v5800
        %6520 = vmatpush.bf16.msra.mxu0 %v5798
        %6521 = vmatpush.bf16.msra.mxu0 %v5796
        %6522 = vmatpush.bf16.msra.mxu0 %v5794
        %6523 = vmatmul.bf16.gmra.mxu0 %v4899
        %v6524 = vpop.f32.mrf.mxu0
        %v6525 = vadd.f32 %v6511, %v6524
        %v6526 = vpop.f32.mrf.mxu0
        %v6527 = vadd.f32 %v6513, %v6526
        %6528 = vdwg.mxu0
        %6529 = vmatpush.bf16.msra.mxu0 %v5824
        %6530 = vmatpush.bf16.msra.mxu0 %v5822
        %6531 = vmatpush.bf16.msra.mxu0 %v5820
        %6532 = vmatpush.bf16.msra.mxu0 %v5818
        %6533 = vmatpush.bf16.msra.mxu0 %v5816
        %6534 = vmatpush.bf16.msra.mxu0 %v5814
        %6535 = vmatpush.bf16.msra.mxu0 %v5812
        %6536 = vmatpush.bf16.msra.mxu0 %v5810
        %6537 = vmatmul.bf16.gmra.mxu0 %v4900
        %v6538 = vpop.f32.mrf.mxu0
        %v6539 = vadd.f32 %v6525, %v6538
        %v6540 = vpop.f32.mrf.mxu0
        %v6541 = vadd.f32 %v6527, %v6540
        %6542 = vdwg.mxu0
        %6543 = vmatpush.bf16.msra.mxu0 %v5840
        %6544 = vmatpush.bf16.msra.mxu0 %v5838
        %6545 = vmatpush.bf16.msra.mxu0 %v5836
        %6546 = vmatpush.bf16.msra.mxu0 %v5834
        %6547 = vmatpush.bf16.msra.mxu0 %v5832
        %6548 = vmatpush.bf16.msra.mxu0 %v5830
        %6549 = vmatpush.bf16.msra.mxu0 %v5828
        %6550 = vmatpush.bf16.msra.mxu0 %v5826
        %6551 = vmatmul.bf16.gmra.mxu0 %v4901
        %v6552 = vpop.f32.mrf.mxu0
        %v6553 = vadd.f32 %v6539, %v6552
        %v6554 = vpop.f32.mrf.mxu0
        %v6555 = vadd.f32 %v6541, %v6554
        %6556 = vdwg.mxu0
        %6557 = vmatpush.bf16.msra.mxu0 %v5856
        %6558 = vmatpush.bf16.msra.mxu0 %v5854
        %6559 = vmatpush.bf16.msra.mxu0 %v5852
        %6560 = vmatpush.bf16.msra.mxu0 %v5850
        %6561 = vmatpush.bf16.msra.mxu0 %v5848
        %6562 = vmatpush.bf16.msra.mxu0 %v5846
        %6563 = vmatpush.bf16.msra.mxu0 %v5844
        %6564 = vmatpush.bf16.msra.mxu0 %v5842
        %6565 = vmatmul.bf16.gmra.mxu0 %v4902
        %v6566 = vpop.f32.mrf.mxu0
        %v6567 = vadd.f32 %v6553, %v6566
        %v6568 = vpop.f32.mrf.mxu0
        %v6569 = vadd.f32 %v6555, %v6568
        %6570 = vdwg.mxu0
        %6571 = vmatpush.bf16.msra.mxu0 %v5872
        %6572 = vmatpush.bf16.msra.mxu0 %v5870
        %6573 = vmatpush.bf16.msra.mxu0 %v5868
        %6574 = vmatpush.bf16.msra.mxu0 %v5866
        %6575 = vmatpush.bf16.msra.mxu0 %v5864
        %6576 = vmatpush.bf16.msra.mxu0 %v5862
        %6577 = vmatpush.bf16.msra.mxu0 %v5860
        %6578 = vmatpush.bf16.msra.mxu0 %v5858
        %6579 = vmatmul.bf16.gmra.mxu0 %v4903
        %v6580 = vpop.f32.mrf.mxu0
        %v6581 = vadd.f32 %v6567, %v6580
        %v6582 = vpop.f32.mrf.mxu0
        %v6583 = vadd.f32 %v6569, %v6582
        %6584 = vdwg.mxu0
        %6585 = vmatpush.bf16.msra.mxu0 %v5888
        %6586 = vmatpush.bf16.msra.mxu0 %v5886
        %6587 = vmatpush.bf16.msra.mxu0 %v5884
        %6588 = vmatpush.bf16.msra.mxu0 %v5882
        %6589 = vmatpush.bf16.msra.mxu0 %v5880
        %6590 = vmatpush.bf16.msra.mxu0 %v5878
        %6591 = vmatpush.bf16.msra.mxu0 %v5876
        %6592 = vmatpush.bf16.msra.mxu0 %v5874
        %6593 = vmatmul.bf16.gmra.mxu0 %v4904
        %v6594 = vpop.f32.mrf.mxu0
        %v6595 = vadd.f32 %v6581, %v6594
        %v6596 = vpop.f32.mrf.mxu0
        %v6597 = vadd.f32 %v6583, %v6596
        %6598 = vdwg.mxu0
        %6599 = vmatpush.bf16.msra.mxu0 %v5904
        %6600 = vmatpush.bf16.msra.mxu0 %v5902
        %6601 = vmatpush.bf16.msra.mxu0 %v5900
        %6602 = vmatpush.bf16.msra.mxu0 %v5898
        %6603 = vmatpush.bf16.msra.mxu0 %v5896
        %6604 = vmatpush.bf16.msra.mxu0 %v5894
        %6605 = vmatpush.bf16.msra.mxu0 %v5892
        %6606 = vmatpush.bf16.msra.mxu0 %v5890
        %6607 = vmatmul.bf16.gmra.mxu0 %v4905
        %v6608 = vpop.f32.mrf.mxu0
        %v6609 = vadd.f32 %v6595, %v6608
        %v6610 = vpop.f32.mrf.mxu0
        %v6611 = vadd.f32 %v6597, %v6610
        %6612 = vdwg.mxu0
        %6613 = vmatpush.bf16.msra.mxu0 %v5920
        %6614 = vmatpush.bf16.msra.mxu0 %v5918
        %6615 = vmatpush.bf16.msra.mxu0 %v5916
        %6616 = vmatpush.bf16.msra.mxu0 %v5914
        %6617 = vmatpush.bf16.msra.mxu0 %v5912
        %6618 = vmatpush.bf16.msra.mxu0 %v5910
        %6619 = vmatpush.bf16.msra.mxu0 %v5908
        %6620 = vmatpush.bf16.msra.mxu0 %v5906
        %6621 = vmatmul.bf16.gmra.mxu0 %v4906
        %v6622 = vpop.f32.mrf.mxu0
        %v6623 = vadd.f32 %v6609, %v6622
        %v6624 = vpop.f32.mrf.mxu0
        %v6625 = vadd.f32 %v6611, %v6624
        %6626 = vdwg.mxu0
        %6627 = vmatpush.bf16.msra.mxu0 %v5936
        %6628 = vmatpush.bf16.msra.mxu0 %v5934
        %6629 = vmatpush.bf16.msra.mxu0 %v5932
        %6630 = vmatpush.bf16.msra.mxu0 %v5930
        %6631 = vmatpush.bf16.msra.mxu0 %v5928
        %6632 = vmatpush.bf16.msra.mxu0 %v5926
        %6633 = vmatpush.bf16.msra.mxu0 %v5924
        %6634 = vmatpush.bf16.msra.mxu0 %v5922
        %6635 = vmatmul.bf16.gmra.mxu0 %v4907
        %v6636 = vpop.f32.mrf.mxu0
        %v6637 = vadd.f32 %v6623, %v6636
        %v6638 = vpop.f32.mrf.mxu0
        %v6639 = vadd.f32 %v6625, %v6638
        %6640 = vdwg.mxu0
        %v6641 = vadd.f32 %v3092, %v6413
        %v6642 = vadd.f32 %v3093, %v6637
        %v6643 = vadd.f32 %v3094, %v6415
        %v6644 = vadd.f32 %v3095, %v6639
        %v6645 = vadd.f32 %v6641, %v6642
        %6646 = vadd.xlane.f32.xlu0 %v6645
        %v6647 = vpop.xlane.xlu0 %6646
        %v6648 = vadd.f32 %v6643, %v6644
        %6649 = vadd.xlane.f32.xlu0 %v6648
        %v6650 = vpop.xlane.xlu0 %6649
        %v6651 = vmul.f32 %v6647, %v3033
        %v6652 = vmul.f32 %v6650, %v3033
        %v6653 = vsub.f32 %v6641, %v6651
        %v6654 = vsub.f32 %v6642, %v6651
        %v6655 = vsub.f32 %v6643, %v6652
        %v6656 = vsub.f32 %v6644, %v6652
        %v6657 = vmul.f32 %v6653, %v6653
        %v6658 = vmul.f32 %v6654, %v6654
        %v6659 = vmul.f32 %v6655, %v6655
        %v6660 = vmul.f32 %v6656, %v6656
        %v6661 = vadd.f32 %v6657, %v6658
        %6662 = vadd.xlane.f32.xlu0 %v6661
        %v6663 = vpop.xlane.xlu0 %6662
        %v6664 = vadd.f32 %v6659, %v6660
        %6665 = vadd.xlane.f32.xlu0 %v6664
        %v6666 = vpop.xlane.xlu0 %6665
        %v6667 = vmul.f32 %v6663, %v3033
        %v6668 = vmul.f32 %v6666, %v3033
        %v6669 = vadd.f32 %v6667, 1e-05
        %v6670 = vadd.f32 %v6668, 1e-05
        %v6671 = vrsqrt.pop %v6669
        %v6672 = vmul.f32 %v6671, %v6669
        %v6673 = vmul.f32 %v6672, %v6671
        %v6674 = vmul.f32 0.5, %v6673
        %v6675 = vsub.f32 1.5, %v6674
        %v6676 = vmul.f32 %v6671, %v6675
        %vm6677 = vweird.f32 %v6669
        %vm6678 = vweird.f32 %v6671
        %vm6679 = vmor %vm6677, %vm6678
        %v6680 = vsel %vm6679, %v6671, %v6676
        %v6681 = vrsqrt.pop %v6670
        %v6682 = vmul.f32 %v6681, %v6670
        %v6683 = vmul.f32 %v6682, %v6681
        %v6684 = vmul.f32 0.5, %v6683
        %v6685 = vsub.f32 1.5, %v6684
        %v6686 = vmul.f32 %v6681, %v6685
        %vm6687 = vweird.f32 %v6670
        %vm6688 = vweird.f32 %v6681
        %vm6689 = vmor %vm6687, %vm6688
        %v6690 = vsel %vm6689, %v6681, %v6686
        %v6691 = vmul.f32 %v6653, %v6680
        %v6692 = vmul.f32 %v6654, %v6680
        %v6693 = vmul.f32 %v6655, %v6690
        %v6694 = vmul.f32 %v6656, %v6690
        %v6696 = vperm.slane %v1844, 0
        %v6697 = vperm.slane %v1844, 1
        %v6700 = vmul.f32 %v6691, %v6696
        %v6701 = vmul.f32 %v6692, %v6697
        %v6702 = vmul.f32 %v6693, %v6696
        %v6703 = vmul.f32 %v6694, %v6697
        %v6705 = vperm.slane %v1845, 0
        %v6706 = vperm.slane %v1845, 1
        %v6709 = vadd.f32 %v6700, %v6705
        %v6710 = vadd.f32 %v6701, %v6706
        %v6711 = vadd.f32 %v6702, %v6705
        %v6712 = vadd.f32 %v6703, %v6706
        %6713 = vst [vmem:[#allocation2] sm:$0xff] %v6709
        %6714 = vst [vmem:[#allocation2 + $0x8] sm:$0xff] %v6710
        %6715 = vst [vmem:[#allocation2 + $0x10] sm:$0xff] %v6711
        %6716 = vst [vmem:[#allocation2 + $0x18] sm:$0xff] %v6712
        %p6717 = scmp.eq.s32.totalorder %s55, 1
        // Predicated region
        $region165: #{vanilla_transformer_forward.1} parent=91 // pred_check
          %p6718 = pneg %p6717
        $region166: #{vanilla_transformer_forward.1} parent=91 // pred_check_branch
          %6720 = sbr.rel (%p6718) target = $region168
        $region167: #{vanilla_transformer_forward.1} parent=91 // pred_region
          %v6721 = vrot.slane %v6709, 4
          %v6722 = vadd.f32 %v6709, %v6721
          %v6723 = vrot.slane %v6722, 2
          %v6724 = vadd.f32 %v6722, %v6723
          %v6725 = vrot.slane %v6724, 1
          %v6726 = vadd.f32 %v6724, %v6725
          %v6727 = vrot.slane %v6710, 4
          %v6728 = vadd.f32 %v6710, %v6727
          %v6729 = vrot.slane %v6728, 2
          %v6730 = vadd.f32 %v6728, %v6729
          %v6731 = vrot.slane %v6730, 1
          %v6732 = vadd.f32 %v6730, %v6731
          %v6733 = vrot.slane %v6711, 4
          %v6734 = vadd.f32 %v6711, %v6733
          %v6735 = vrot.slane %v6734, 2
          %v6736 = vadd.f32 %v6734, %v6735
          %v6737 = vrot.slane %v6736, 1
          %v6738 = vadd.f32 %v6736, %v6737
          %v6739 = vrot.slane %v6712, 4
          %v6740 = vadd.f32 %v6712, %v6739
          %v6741 = vrot.slane %v6740, 2
          %v6742 = vadd.f32 %v6740, %v6741
          %v6743 = vrot.slane %v6742, 1
          %v6744 = vadd.f32 %v6742, %v6743
          %v6749 = vrot.slane %v6732, 6
          %v6750 = vrot.slane %v6744, 6
          %vm6751 = vcmask 1041408
          %v6752 = vsel %vm6751, %v6726, %v6749
          %v6753 = vsel %vm6751, %v6738, %v6750
          %vm6754 = vcmask 1044484
          %v6755 = vsel %vm6754, %v6752, %v6752
          %vm6756 = vcmask 1046534
          %v6757 = vsel %vm6756, %v6752, %v6755
          %v6758 = vrot.slane %v6753, 7
          %vm6759 = vcmask 1041409
          %v6760 = vsel %vm6759, %v6758, %v6757
          %vm6761 = vcmask 1043459
          %v6762 = vsel %vm6761, %v6758, %v6760
          %vm6763 = vcmask 1045509
          %v6764 = vsel %vm6763, %v6758, %v6762
          %vm6765 = vcmask 1047559
          %v6766 = vsel %vm6765, %v6758, %v6764
          %6768 = vst [vmem:[#allocation30] sm:$0xf] %v6766
        $region168: #{vanilla_transformer_forward.1} parent=91 // pred_fallthru
          _
        // Predicated region
        $region169: #{vanilla_transformer_forward.1} parent=91 // pred_check
          %p6769 = pneg %p526
        $region170: #{vanilla_transformer_forward.1} parent=91 // pred_check_branch
          %6771 = sbr.rel (%p6769) target = $region172
        $region171: #{vanilla_transformer_forward.1} parent=91 // pred_region
          %6773 = vsyncadd [#allocation5], 0
          %s6775 = sshll.u32 [#allocation30], 4
          %s6776 = int_to_ptr.vmem [resolvable:$true] %s6775
          %s6777 = sshll.u32 %s18, 4
          %s6778 = int_to_ptr.hbm [resolvable:$true] %s6777
          %6780 = dma.vmem_to_hbm [thread:$0]  %s6776, 64, %s6778, [#allocation5]
        $region172: #{vanilla_transformer_forward.1} parent=91 // pred_fallthru
          _
        // Predicated region
        $region173: #{vanilla_transformer_forward.1} parent=91 // pred_check
          %p6781 = pneg %p526
        $region174: #{vanilla_transformer_forward.1} parent=91 // pred_check_branch
          %6783 = sbr.rel (%p6781) target = $region176
        $region175: #{vanilla_transformer_forward.1} parent=91 // pred_region
          %6785 = dma.done [#allocation5], 64
        $region176: #{vanilla_transformer_forward.1} parent=91 // pred_fallthru
          _
      $region92: #{vanilla_transformer_forward.1} parent=5 // pred_fallthru
        _
      %p6786 = scmp.le.s32.totalorder 2, %s50
      // Predicated region
      $region177: #{vanilla_transformer_forward.1} parent=5 // pred_check
        %p6787 = pneg %p6786
      $region178: #{vanilla_transformer_forward.1} parent=5 // pred_check_branch
        %6789 = sbr.rel (%p6787) target = $region180
      $region179: #{vanilla_transformer_forward.1} parent=5 // pred_region
        %s6790 = ssub.s32 %s50, 2
      $region180: #{vanilla_transformer_forward.1} parent=5 // pred_fallthru
        _
    $region6: #{vanilla_transformer_forward.1} parent=1 // loop_footer
      %s54 = sadd.s32 1, %s50
    $region7: #{vanilla_transformer_forward.1} parent=1 // loop_footer_branch
      %49 = sbr.rel target = $region3
    $region8: #{vanilla_transformer_forward.1} parent=1 // loop_exit
      _
    %6791 = vsyncpa [#allocation4], 1
    %s6792 = scalar_lea.sflag [#allocation4], 1
    %6793 = vsyncpa %s6792, 1
    %6794 = vsyncpa [#allocation7], 1
    %s6795 = scalar_lea.sflag [#allocation7], 1
    %6796 = vsyncpa %s6795, 1
    %6797 = vsyncpa [#allocation10], 1
    %s6798 = scalar_lea.sflag [#allocation10], 1
    %6799 = vsyncpa %s6798, 1
    %6800 = vsyncpa [#allocation13], 1
    %s6801 = scalar_lea.sflag [#allocation13], 1
    %6802 = vsyncpa %s6801, 1
    %6803 = vsyncpa [#allocation16], 1
    %s6804 = scalar_lea.sflag [#allocation16], 1
    %6805 = vsyncpa %s6804, 1
    %6806 = vsyncpa [#allocation19], 1
    %s6807 = scalar_lea.sflag [#allocation19], 1
    %6808 = vsyncpa %s6807, 1
    %6809 = vsyncpa [#allocation22], 1
    %s6810 = scalar_lea.sflag [#allocation22], 1
    %6811 = vsyncpa %s6810, 1
    %6812 = vsyncpa [#allocation25], 1
    %s6813 = scalar_lea.sflag [#allocation25], 1
    %6814 = vsyncpa %s6813, 1
    %6815 = vsyncpa [#allocation28], 1
    %s6816 = scalar_lea.sflag [#allocation28], 1
    %6817 = vsyncpa %s6816, 1
    %6818 = vsyncpa [#allocation5], 1
    %s6819 = scalar_lea.sflag [#allocation5], 1
    %6820 = vsyncpa %s6819, 1

</llo_original>
